<compile_context>
chip_gen: v7x
topology: tpu7x:2x2x1
jax: 0.10.0
libtpu: 0.0.40
codegen_flags: <defaults>
</compile_context>

<pallas_src>
import functools
import math

import jax
import jax.numpy as jnp
import numpy as np
from jax.experimental import pallas as pl
from jax.experimental.pallas import tpu as pltpu


def _cdiv(a, b):
    return -(-a // b)


def _ceil_to(a, m):
    return _cdiv(a, m) * m


# --------------------------------------------------------------------------- #
# Kernel
# --------------------------------------------------------------------------- #
def _wmsa_kernel(x_ref, wq_ref, wk_ref, bq_ref, bk_ref, hmask_ref, wvp_ref,
                 bvp_ref, bias_ref, bproj_ref, o_ref, *,
                 num_heads, group, n_pat, exact_softmax):
    """One grid step == `bw` windows, packed `group` windows per 128-wide block.

    x_ref:     (bw, N, C)          matmul_dtype
    wq_ref:    (C, C)              matmul_dtype (qk scale folded in)
    wk_ref:    (C, C)              matmul_dtype
    bq_ref:    (1, C)              f32 (scale folded in)
    bk_ref:    (1, C)              f32
    hmask_ref: (H, 1, C)           matmul_dtype 0/1 head-column masks
    wvp_ref:   (H, C, C)           matmul_dtype, Wv_h @ Wproj_h folded per head
    bvp_ref:   (H, 1, C)           f32, bv_h @ Wproj_h folded per head
    bias_ref:  (H, n_pat, P, P)    f32, block-diag rel-pos bias (+ shift mask),
                                   -1e9 on the cross-window blocks
    bproj_ref: (1, C)              f32
    o_ref:     (bw, N, C)          output dtype
    """
    bw, n_tok, c = x_ref.shape
    p_len = group * n_tok            # packed sequence length (typically 128)
    n_grp = bw // group              # packed groups per grid step
    m = bw * n_tok
    mdt = x_ref.dtype                # matmul dtype

    # Leading-dim reshapes only (free): windows collapse into the matmul M dim.
    x2 = x_ref[...].reshape(m, c)

    # Q / K projections on the MXU, f32 accumulation (scale already folded into Wq/bq).
    q = jnp.dot(x2, wq_ref[...], preferred_element_type=jnp.float32) + bq_ref[...]
    k = jnp.dot(x2, wk_ref[...], preferred_element_type=jnp.float32) + bk_ref[...]
    q = q.reshape(n_grp, p_len, c).astype(mdt)
    k = k.reshape(n_grp, p_len, c).astype(mdt)

    acc = jnp.zeros((n_grp, p_len, c), jnp.float32)
    for h in range(num_heads):                               # static unroll (small H)
        # Head separation via a 0/1 mask on the contraction lanes (no lane slice):
        # (Q * mask_h) @ K^T == Q_h @ K_h^T.
        qm = q * hmask_ref[h]                                # (n_grp, P, C)
        s = jnp.einsum("gnc,gmc->gnm", qm, k,
                       preferred_element_type=jnp.float32)    # (n_grp, P, P)

        # Block-diagonal relative-position bias (+ shift-window mask, -1e9 off-diag).
        s = (s.reshape(n_grp // n_pat, n_pat, p_len, p_len)
             + bias_ref[h][None]).reshape(n_grp, p_len, p_len)

        # Numerically stable softmax in f32.
        s = s - jnp.max(s, axis=-1, keepdims=True)
        e = jnp.exp(s)
        den = jnp.sum(e, axis=-1, keepdims=True)
        if exact_softmax:
            pr = e / den
        else:
            pr = e * pl.reciprocal(den, approx=True)          # EUP slot

        # Reassociated value path: Vp_h = x @ (Wv_h @ Wproj_h) + bv_h @ Wproj_h.
        vp = jnp.dot(x2, wvp_ref[h], preferred_element_type=jnp.float32) + bvp_ref[h]
        vp = vp.reshape(n_grp, p_len, c).astype(mdt)

        acc = acc + jnp.einsum("gnm,gmd->gnd", pr.astype(mdt), vp,
                               preferred_element_type=jnp.float32)

    out = acc + bproj_ref[...]
    o_ref[...] = out.reshape(bw, n_tok, c).astype(o_ref.dtype)


# --------------------------------------------------------------------------- #
# Host-side helpers
# --------------------------------------------------------------------------- #
def _build_packed_bias(rel_bias, mask, group, n_pat, neg=-1e9):
    """Block-diagonal packed bias: (H, n_pat, P, P), cross-window blocks = -1e9."""
    H, N, _ = rel_bias.shape
    P = group * N
    if mask is None:
        win = jnp.broadcast_to(rel_bias[:, None, None], (H, 1, group, N, N))
    else:
        nW = mask.shape[0]
        idx = (np.arange(n_pat)[:, None] * group
               + np.arange(group)[None, :]) % nW              # (n_pat, group)
        win = rel_bias[:, None, None, :, :] + mask[idx][None]  # (H, n_pat, group, N, N)
    out = jnp.full((H, n_pat, group, N, group, N), jnp.float32(neg), jnp.float32)
    for t in range(group):
        out = out.at[:, :, t, :, t, :].set(win[:, :, t])
    return out.reshape(H, n_pat, P, P)


def window_attention_pallas(x, params, rel_bias, mask, *, num_heads, scale,
                            block_windows=None, matmul_dtype=jnp.bfloat16,
                            out_dtype=None, target_rows=2048,
                            vmem_limit_bytes=32 * 1024 * 1024):
    """x: (B_, N, C); mask: (nW, N, N) or None.  Returns (B_, N, C)."""
    B_, N, C = x.shape
    H = num_heads
    assert C % H == 0
    hd = C // H
    out_dtype = x.dtype if out_dtype is None else out_dtype

    # ---- window packing factor ----------------------------------------------
    g = max(1, 128 // N)
    P = g * N

    if mask is not None:
        nW = mask.shape[0]
        assert B_ % nW == 0, "B_ must be a multiple of the number of mask windows"
        granule = (g * nW) // math.gcd(g, nW)       # lcm(g, nW)
        n_pat = nW // math.gcd(nW, g)               # distinct packed mask patterns
    else:
        granule = g
        n_pat = 1

    # ---- windows per grid step -----------------------------------------------
    # Big blocks amortize grid overhead / fill the MXU, but keep >=2 grid steps
    # whenever B_ allows so v7x's two TensorCores both get work.
    if block_windows is None:
        bw = _ceil_to(max(1, target_rows // N), granule)
        bw = min(bw, _ceil_to(B_, granule))
        if B_ > granule:
            bw = min(bw, max(granule, _ceil_to(_cdiv(B_, 2), granule)))
    else:
        bw = _ceil_to(max(1, block_windows), granule)
        bw = min(bw, _ceil_to(B_, granule))
    assert bw % granule == 0

    # ---- weight folding (host side, f32) -------------------------------------
    wqkv = params["wqkv_t"].astype(jnp.float32)     # (C, 3C)
    bqkv = params["bqkv"].astype(jnp.float32)       # (1, 3C)
    wproj = params["wproj_t"].astype(jnp.float32)   # (C, C)
    bproj = params["bproj"].astype(jnp.float32)     # (1, C)

    wq = wqkv[:, :C] * scale                        # qk scale folded into q
    wk = wqkv[:, C:2 * C]
    wv = wqkv[:, 2 * C:]
    bq = bqkv[:, :C] * scale
    bk = bqkv[:, C:2 * C]
    bv = bqkv[:, 2 * C:]

    wv_heads = wv.reshape(C, H, hd)                 # qkv columns are [head][hd]
    wproj_heads = wproj.reshape(H, hd, C)           # proj rows are   [head][hd]
    wvp = jnp.einsum("chd,hdk->hck", wv_heads, wproj_heads)          # (H, C, C)
    bvp = jnp.einsum("hd,hdk->hk", bv.reshape(H, hd),
                     wproj_heads).reshape(H, 1, C)                   # (H, 1, C)

    # 0/1 head-column masks for the (Q * mask_h) @ K^T trick.
    hmask = (np.arange(C)[None, :] // hd == np.arange(H)[:, None]).astype(np.float32)
    hmask = jnp.asarray(hmask).reshape(H, 1, C).astype(matmul_dtype)

    # Block-diagonal packed bias (+ optional shift-window mask), f32 only.
    bias_packed = _build_packed_bias(rel_bias.astype(jnp.float32),
                                     None if mask is None else mask.astype(jnp.float32),
                                     g, n_pat)

    # ---- matmul-dtype operands (f32 accumulation inside the kernel) ----------
    x_in = x.astype(matmul_dtype)
    wq_in = wq.astype(matmul_dtype)
    wk_in = wk.astype(matmul_dtype)
    wvp_in = wvp.astype(matmul_dtype)

    # ---- pad the window axis to a multiple of the block size -----------------
    n_blocks = _cdiv(B_, bw)
    B_pad = n_blocks * bw
    if B_pad != B_:
        x_in = jnp.pad(x_in, ((0, B_pad - B_), (0, 0), (0, 0)))

    exact_softmax = jnp.dtype(matmul_dtype) == jnp.dtype(jnp.float32)
    kernel = functools.partial(_wmsa_kernel, num_heads=H, group=g, n_pat=n_pat,
                               exact_softmax=exact_softmax)

    out = pl.pallas_call(
        kernel,
        out_shape=jax.ShapeDtypeStruct((B_pad, N, C), out_dtype),
        grid_spec=pltpu.PrefetchScalarGridSpec(
            num_scalar_prefetch=0,
            grid=(n_blocks,),
            in_specs=[
                pl.BlockSpec((bw, N, C), lambda i: (i, 0, 0)),          # x (blocked)
                pl.BlockSpec((C, C), lambda i: (0, 0)),                 # wq (resident)
                pl.BlockSpec((C, C), lambda i: (0, 0)),                 # wk
                pl.BlockSpec((1, C), lambda i: (0, 0)),                 # bq
                pl.BlockSpec((1, C), lambda i: (0, 0)),                 # bk
                pl.BlockSpec((H, 1, C), lambda i: (0, 0, 0)),           # head masks
                pl.BlockSpec((H, C, C), lambda i: (0, 0, 0)),           # Wv@Wproj / head
                pl.BlockSpec((H, 1, C), lambda i: (0, 0, 0)),           # bv@Wproj / head
                pl.BlockSpec((H, n_pat, P, P), lambda i: (0, 0, 0, 0)),  # packed bias
                pl.BlockSpec((1, C), lambda i: (0, 0)),                 # bproj
            ],
            out_specs=pl.BlockSpec((bw, N, C), lambda i: (i, 0, 0)),
        ),
        compiler_params=pltpu.CompilerParams(
            dimension_semantics=("parallel",),
            vmem_limit_bytes=vmem_limit_bytes),
    )(x_in, wq_in, wk_in, bq, bk, hmask, wvp_in, bvp, bias_packed, bproj)

    return out[:B_] if B_pad != B_ else out


# --------------------------------------------------------------------------- #
# Parameter / mask builders + pure-JAX reference (replicates the PyTorch module)
# --------------------------------------------------------------------------- #
def make_relative_position_bias(table, window_size, num_heads):
    """table: ((2Wh-1)*(2Ww-1), H)  ->  (H, N, N) bias (plain-JAX gather)."""
    Wh, Ww = window_size
    coords = jnp.stack(jnp.meshgrid(jnp.arange(Wh), jnp.arange(Ww), indexing="ij"))
    coords_flat = coords.reshape(2, -1)
    rel = coords_flat[:, :, None] - coords_flat[:, None, :]
    rel = rel.transpose(1, 2, 0)
    rel = rel.at[:, :, 0].add(Wh - 1)
    rel = rel.at[:, :, 1].add(Ww - 1)
    rel = rel.at[:, :, 0].multiply(2 * Ww - 1)
    rel_index = rel.sum(-1)
    N = Wh * Ww
    bias = table[rel_index.reshape(-1)].reshape(N, N, num_heads)
    return jnp.transpose(bias, (2, 0, 1)).astype(jnp.float32)


def make_shift_window_mask(h, w, window_size, shift_size):
    """Replicates MSAB.calculate_mask -> (nW, N, N) with 0 / -100 entries."""
    img_mask = np.zeros((1, h, w, 1), np.float32)
    slices = (slice(0, -window_size), slice(-window_size, -shift_size),
              slice(-shift_size, None))
    cnt = 0
    for hs in slices:
        for ws in slices:
            img_mask[:, hs, ws, :] = cnt
            cnt += 1
    mw = img_mask.reshape(1, h // window_size, window_size,
                          w // window_size, window_size, 1)
    mw = mw.transpose(0, 1, 3, 2, 4, 5).reshape(-1, window_size * window_size)
    attn_mask = mw[:, None, :] - mw[:, :, None]
    attn_mask = np.where(attn_mask != 0, -100.0, 0.0).astype(np.float32)
    return jnp.asarray(attn_mask)


def reference_forward(x, params, rel_bias, mask, *, num_heads, scale):
    """Plain-JAX replica of the PyTorch WindowAttention.forward (f32)."""
    B_, N, C = x.shape
    hd = C // num_heads
    qkv = x @ params["wqkv_t"] + params["bqkv"]
    qkv = qkv.reshape(B_, N, 3, num_heads, hd).transpose(2, 0, 3, 1, 4)
    q, k, v = qkv[0], qkv[1], qkv[2]
    q = q * scale
    attn = jnp.einsum("bhnd,bhmd->bhnm", q, k) + rel_bias[None]
    if mask is not None:
        nW = mask.shape[0]
        attn = attn.reshape(B_ // nW, nW, num_heads, N, N) + mask[None, :, None]
        attn = attn.reshape(B_, num_heads, N, N)
    attn = jax.nn.softmax(attn, axis=-1)
    out = jnp.einsum("bhnm,bhmd->bhnd", attn, v)
    out = out.transpose(0, 2, 1, 3).reshape(B_, N, C)
    return out @ params["wproj_t"] + params["bproj"]


# --------------------------------------------------------------------------- #
if __name__ == "__main__":
    dim = 32
    window_size = (4, 4)
    num_heads = 4
    head_dim = dim // num_heads
    scale = head_dim ** (-0.5)
    N = window_size[0] * window_size[1]

    key = jax.random.PRNGKey(0)
    k_x1, k_x2, k_x3, k_tab, k_wqkv, k_bqkv, k_wp, k_bp = jax.random.split(key, 8)

    table = jax.random.normal(
        k_tab, ((2 * window_size[0] - 1) * (2 * window_size[1] - 1), num_heads),
        dtype=jnp.float32) * 0.02
    params = {
        "wqkv_t": jax.random.normal(k_wqkv, (dim, 3 * dim), jnp.float32) * 0.02,
        "bqkv": jax.random.normal(k_bqkv, (1, 3 * dim), jnp.float32) * 0.02,
        "wproj_t": jax.random.normal(k_wp, (dim, dim), jnp.float32) * 0.02,
        "bproj": jax.random.normal(k_bp, (1, dim), jnp.float32) * 0.02,
    }
    rel_bias = make_relative_position_bias(table, window_size, num_heads)

    # ---- case 1: non-shifted path (mask=None), bf16, window padding (B_=3) ----
    B1 = 3
    x1 = jax.random.normal(k_x1, (B1, N, dim), dtype=jnp.float32)
    ref1 = reference_forward(x1, params, rel_bias, None,
                             num_heads=num_heads, scale=scale)
    out1 = window_attention_pallas(x1, params, rel_bias, None,
                                   num_heads=num_heads, scale=scale)
    out1 = jax.block_until_ready(out1)
    assert out1.shape == (B1, N, dim)
    assert jnp.allclose(out1, ref1, atol=2e-2, rtol=2e-2), "bf16 kernel mismatch"

    # ---- case 1b: f32 matmuls + exact softmax on the same input ---------------
    out1b = window_attention_pallas(x1, params, rel_bias, None,
                                    num_heads=num_heads, scale=scale,
                                    matmul_dtype=jnp.float32)
    out1b = jax.block_until_ready(out1b)
    assert jnp.allclose(out1b, ref1, atol=5e-3, rtol=1e-3), "f32 kernel mismatch"

    # ---- case 2: mask=None, multi-block grid + padding (B_=20 -> 2 blocks) ----
    B2 = 20
    x2 = jax.random.normal(k_x2, (B2, N, dim), dtype=jnp.float32)
    ref2 = reference_forward(x2, params, rel_bias, None,
                             num_heads=num_heads, scale=scale)
    out2 = window_attention_pallas(x2, params, rel_bias, None,
                                   num_heads=num_heads, scale=scale)
    out2 = jax.block_until_ready(out2)
    assert jnp.allclose(out2, ref2, atol=2e-2, rtol=2e-2), "multi-block mismatch"

    # ---- case 3: shifted-window path, 8x8 map, shift=2 -> nW=4, B_=16 ---------
    mask4 = make_shift_window_mask(8, 8, window_size[0], 2)        # (4, 16, 16)
    B3 = 4 * mask4.shape[0]
    x3 = jax.random.normal(k_x3, (B3, N, dim), dtype=jnp.float32)
    ref3 = reference_forward(x3, params, rel_bias, mask4,
                             num_heads=num_heads, scale=scale)
    out3 = window_attention_pallas(x3, params, rel_bias, mask4,
                                   num_heads=num_heads, scale=scale)
    out3 = jax.block_until_ready(out3)
    assert jnp.allclose(out3, ref3, atol=2e-2, rtol=2e-2), "masked kernel mismatch"

    # ---- case 4: shifted path, 16x16 map -> nW=16 (n_pat=2 packed patterns) ---
    mask16 = make_shift_window_mask(16, 16, window_size[0], 2)     # (16, 16, 16)
    B4 = 2 * mask16.shape[0]
    x4 = jax.random.normal(jax.random.PRNGKey(7), (B4, N, dim), dtype=jnp.float32)
    ref4 = reference_forward(x4, params, rel_bias, mask16,
                             num_heads=num_heads, scale=scale)
    out4 = window_attention_pallas(x4, params, rel_bias, mask16,
                                   num_heads=num_heads, scale=scale)
    out4 = jax.block_until_ready(out4)
    assert jnp.allclose(out4, ref4, atol=2e-2, rtol=2e-2), "nW=16 masked mismatch"

    print("KERNEL_OK")
</pallas_src>

<mosaic_0001>
module attributes {stable_mosaic.version = 11 : i64} {
  func.func @_wmsa_kernel(%arg0: i32, %arg1: memref<8x16x32xbf16, #tpu.memory_space<vmem>>, %arg2: memref<32x32xbf16, #tpu.memory_space<vmem>>, %arg3: memref<32x32xbf16, #tpu.memory_space<vmem>>, %arg4: memref<1x32xf32, #tpu.memory_space<vmem>>, %arg5: memref<1x32xf32, #tpu.memory_space<vmem>>, %arg6: memref<4x1x32xbf16, #tpu.memory_space<vmem>>, %arg7: memref<4x32x32xbf16, #tpu.memory_space<vmem>>, %arg8: memref<4x1x32xf32, #tpu.memory_space<vmem>>, %arg9: memref<4x1x128x128xf32, #tpu.memory_space<vmem>>, %arg10: memref<1x32xf32, #tpu.memory_space<vmem>>, %arg11: memref<8x16x32xf32, #tpu.memory_space<vmem>>) attributes {dimension_semantics = [#tpu.dimension_semantics<parallel>], iteration_bounds = array<i64: 1>, scalar_prefetch = 0 : i64, scratch_operands = 0 : i64, tpu.core_type = #tpu.core_type<tc>, window_params = [{transform_indices = @transform_0, window_bounds = array<i64: 8, 16, 32>}, {pipeline_mode = #tpu.pipeline_mode<synchronous>, transform_indices = @transform_1, window_bounds = array<i64: 32, 32>}, {pipeline_mode = #tpu.pipeline_mode<synchronous>, transform_indices = @transform_2, window_bounds = array<i64: 32, 32>}, {pipeline_mode = #tpu.pipeline_mode<synchronous>, transform_indices = @transform_3, window_bounds = array<i64: 1, 32>}, {pipeline_mode = #tpu.pipeline_mode<synchronous>, transform_indices = @transform_4, window_bounds = array<i64: 1, 32>}, {pipeline_mode = #tpu.pipeline_mode<synchronous>, transform_indices = @transform_5, window_bounds = array<i64: 4, 1, 32>}, {pipeline_mode = #tpu.pipeline_mode<synchronous>, transform_indices = @transform_6, window_bounds = array<i64: 4, 32, 32>}, {pipeline_mode = #tpu.pipeline_mode<synchronous>, transform_indices = @transform_7, window_bounds = array<i64: 4, 1, 32>}, {pipeline_mode = #tpu.pipeline_mode<synchronous>, transform_indices = @transform_8, window_bounds = array<i64: 4, 1, 128, 128>}, {pipeline_mode = #tpu.pipeline_mode<synchronous>, transform_indices = @transform_9, window_bounds = array<i64: 1, 32>}, {transform_indices = @transform_10, window_bounds = array<i64: 8, 16, 32>}]} {
    %c0 = arith.constant 0 : index
    %c0_0 = arith.constant 0 : index
    %c0_1 = arith.constant 0 : index
    %0 = vector.load %arg1[%c0, %c0_0, %c0_1] : memref<8x16x32xbf16, #tpu.memory_space<vmem>>, vector<8x16x32xbf16>
    %1 = vector.shape_cast %0 : vector<8x16x32xbf16> to vector<128x32xbf16>
    %c0_2 = arith.constant 0 : index
    %c0_3 = arith.constant 0 : index
    %2 = vector.load %arg2[%c0_2, %c0_3] : memref<32x32xbf16, #tpu.memory_space<vmem>>, vector<32x32xbf16>
    %cst = arith.constant dense<0.000000e+00> : vector<128x32xf32>
    %3 = tpu.matmul %1, %2, %cst {dimension_numbers = #tpu.dot_dimension_numbers<[1], [0], [0], [1], [0, 0, 1, 1], [], []>} : vector<128x32xbf16>, vector<32x32xbf16>, vector<128x32xf32> -> vector<128x32xf32>
    %c0_4 = arith.constant 0 : index
    %c0_5 = arith.constant 0 : index
    %4 = vector.load %arg4[%c0_4, %c0_5] : memref<1x32xf32, #tpu.memory_space<vmem>>, vector<1x32xf32>
    %5 = vector.broadcast %4 : vector<1x32xf32> to vector<128x32xf32>
    %6 = arith.addf %3, %5 : vector<128x32xf32>
    %c0_6 = arith.constant 0 : index
    %c0_7 = arith.constant 0 : index
    %7 = vector.load %arg3[%c0_6, %c0_7] : memref<32x32xbf16, #tpu.memory_space<vmem>>, vector<32x32xbf16>
    %cst_8 = arith.constant dense<0.000000e+00> : vector<128x32xf32>
    %8 = tpu.matmul %1, %7, %cst_8 {dimension_numbers = #tpu.dot_dimension_numbers<[1], [0], [0], [1], [0, 0, 1, 1], [], []>} : vector<128x32xbf16>, vector<32x32xbf16>, vector<128x32xf32> -> vector<128x32xf32>
    %c0_9 = arith.constant 0 : index
    %c0_10 = arith.constant 0 : index
    %9 = vector.load %arg5[%c0_9, %c0_10] : memref<1x32xf32, #tpu.memory_space<vmem>>, vector<1x32xf32>
    %10 = vector.broadcast %9 : vector<1x32xf32> to vector<128x32xf32>
    %11 = arith.addf %8, %10 : vector<128x32xf32>
    %12 = vector.shape_cast %6 : vector<128x32xf32> to vector<1x128x32xf32>
    %13 = arith.truncf %12 : vector<1x128x32xf32> to vector<1x128x32xbf16>
    %14 = vector.shape_cast %11 : vector<128x32xf32> to vector<1x128x32xf32>
    %15 = arith.truncf %14 : vector<1x128x32xf32> to vector<1x128x32xbf16>
    %cst_11 = arith.constant 0.000000e+00 : f32
    %16 = vector.broadcast %cst_11 : f32 to vector<1x128x32xf32>
    %c0_12 = arith.constant 0 : index
    %c0_13 = arith.constant 0 : index
    %c0_14 = arith.constant 0 : index
    %17 = vector.load %arg6[%c0_12, %c0_13, %c0_14] : memref<4x1x32xbf16, #tpu.memory_space<vmem>>, vector<1x1x32xbf16>
    %18 = vector.shape_cast %17 : vector<1x1x32xbf16> to vector<1x32xbf16>
    %19 = vector.shape_cast %18 : vector<1x32xbf16> to vector<1x1x32xbf16>
    %20 = vector.broadcast %19 : vector<1x1x32xbf16> to vector<1x128x32xbf16>
    %21 = arith.mulf %13, %20 : vector<1x128x32xbf16>
    "tpu.trace_start"() <{level = 10 : i32, message = "gnc,gmc->gnm"}> : () -> ()
    %cst_15 = arith.constant dense<0.000000e+00> : vector<1x128x128xf32>
    %22 = tpu.matmul %21, %15, %cst_15 {dimension_numbers = #tpu.dot_dimension_numbers<[2], [2], [1], [1], [0, 0, 0, 1, 1, 1], [0], [0]>} : vector<1x128x32xbf16>, vector<1x128x32xbf16>, vector<1x128x128xf32> -> vector<1x128x128xf32>
    "tpu.trace_stop"() : () -> ()
    %23 = vector.shape_cast %22 : vector<1x128x128xf32> to vector<1x1x128x128xf32>
    %c0_16 = arith.constant 0 : index
    %c0_17 = arith.constant 0 : index
    %c0_18 = arith.constant 0 : index
    %c0_19 = arith.constant 0 : index
    %24 = vector.load %arg9[%c0_16, %c0_17, %c0_18, %c0_19] : memref<4x1x128x128xf32, #tpu.memory_space<vmem>>, vector<1x1x128x128xf32>
    %25 = vector.shape_cast %24 : vector<1x1x128x128xf32> to vector<1x128x128xf32>
    %26 = vector.shape_cast %25 : vector<1x128x128xf32> to vector<1x1x128x128xf32>
    %27 = arith.addf %23, %26 : vector<1x1x128x128xf32>
    %28 = vector.shape_cast %27 : vector<1x1x128x128xf32> to vector<1x128x128xf32>
    %cst_20 = arith.constant dense<0xFF800000> : vector<1x128xf32>
    %29 = vector.multi_reduction <maximumf>, %28, %cst_20 [2] : vector<1x128x128xf32> to vector<1x128xf32>
    %30 = vector.shape_cast %29 : vector<1x128xf32> to vector<1x128x1xf32>
    %31 = vector.broadcast %30 : vector<1x128x1xf32> to vector<1x128x128xf32>
    %32 = arith.subf %28, %31 : vector<1x128x128xf32>
    %33 = math.exp %32 : vector<1x128x128xf32>
    %cst_21 = arith.constant dense<0.000000e+00> : vector<1x128xf32>
    %34 = vector.multi_reduction <add>, %33, %cst_21 [2] : vector<1x128x128xf32> to vector<1x128xf32>
    %35 = vector.shape_cast %34 : vector<1x128xf32> to vector<1x128x1xf32>
    %36 = tpu.reciprocal %35 {approx = true} : vector<1x128x1xf32> -> vector<1x128x1xf32>
    %37 = vector.broadcast %36 : vector<1x128x1xf32> to vector<1x128x128xf32>
    %38 = arith.mulf %33, %37 : vector<1x128x128xf32>
    %c0_22 = arith.constant 0 : index
    %c0_23 = arith.constant 0 : index
    %c0_24 = arith.constant 0 : index
    %39 = vector.load %arg7[%c0_22, %c0_23, %c0_24] : memref<4x32x32xbf16, #tpu.memory_space<vmem>>, vector<1x32x32xbf16>
    %40 = vector.shape_cast %39 : vector<1x32x32xbf16> to vector<32x32xbf16>
    %cst_25 = arith.constant dense<0.000000e+00> : vector<128x32xf32>
    %41 = tpu.matmul %1, %40, %cst_25 {dimension_numbers = #tpu.dot_dimension_numbers<[1], [0], [0], [1], [0, 0, 1, 1], [], []>} : vector<128x32xbf16>, vector<32x32xbf16>, vector<128x32xf32> -> vector<128x32xf32>
    %c0_26 = arith.constant 0 : index
    %c0_27 = arith.constant 0 : index
    %c0_28 = arith.constant 0 : index
    %42 = vector.load %arg8[%c0_26, %c0_27, %c0_28] : memref<4x1x32xf32, #tpu.memory_space<vmem>>, vector<1x1x32xf32>
    %43 = vector.shape_cast %42 : vector<1x1x32xf32> to vector<1x32xf32>
    %44 = vector.broadcast %43 : vector<1x32xf32> to vector<128x32xf32>
    %45 = arith.addf %41, %44 : vector<128x32xf32>
    %46 = vector.shape_cast %45 : vector<128x32xf32> to vector<1x128x32xf32>
    %47 = arith.truncf %46 : vector<1x128x32xf32> to vector<1x128x32xbf16>
    %48 = arith.truncf %38 : vector<1x128x128xf32> to vector<1x128x128xbf16>
    "tpu.trace_start"() <{level = 10 : i32, message = "gnm,gmd->gnd"}> : () -> ()
    %cst_29 = arith.constant dense<0.000000e+00> : vector<1x128x32xf32>
    %49 = tpu.matmul %48, %47, %cst_29 {dimension_numbers = #tpu.dot_dimension_numbers<[2], [1], [1], [2], [0, 0, 0, 1, 1, 2], [0], [0]>} : vector<1x128x128xbf16>, vector<1x128x32xbf16>, vector<1x128x32xf32> -> vector<1x128x32xf32>
    "tpu.trace_stop"() : () -> ()
    %50 = arith.addf %16, %49 : vector<1x128x32xf32>
    %c1 = arith.constant 1 : index
    %c0_30 = arith.constant 0 : index
    %c0_31 = arith.constant 0 : index
    %51 = vector.load %arg6[%c1, %c0_30, %c0_31] : memref<4x1x32xbf16, #tpu.memory_space<vmem>>, vector<1x1x32xbf16>
    %52 = vector.shape_cast %51 : vector<1x1x32xbf16> to vector<1x32xbf16>
    %53 = vector.shape_cast %52 : vector<1x32xbf16> to vector<1x1x32xbf16>
    %54 = vector.broadcast %53 : vector<1x1x32xbf16> to vector<1x128x32xbf16>
    %55 = arith.mulf %13, %54 : vector<1x128x32xbf16>
    "tpu.trace_start"() <{level = 10 : i32, message = "gnc,gmc->gnm"}> : () -> ()
    %cst_32 = arith.constant dense<0.000000e+00> : vector<1x128x128xf32>
    %56 = tpu.matmul %55, %15, %cst_32 {dimension_numbers = #tpu.dot_dimension_numbers<[2], [2], [1], [1], [0, 0, 0, 1, 1, 1], [0], [0]>} : vector<1x128x32xbf16>, vector<1x128x32xbf16>, vector<1x128x128xf32> -> vector<1x128x128xf32>
    "tpu.trace_stop"() : () -> ()
    %57 = vector.shape_cast %56 : vector<1x128x128xf32> to vector<1x1x128x128xf32>
    %c1_33 = arith.constant 1 : index
    %c0_34 = arith.constant 0 : index
    %c0_35 = arith.constant 0 : index
    %c0_36 = arith.constant 0 : index
    %58 = vector.load %arg9[%c1_33, %c0_34, %c0_35, %c0_36] : memref<4x1x128x128xf32, #tpu.memory_space<vmem>>, vector<1x1x128x128xf32>
    %59 = vector.shape_cast %58 : vector<1x1x128x128xf32> to vector<1x128x128xf32>
    %60 = vector.shape_cast %59 : vector<1x128x128xf32> to vector<1x1x128x128xf32>
    %61 = arith.addf %57, %60 : vector<1x1x128x128xf32>
    %62 = vector.shape_cast %61 : vector<1x1x128x128xf32> to vector<1x128x128xf32>
    %cst_37 = arith.constant dense<0xFF800000> : vector<1x128xf32>
    %63 = vector.multi_reduction <maximumf>, %62, %cst_37 [2] : vector<1x128x128xf32> to vector<1x128xf32>
    %64 = vector.shape_cast %63 : vector<1x128xf32> to vector<1x128x1xf32>
    %65 = vector.broadcast %64 : vector<1x128x1xf32> to vector<1x128x128xf32>
    %66 = arith.subf %62, %65 : vector<1x128x128xf32>
    %67 = math.exp %66 : vector<1x128x128xf32>
    %cst_38 = arith.constant dense<0.000000e+00> : vector<1x128xf32>
    %68 = vector.multi_reduction <add>, %67, %cst_38 [2] : vector<1x128x128xf32> to vector<1x128xf32>
    %69 = vector.shape_cast %68 : vector<1x128xf32> to vector<1x128x1xf32>
    %70 = tpu.reciprocal %69 {approx = true} : vector<1x128x1xf32> -> vector<1x128x1xf32>
    %71 = vector.broadcast %70 : vector<1x128x1xf32> to vector<1x128x128xf32>
    %72 = arith.mulf %67, %71 : vector<1x128x128xf32>
    %c1_39 = arith.constant 1 : index
    %c0_40 = arith.constant 0 : index
    %c0_41 = arith.constant 0 : index
    %73 = vector.load %arg7[%c1_39, %c0_40, %c0_41] : memref<4x32x32xbf16, #tpu.memory_space<vmem>>, vector<1x32x32xbf16>
    %74 = vector.shape_cast %73 : vector<1x32x32xbf16> to vector<32x32xbf16>
    %cst_42 = arith.constant dense<0.000000e+00> : vector<128x32xf32>
    %75 = tpu.matmul %1, %74, %cst_42 {dimension_numbers = #tpu.dot_dimension_numbers<[1], [0], [0], [1], [0, 0, 1, 1], [], []>} : vector<128x32xbf16>, vector<32x32xbf16>, vector<128x32xf32> -> vector<128x32xf32>
    %c1_43 = arith.constant 1 : index
    %c0_44 = arith.constant 0 : index
    %c0_45 = arith.constant 0 : index
    %76 = vector.load %arg8[%c1_43, %c0_44, %c0_45] : memref<4x1x32xf32, #tpu.memory_space<vmem>>, vector<1x1x32xf32>
    %77 = vector.shape_cast %76 : vector<1x1x32xf32> to vector<1x32xf32>
    %78 = vector.broadcast %77 : vector<1x32xf32> to vector<128x32xf32>
    %79 = arith.addf %75, %78 : vector<128x32xf32>
    %80 = vector.shape_cast %79 : vector<128x32xf32> to vector<1x128x32xf32>
    %81 = arith.truncf %80 : vector<1x128x32xf32> to vector<1x128x32xbf16>
    %82 = arith.truncf %72 : vector<1x128x128xf32> to vector<1x128x128xbf16>
    "tpu.trace_start"() <{level = 10 : i32, message = "gnm,gmd->gnd"}> : () -> ()
    %cst_46 = arith.constant dense<0.000000e+00> : vector<1x128x32xf32>
    %83 = tpu.matmul %82, %81, %cst_46 {dimension_numbers = #tpu.dot_dimension_numbers<[2], [1], [1], [2], [0, 0, 0, 1, 1, 2], [0], [0]>} : vector<1x128x128xbf16>, vector<1x128x32xbf16>, vector<1x128x32xf32> -> vector<1x128x32xf32>
    "tpu.trace_stop"() : () -> ()
    %84 = arith.addf %50, %83 : vector<1x128x32xf32>
    %c2 = arith.constant 2 : index
    %c0_47 = arith.constant 0 : index
    %c0_48 = arith.constant 0 : index
    %85 = vector.load %arg6[%c2, %c0_47, %c0_48] : memref<4x1x32xbf16, #tpu.memory_space<vmem>>, vector<1x1x32xbf16>
    %86 = vector.shape_cast %85 : vector<1x1x32xbf16> to vector<1x32xbf16>
    %87 = vector.shape_cast %86 : vector<1x32xbf16> to vector<1x1x32xbf16>
    %88 = vector.broadcast %87 : vector<1x1x32xbf16> to vector<1x128x32xbf16>
    %89 = arith.mulf %13, %88 : vector<1x128x32xbf16>
    "tpu.trace_start"() <{level = 10 : i32, message = "gnc,gmc->gnm"}> : () -> ()
    %cst_49 = arith.constant dense<0.000000e+00> : vector<1x128x128xf32>
    %90 = tpu.matmul %89, %15, %cst_49 {dimension_numbers = #tpu.dot_dimension_numbers<[2], [2], [1], [1], [0, 0, 0, 1, 1, 1], [0], [0]>} : vector<1x128x32xbf16>, vector<1x128x32xbf16>, vector<1x128x128xf32> -> vector<1x128x128xf32>
    "tpu.trace_stop"() : () -> ()
    %91 = vector.shape_cast %90 : vector<1x128x128xf32> to vector<1x1x128x128xf32>
    %c2_50 = arith.constant 2 : index
    %c0_51 = arith.constant 0 : index
    %c0_52 = arith.constant 0 : index
    %c0_53 = arith.constant 0 : index
    %92 = vector.load %arg9[%c2_50, %c0_51, %c0_52, %c0_53] : memref<4x1x128x128xf32, #tpu.memory_space<vmem>>, vector<1x1x128x128xf32>
    %93 = vector.shape_cast %92 : vector<1x1x128x128xf32> to vector<1x128x128xf32>
    %94 = vector.shape_cast %93 : vector<1x128x128xf32> to vector<1x1x128x128xf32>
    %95 = arith.addf %91, %94 : vector<1x1x128x128xf32>
    %96 = vector.shape_cast %95 : vector<1x1x128x128xf32> to vector<1x128x128xf32>
    %cst_54 = arith.constant dense<0xFF800000> : vector<1x128xf32>
    %97 = vector.multi_reduction <maximumf>, %96, %cst_54 [2] : vector<1x128x128xf32> to vector<1x128xf32>
    %98 = vector.shape_cast %97 : vector<1x128xf32> to vector<1x128x1xf32>
    %99 = vector.broadcast %98 : vector<1x128x1xf32> to vector<1x128x128xf32>
    %100 = arith.subf %96, %99 : vector<1x128x128xf32>
    %101 = math.exp %100 : vector<1x128x128xf32>
    %cst_55 = arith.constant dense<0.000000e+00> : vector<1x128xf32>
    %102 = vector.multi_reduction <add>, %101, %cst_55 [2] : vector<1x128x128xf32> to vector<1x128xf32>
    %103 = vector.shape_cast %102 : vector<1x128xf32> to vector<1x128x1xf32>
    %104 = tpu.reciprocal %103 {approx = true} : vector<1x128x1xf32> -> vector<1x128x1xf32>
    %105 = vector.broadcast %104 : vector<1x128x1xf32> to vector<1x128x128xf32>
    %106 = arith.mulf %101, %105 : vector<1x128x128xf32>
    %c2_56 = arith.constant 2 : index
    %c0_57 = arith.constant 0 : index
    %c0_58 = arith.constant 0 : index
    %107 = vector.load %arg7[%c2_56, %c0_57, %c0_58] : memref<4x32x32xbf16, #tpu.memory_space<vmem>>, vector<1x32x32xbf16>
    %108 = vector.shape_cast %107 : vector<1x32x32xbf16> to vector<32x32xbf16>
    %cst_59 = arith.constant dense<0.000000e+00> : vector<128x32xf32>
    %109 = tpu.matmul %1, %108, %cst_59 {dimension_numbers = #tpu.dot_dimension_numbers<[1], [0], [0], [1], [0, 0, 1, 1], [], []>} : vector<128x32xbf16>, vector<32x32xbf16>, vector<128x32xf32> -> vector<128x32xf32>
    %c2_60 = arith.constant 2 : index
    %c0_61 = arith.constant 0 : index
    %c0_62 = arith.constant 0 : index
    %110 = vector.load %arg8[%c2_60, %c0_61, %c0_62] : memref<4x1x32xf32, #tpu.memory_space<vmem>>, vector<1x1x32xf32>
    %111 = vector.shape_cast %110 : vector<1x1x32xf32> to vector<1x32xf32>
    %112 = vector.broadcast %111 : vector<1x32xf32> to vector<128x32xf32>
    %113 = arith.addf %109, %112 : vector<128x32xf32>
    %114 = vector.shape_cast %113 : vector<128x32xf32> to vector<1x128x32xf32>
    %115 = arith.truncf %114 : vector<1x128x32xf32> to vector<1x128x32xbf16>
    %116 = arith.truncf %106 : vector<1x128x128xf32> to vector<1x128x128xbf16>
    "tpu.trace_start"() <{level = 10 : i32, message = "gnm,gmd->gnd"}> : () -> ()
    %cst_63 = arith.constant dense<0.000000e+00> : vector<1x128x32xf32>
    %117 = tpu.matmul %116, %115, %cst_63 {dimension_numbers = #tpu.dot_dimension_numbers<[2], [1], [1], [2], [0, 0, 0, 1, 1, 2], [0], [0]>} : vector<1x128x128xbf16>, vector<1x128x32xbf16>, vector<1x128x32xf32> -> vector<1x128x32xf32>
    "tpu.trace_stop"() : () -> ()
    %118 = arith.addf %84, %117 : vector<1x128x32xf32>
    %c3 = arith.constant 3 : index
    %c0_64 = arith.constant 0 : index
    %c0_65 = arith.constant 0 : index
    %119 = vector.load %arg6[%c3, %c0_64, %c0_65] : memref<4x1x32xbf16, #tpu.memory_space<vmem>>, vector<1x1x32xbf16>
    %120 = vector.shape_cast %119 : vector<1x1x32xbf16> to vector<1x32xbf16>
    %121 = vector.shape_cast %120 : vector<1x32xbf16> to vector<1x1x32xbf16>
    %122 = vector.broadcast %121 : vector<1x1x32xbf16> to vector<1x128x32xbf16>
    %123 = arith.mulf %13, %122 : vector<1x128x32xbf16>
    "tpu.trace_start"() <{level = 10 : i32, message = "gnc,gmc->gnm"}> : () -> ()
    %cst_66 = arith.constant dense<0.000000e+00> : vector<1x128x128xf32>
    %124 = tpu.matmul %123, %15, %cst_66 {dimension_numbers = #tpu.dot_dimension_numbers<[2], [2], [1], [1], [0, 0, 0, 1, 1, 1], [0], [0]>} : vector<1x128x32xbf16>, vector<1x128x32xbf16>, vector<1x128x128xf32> -> vector<1x128x128xf32>
    "tpu.trace_stop"() : () -> ()
    %125 = vector.shape_cast %124 : vector<1x128x128xf32> to vector<1x1x128x128xf32>
    %c3_67 = arith.constant 3 : index
    %c0_68 = arith.constant 0 : index
    %c0_69 = arith.constant 0 : index
    %c0_70 = arith.constant 0 : index
    %126 = vector.load %arg9[%c3_67, %c0_68, %c0_69, %c0_70] : memref<4x1x128x128xf32, #tpu.memory_space<vmem>>, vector<1x1x128x128xf32>
    %127 = vector.shape_cast %126 : vector<1x1x128x128xf32> to vector<1x128x128xf32>
    %128 = vector.shape_cast %127 : vector<1x128x128xf32> to vector<1x1x128x128xf32>
    %129 = arith.addf %125, %128 : vector<1x1x128x128xf32>
    %130 = vector.shape_cast %129 : vector<1x1x128x128xf32> to vector<1x128x128xf32>
    %cst_71 = arith.constant dense<0xFF800000> : vector<1x128xf32>
    %131 = vector.multi_reduction <maximumf>, %130, %cst_71 [2] : vector<1x128x128xf32> to vector<1x128xf32>
    %132 = vector.shape_cast %131 : vector<1x128xf32> to vector<1x128x1xf32>
    %133 = vector.broadcast %132 : vector<1x128x1xf32> to vector<1x128x128xf32>
    %134 = arith.subf %130, %133 : vector<1x128x128xf32>
    %135 = math.exp %134 : vector<1x128x128xf32>
    %cst_72 = arith.constant dense<0.000000e+00> : vector<1x128xf32>
    %136 = vector.multi_reduction <add>, %135, %cst_72 [2] : vector<1x128x128xf32> to vector<1x128xf32>
    %137 = vector.shape_cast %136 : vector<1x128xf32> to vector<1x128x1xf32>
    %138 = tpu.reciprocal %137 {approx = true} : vector<1x128x1xf32> -> vector<1x128x1xf32>
    %139 = vector.broadcast %138 : vector<1x128x1xf32> to vector<1x128x128xf32>
    %140 = arith.mulf %135, %139 : vector<1x128x128xf32>
    %c3_73 = arith.constant 3 : index
    %c0_74 = arith.constant 0 : index
    %c0_75 = arith.constant 0 : index
    %141 = vector.load %arg7[%c3_73, %c0_74, %c0_75] : memref<4x32x32xbf16, #tpu.memory_space<vmem>>, vector<1x32x32xbf16>
    %142 = vector.shape_cast %141 : vector<1x32x32xbf16> to vector<32x32xbf16>
    %cst_76 = arith.constant dense<0.000000e+00> : vector<128x32xf32>
    %143 = tpu.matmul %1, %142, %cst_76 {dimension_numbers = #tpu.dot_dimension_numbers<[1], [0], [0], [1], [0, 0, 1, 1], [], []>} : vector<128x32xbf16>, vector<32x32xbf16>, vector<128x32xf32> -> vector<128x32xf32>
    %c3_77 = arith.constant 3 : index
    %c0_78 = arith.constant 0 : index
    %c0_79 = arith.constant 0 : index
    %144 = vector.load %arg8[%c3_77, %c0_78, %c0_79] : memref<4x1x32xf32, #tpu.memory_space<vmem>>, vector<1x1x32xf32>
    %145 = vector.shape_cast %144 : vector<1x1x32xf32> to vector<1x32xf32>
    %146 = vector.broadcast %145 : vector<1x32xf32> to vector<128x32xf32>
    %147 = arith.addf %143, %146 : vector<128x32xf32>
    %148 = vector.shape_cast %147 : vector<128x32xf32> to vector<1x128x32xf32>
    %149 = arith.truncf %148 : vector<1x128x32xf32> to vector<1x128x32xbf16>
    %150 = arith.truncf %140 : vector<1x128x128xf32> to vector<1x128x128xbf16>
    "tpu.trace_start"() <{level = 10 : i32, message = "gnm,gmd->gnd"}> : () -> ()
    %cst_80 = arith.constant dense<0.000000e+00> : vector<1x128x32xf32>
    %151 = tpu.matmul %150, %149, %cst_80 {dimension_numbers = #tpu.dot_dimension_numbers<[2], [1], [1], [2], [0, 0, 0, 1, 1, 2], [0], [0]>} : vector<1x128x128xbf16>, vector<1x128x32xbf16>, vector<1x128x32xf32> -> vector<1x128x32xf32>
    "tpu.trace_stop"() : () -> ()
    %152 = arith.addf %118, %151 : vector<1x128x32xf32>
    %c0_81 = arith.constant 0 : index
    %c0_82 = arith.constant 0 : index
    %153 = vector.load %arg10[%c0_81, %c0_82] : memref<1x32xf32, #tpu.memory_space<vmem>>, vector<1x32xf32>
    %154 = vector.shape_cast %153 : vector<1x32xf32> to vector<1x1x32xf32>
    %155 = vector.broadcast %154 : vector<1x1x32xf32> to vector<1x128x32xf32>
    %156 = arith.addf %152, %155 : vector<1x128x32xf32>
    %157 = vector.shape_cast %156 : vector<1x128x32xf32> to vector<8x16x32xf32>
    %c0_83 = arith.constant 0 : index
    %c0_84 = arith.constant 0 : index
    %c0_85 = arith.constant 0 : index
    %158 = vector.load %arg11[%c0_83, %c0_84, %c0_85] : memref<8x16x32xf32, #tpu.memory_space<vmem>>, vector<8x16x32xf32>
    tpu.vector_store %arg11[%c0_83, %c0_84, %c0_85], %157 {strides = array<i32>} : memref<8x16x32xf32, #tpu.memory_space<vmem>>, vector<8x16x32xf32>,
    return
  }
  func.func @transform_0(%arg0: i32) -> (i32, i32, i32) {
    %c0_i32 = arith.constant 0 : i32
    %c0_i32_0 = arith.constant 0 : i32
    %c0_i32_1 = arith.constant 0 : i32
    return %arg0, %c0_i32, %c0_i32_0 : i32, i32, i32
  }
  func.func @transform_1(%arg0: i32) -> (i32, i32) {
    %c0_i32 = arith.constant 0 : i32
    %c0_i32_0 = arith.constant 0 : i32
    %c0_i32_1 = arith.constant 0 : i32
    return %c0_i32, %c0_i32_0 : i32, i32
  }
  func.func @transform_2(%arg0: i32) -> (i32, i32) {
    %c0_i32 = arith.constant 0 : i32
    %c0_i32_0 = arith.constant 0 : i32
    %c0_i32_1 = arith.constant 0 : i32
    return %c0_i32, %c0_i32_0 : i32, i32
  }
  func.func @transform_3(%arg0: i32) -> (i32, i32) {
    %c0_i32 = arith.constant 0 : i32
    %c0_i32_0 = arith.constant 0 : i32
    %c0_i32_1 = arith.constant 0 : i32
    return %c0_i32, %c0_i32_0 : i32, i32
  }
  func.func @transform_4(%arg0: i32) -> (i32, i32) {
    %c0_i32 = arith.constant 0 : i32
    %c0_i32_0 = arith.constant 0 : i32
    %c0_i32_1 = arith.constant 0 : i32
    return %c0_i32, %c0_i32_0 : i32, i32
  }
  func.func @transform_5(%arg0: i32) -> (i32, i32, i32) {
    %c0_i32 = arith.constant 0 : i32
    %c0_i32_0 = arith.constant 0 : i32
    %c0_i32_1 = arith.constant 0 : i32
    %c0_i32_2 = arith.constant 0 : i32
    return %c0_i32, %c0_i32_0, %c0_i32_1 : i32, i32, i32
  }
  func.func @transform_6(%arg0: i32) -> (i32, i32, i32) {
    %c0_i32 = arith.constant 0 : i32
    %c0_i32_0 = arith.constant 0 : i32
    %c0_i32_1 = arith.constant 0 : i32
    %c0_i32_2 = arith.constant 0 : i32
    return %c0_i32, %c0_i32_0, %c0_i32_1 : i32, i32, i32
  }
  func.func @transform_7(%arg0: i32) -> (i32, i32, i32) {
    %c0_i32 = arith.constant 0 : i32
    %c0_i32_0 = arith.constant 0 : i32
    %c0_i32_1 = arith.constant 0 : i32
    %c0_i32_2 = arith.constant 0 : i32
    return %c0_i32, %c0_i32_0, %c0_i32_1 : i32, i32, i32
  }
  func.func @transform_8(%arg0: i32) -> (i32, i32, i32, i32) {
    %c0_i32 = arith.constant 0 : i32
    %c0_i32_0 = arith.constant 0 : i32
    %c0_i32_1 = arith.constant 0 : i32
    %c0_i32_2 = arith.constant 0 : i32
    %c0_i32_3 = arith.constant 0 : i32
    return %c0_i32, %c0_i32_0, %c0_i32_1, %c0_i32_2 : i32, i32, i32, i32
  }
  func.func @transform_9(%arg0: i32) -> (i32, i32) {
    %c0_i32 = arith.constant 0 : i32
    %c0_i32_0 = arith.constant 0 : i32
    %c0_i32_1 = arith.constant 0 : i32
    return %c0_i32, %c0_i32_0 : i32, i32
  }
  func.func @transform_10(%arg0: i32) -> (i32, i32, i32) {
    %c0_i32 = arith.constant 0 : i32
    %c0_i32_0 = arith.constant 0 : i32
    %c0_i32_1 = arith.constant 0 : i32
    return %arg0, %c0_i32, %c0_i32_0 : i32, i32, i32
  }
}

</mosaic_0001>

<llo_original>
// kernel: tpu_custom_call.1
$region0: #{tpu_custom_call.1}
  #allocation0 [shape = 'u32[]', space=smem, size = 0x4, offset = 0x4, fixed_abs, tag = 'smem constant byte address 0x4 - core index']
  #allocation1 [shape = 'u32[144,128]{1,0:T(1,128)}', space=vmem, size = 0x12000, scoped, tag = 'internal scratch']
  %s0 = inlined_call_operand.hbm [shape: bf16[8,16,32], index: 0, kind: input, shape index: {}]
  %s1 = inlined_call_operand.hbm [shape: bf16[32,32], index: 1, kind: input, shape index: {}]
  %s2 = inlined_call_operand.hbm [shape: bf16[32,32], index: 2, kind: input, shape index: {}]
  %s3 = inlined_call_operand.vmem [shape: f32[1,32], index: 3, kind: input, shape index: {}]
  %s4 = inlined_call_operand.vmem [shape: f32[1,32], index: 4, kind: input, shape index: {}]
  %s5 = inlined_call_operand.vmem [shape: bf16[4,1,32], index: 5, kind: input, shape index: {}]
  %s6 = inlined_call_operand.hbm [shape: bf16[4,32,32], index: 6, kind: input, shape index: {}]
  %s7 = inlined_call_operand.vmem [shape: f32[4,1,32], index: 7, kind: input, shape index: {}]
  %s8 = inlined_call_operand.hbm [shape: f32[4,1,128,128], index: 8, kind: input, shape index: {}]
  %s9 = inlined_call_operand.vmem [shape: f32[1,32], index: 9, kind: input, shape index: {}]
  %s10 = inlined_call_operand.hbm [shape: f32[8,16,32], index: 10, kind: output, shape index: {}]
  %s11 = sld [smem:[#allocation0]]
  $region70: #{tpu_custom_call.1} parent=0
    _
  %s13 = ssub.s32 1, %s11
  %s14 = scalar_select 0, %s13, %s11
  $region1: #{tpu_custom_call.1} parent=0
    #allocation2 [shape = 'u8[32768]{0}', space=vmem, size = 0x8000, scoped, tag = 'input window, operand 0, single buffered']
    #allocation3 [shape = 's32[1]{0}', space=sflag, size = 0x4, scoped, tag = 'scoped memory for tpu_custom_call.1']
    #allocation4 [shape = 's32[1]{0}', space=sflag, size = 0x4, scoped, tag = 'scoped memory for tpu_custom_call.1']
    #allocation5 [shape = 'u8[8192]{0}', space=vmem, size = 0x2000, scoped, tag = 'input window, operand 1, single buffered']
    #allocation6 [shape = 's32[1]{0}', space=sflag, size = 0x4, scoped, tag = 'scoped memory for tpu_custom_call.1']
    #allocation7 [shape = 'u8[8192]{0}', space=vmem, size = 0x2000, scoped, tag = 'input window, operand 2, single buffered']
    #allocation8 [shape = 'u8[32768]{0}', space=vmem, size = 0x8000, scoped, tag = 'input window, operand 6, single buffered']
    #allocation9 [shape = 's32[1]{0}', space=sflag, size = 0x4, scoped, tag = 'scoped memory for tpu_custom_call.1']
    #allocation10 [shape = 'u8[262144]{0}', space=vmem, size = 0x40000, scoped, tag = 'input window, operand 8, single buffered']
    #allocation11 [shape = 'u8[65536]{0}', space=vmem, size = 0x10000, scoped, tag = 'output window, operand 0, single buffered']
    %15 = vsyncpa [#allocation3], 0
    %16 = vsyncpa [#allocation6], 0
    %17 = vsyncpa [#allocation9], 0
    %18 = vsyncpa [#allocation4], 0
    // Predicated region
    $region2: #{tpu_custom_call.1} parent=1 // pred_check
      _
    $region3: #{tpu_custom_call.1} parent=1 // pred_check_branch
      %20 = sbr.rel (0) target = $region5
    $region4: #{tpu_custom_call.1} parent=1 // pred_region
      %s22 = ssub.s32 1024, 1024
      %23 = vsyncadd [#allocation3], %s22
      %s24 = sshll.u32 [#allocation2], 4
      %s25 = int_to_ptr.vmem [resolvable:$true] %s24
      %30 = dma.hbm_to_vmem [thread:$0]  %s0, 1024, %s25, [#allocation3], 64, 64, 4
    $region5: #{tpu_custom_call.1} parent=1 // pred_fallthru
      _
    // Predicated region
    $region6: #{tpu_custom_call.1} parent=1 // pred_check
      _
    $region7: #{tpu_custom_call.1} parent=1 // pred_check_branch
      %32 = sbr.rel (0) target = $region9
    $region8: #{tpu_custom_call.1} parent=1 // pred_region
      %s34 = ssub.s32 256, 256
      %35 = vsyncadd [#allocation6], %s34
      %s36 = sshll.u32 [#allocation5], 4
      %s37 = int_to_ptr.vmem [resolvable:$true] %s36
      %42 = dma.hbm_to_vmem [thread:$0]  %s1, 256, %s37, [#allocation6], 64, 64, 4
    $region9: #{tpu_custom_call.1} parent=1 // pred_fallthru
      _
    // Predicated region
    $region10: #{tpu_custom_call.1} parent=1 // pred_check
      _
    $region11: #{tpu_custom_call.1} parent=1 // pred_check_branch
      %44 = sbr.rel (0) target = $region13
    $region12: #{tpu_custom_call.1} parent=1 // pred_region
      %s46 = ssub.s32 256, 256
      %47 = vsyncadd [#allocation6], %s46
      %s48 = sshll.u32 [#allocation7], 4
      %s49 = int_to_ptr.vmem [resolvable:$true] %s48
      %54 = dma.hbm_to_vmem [thread:$0]  %s2, 256, %s49, [#allocation6], 64, 64, 4
    $region13: #{tpu_custom_call.1} parent=1 // pred_fallthru
      _
    // Predicated region
    $region14: #{tpu_custom_call.1} parent=1 // pred_check
      _
    $region15: #{tpu_custom_call.1} parent=1 // pred_check_branch
      %56 = sbr.rel (0) target = $region17
    $region16: #{tpu_custom_call.1} parent=1 // pred_region
      _
    $region17: #{tpu_custom_call.1} parent=1 // pred_fallthru
      _
    // Predicated region
    $region18: #{tpu_custom_call.1} parent=1 // pred_check
      _
    $region19: #{tpu_custom_call.1} parent=1 // pred_check_branch
      %58 = sbr.rel (0) target = $region21
    $region20: #{tpu_custom_call.1} parent=1 // pred_region
      _
    $region21: #{tpu_custom_call.1} parent=1 // pred_fallthru
      _
    // Predicated region
    $region22: #{tpu_custom_call.1} parent=1 // pred_check
      _
    $region23: #{tpu_custom_call.1} parent=1 // pred_check_branch
      %60 = sbr.rel (0) target = $region25
    $region24: #{tpu_custom_call.1} parent=1 // pred_region
      _
    $region25: #{tpu_custom_call.1} parent=1 // pred_fallthru
      _
    // Predicated region
    $region26: #{tpu_custom_call.1} parent=1 // pred_check
      _
    $region27: #{tpu_custom_call.1} parent=1 // pred_check_branch
      %62 = sbr.rel (0) target = $region29
    $region28: #{tpu_custom_call.1} parent=1 // pred_region
      %s64 = ssub.s32 1024, 1024
      %65 = vsyncadd [#allocation9], %s64
      %s66 = sshll.u32 [#allocation8], 4
      %s67 = int_to_ptr.vmem [resolvable:$true] %s66
      %72 = dma.hbm_to_vmem [thread:$0]  %s6, 1024, %s67, [#allocation9], 64, 64, 4
    $region29: #{tpu_custom_call.1} parent=1 // pred_fallthru
      _
    // Predicated region
    $region30: #{tpu_custom_call.1} parent=1 // pred_check
      _
    $region31: #{tpu_custom_call.1} parent=1 // pred_check_branch
      %74 = sbr.rel (0) target = $region33
    $region32: #{tpu_custom_call.1} parent=1 // pred_region
      _
    $region33: #{tpu_custom_call.1} parent=1 // pred_fallthru
      _
    // Predicated region
    $region34: #{tpu_custom_call.1} parent=1 // pred_check
      _
    $region35: #{tpu_custom_call.1} parent=1 // pred_check_branch
      %76 = sbr.rel (0) target = $region37
    $region36: #{tpu_custom_call.1} parent=1 // pred_region
      %s78 = ssub.s32 8192, 8192
      %79 = vsyncadd [#allocation9], %s78
      %s80 = sshll.u32 [#allocation10], 4
      %s81 = int_to_ptr.vmem [resolvable:$true] %s80
      %86 = dma.hbm_to_vmem [thread:$0]  %s8, 8192, %s81, [#allocation9], 128, 128, 8
    $region37: #{tpu_custom_call.1} parent=1 // pred_fallthru
      _
    // Predicated region
    $region38: #{tpu_custom_call.1} parent=1 // pred_check
      _
    $region39: #{tpu_custom_call.1} parent=1 // pred_check_branch
      %88 = sbr.rel (0) target = $region41
    $region40: #{tpu_custom_call.1} parent=1 // pred_region
      _
    $region41: #{tpu_custom_call.1} parent=1 // pred_fallthru
      _
    // Predicated region
    $region42: #{tpu_custom_call.1} parent=1 // pred_check
      _
    $region43: #{tpu_custom_call.1} parent=1 // pred_check_branch
      %90 = sbr.rel (0) target = $region45
    $region44: #{tpu_custom_call.1} parent=1 // pred_region
      %91 = dma.done [#allocation3], 1024
    $region45: #{tpu_custom_call.1} parent=1 // pred_fallthru
      _
    // Predicated region
    $region46: #{tpu_custom_call.1} parent=1 // pred_check
      _
    $region47: #{tpu_custom_call.1} parent=1 // pred_check_branch
      %93 = sbr.rel (0) target = $region49
    $region48: #{tpu_custom_call.1} parent=1 // pred_region
      %94 = dma.done [#allocation6], 256
    $region49: #{tpu_custom_call.1} parent=1 // pred_fallthru
      _
    // Predicated region
    $region50: #{tpu_custom_call.1} parent=1 // pred_check
      _
    $region51: #{tpu_custom_call.1} parent=1 // pred_check_branch
      %96 = sbr.rel (0) target = $region53
    $region52: #{tpu_custom_call.1} parent=1 // pred_region
      %97 = dma.done [#allocation6], 256
    $region53: #{tpu_custom_call.1} parent=1 // pred_fallthru
      _
    // Predicated region
    $region54: #{tpu_custom_call.1} parent=1 // pred_check
      _
    $region55: #{tpu_custom_call.1} parent=1 // pred_check_branch
      %99 = sbr.rel (0) target = $region57
    $region56: #{tpu_custom_call.1} parent=1 // pred_region
      %100 = dma.done [#allocation9], 1024
    $region57: #{tpu_custom_call.1} parent=1 // pred_fallthru
      _
    // Predicated region
    $region58: #{tpu_custom_call.1} parent=1 // pred_check
      _
    $region59: #{tpu_custom_call.1} parent=1 // pred_check_branch
      %102 = sbr.rel (0) target = $region61
    $region60: #{tpu_custom_call.1} parent=1 // pred_region
      %103 = dma.done [#allocation9], 8192
    $region61: #{tpu_custom_call.1} parent=1 // pred_fallthru
      _
    %v105 = vld [vmem:[#allocation2] sm:$0xf]
    %v106 = vld [vmem:[#allocation2 + $0x4] sm:$0xf]
    %v107 = vld [vmem:[#allocation2 + $0x8] sm:$0xf]
    %v108 = vld [vmem:[#allocation2 + $0xc] sm:$0xf]
    %v109 = vld [vmem:[#allocation2 + $0x10] sm:$0xf]
    %v110 = vld [vmem:[#allocation2 + $0x14] sm:$0xf]
    %v111 = vld [vmem:[#allocation2 + $0x18] sm:$0xf]
    %v112 = vld [vmem:[#allocation2 + $0x1c] sm:$0xf]
    %v113 = vld [vmem:[#allocation2 + $0x20] sm:$0xf]
    %v114 = vld [vmem:[#allocation2 + $0x24] sm:$0xf]
    %v115 = vld [vmem:[#allocation2 + $0x28] sm:$0xf]
    %v116 = vld [vmem:[#allocation2 + $0x2c] sm:$0xf]
    %v117 = vld [vmem:[#allocation2 + $0x30] sm:$0xf]
    %v118 = vld [vmem:[#allocation2 + $0x34] sm:$0xf]
    %v119 = vld [vmem:[#allocation2 + $0x38] sm:$0xf]
    %v120 = vld [vmem:[#allocation2 + $0x3c] sm:$0xf]
    %v121 = vld [vmem:[#allocation5] sm:$0xf]
    %v122 = vld [vmem:[#allocation5 + $0x4] sm:$0xf]
    %v123 = vld [vmem:[#allocation5 + $0x8] sm:$0xf]
    %v124 = vld [vmem:[#allocation5 + $0xc] sm:$0xf]
    %v125 = vld [vmem:[%s3] sm:$0x1]
    %v127 = vlaneseq
    %v128 = vshrl.u32 %v127, 7
    %v129 = vsub.s32 0, %v128
    %v130 = vrot.slane %v125, %v129
    %v148 = vunpack.c.l.b16 %v105
    %v149 = vunpack.c.l.b16 %v106
    %v150 = vunpack.c.l.b16 %v107
    %v151 = vunpack.c.l.b16 %v108
    %v152 = vunpack.c.l.b16 %v109
    %v153 = vunpack.c.l.b16 %v110
    %v154 = vunpack.c.l.b16 %v111
    %v155 = vunpack.c.l.b16 %v112
    %v156 = vunpack.c.l.b16 %v113
    %v157 = vunpack.c.l.b16 %v114
    %v158 = vunpack.c.l.b16 %v115
    %v159 = vunpack.c.l.b16 %v116
    %v160 = vunpack.c.l.b16 %v117
    %v161 = vunpack.c.l.b16 %v118
    %v162 = vunpack.c.l.b16 %v119
    %v163 = vunpack.c.l.b16 %v120
    %v164 = vpack.c.b16 %v149, %v148
    %v165 = vpack.c.b16 %v151, %v150
    %v166 = vpack.c.b16 %v153, %v152
    %v167 = vpack.c.b16 %v155, %v154
    %v168 = vpack.c.b16 %v157, %v156
    %v169 = vpack.c.b16 %v159, %v158
    %v170 = vpack.c.b16 %v161, %v160
    %v171 = vpack.c.b16 %v163, %v162
    %v176 = vunpack.c.l.b16 %v121
    %v177 = vunpack.c.l.b16 %v122
    %v178 = vunpack.c.l.b16 %v123
    %v179 = vunpack.c.l.b16 %v124
    %v180 = vpack.c.b16 %v177, %v176
    %v181 = vpack.c.b16 %v179, %v178
    %vm184 = vcmask 261120
    %v186 = vsel %vm184, %v164, 0
    %v189 = vsel %vm184, %v165, 0
    %v192 = vsel %vm184, %v166, 0
    %v195 = vsel %vm184, %v167, 0
    %v198 = vsel %vm184, %v168, 0
    %v201 = vsel %vm184, %v169, 0
    %v204 = vsel %vm184, %v170, 0
    %v207 = vsel %vm184, %v171, 0
    %209 = vmatprep.subr.bf16.mxu0 0
    %210 = vmatpush1.bf16.msra.mxu0 %v180
    %211 = vmatprep.subr.bf16.mxu0 0
    %212 = vmatpush1.bf16.msra.mxu0 %v181
    %213 = vmatprep.subr.bf16.mxu0 0
    %214 = vmatpush1.bf16.msra.mxu0 0
    %215 = vmatprep.subr.bf16.mxu0 0
    %216 = vmatpush1.bf16.msra.mxu0 0
    %217 = vmatprep.subr.bf16.mxu0 0
    %218 = vmatpush1.bf16.msra.mxu0 0
    %219 = vmatprep.subr.bf16.mxu0 0
    %220 = vmatpush1.bf16.msra.mxu0 0
    %221 = vmatprep.subr.bf16.mxu0 0
    %222 = vmatpush1.bf16.msra.mxu0 0
    %223 = vmatprep.subr.bf16.mxu0 0
    %224 = vmatpush1.bf16.msra.mxu0 0
    %225 = vmatprep.subr.bf16.mxu0 0
    %226 = vmatpush1.bf16.msra.mxu0 0
    %227 = vmatprep.subr.bf16.mxu0 0
    %228 = vmatpush1.bf16.msra.mxu0 0
    %229 = vmatprep.subr.bf16.mxu0 0
    %230 = vmatpush1.bf16.msra.mxu0 0
    %231 = vmatprep.subr.bf16.mxu0 0
    %232 = vmatpush1.bf16.msra.mxu0 0
    %233 = vmatprep.subr.bf16.mxu0 0
    %234 = vmatpush1.bf16.msra.mxu0 0
    %235 = vmatprep.subr.bf16.mxu0 0
    %236 = vmatpush1.bf16.msra.mxu0 0
    %237 = vmatprep.subr.bf16.mxu0 0
    %238 = vmatpush1.bf16.msra.mxu0 0
    %239 = vmatprep.subr.bf16.mxu0 0
    %240 = vmatpush1.bf16.msra.mxu0 0
    %241 = vmatprep.mubr.bf16.mxu0 0
    %242 = vmatmul.mubr.bf16.gmra.mrb[0].mxu0 %v186
    %v243 = vpop.f32.mrb[0].mxu0
    %v244 = vadd.f32 %v130, %v243
    %v245 = vpop.f32.mrb[0].mxu0
    %v246 = vpop.f32.mrb[0].mxu0
    %v247 = vadd.f32 %v130, %v246
    %v248 = vpop.f32.mrb[0].mxu0
    %249 = vmatprep.mubr.bf16.mxu0 0
    %250 = vmatmul.mubr.bf16.gmra.mrb[0].mxu0 %v189
    %v251 = vpop.f32.mrb[0].mxu0
    %v252 = vadd.f32 %v130, %v251
    %v253 = vpop.f32.mrb[0].mxu0
    %v254 = vpop.f32.mrb[0].mxu0
    %v255 = vadd.f32 %v130, %v254
    %v256 = vpop.f32.mrb[0].mxu0
    %257 = vmatprep.mubr.bf16.mxu0 0
    %258 = vmatmul.mubr.bf16.gmra.mrb[0].mxu0 %v192
    %v259 = vpop.f32.mrb[0].mxu0
    %v260 = vadd.f32 %v130, %v259
    %v261 = vpop.f32.mrb[0].mxu0
    %v262 = vpop.f32.mrb[0].mxu0
    %v263 = vadd.f32 %v130, %v262
    %v264 = vpop.f32.mrb[0].mxu0
    %265 = vmatprep.mubr.bf16.mxu0 0
    %266 = vmatmul.mubr.bf16.gmra.mrb[0].mxu0 %v195
    %v267 = vpop.f32.mrb[0].mxu0
    %v268 = vadd.f32 %v130, %v267
    %v269 = vpop.f32.mrb[0].mxu0
    %v270 = vpop.f32.mrb[0].mxu0
    %v271 = vadd.f32 %v130, %v270
    %v272 = vpop.f32.mrb[0].mxu0
    %273 = vmatprep.mubr.bf16.mxu0 0
    %274 = vmatmul.mubr.bf16.gmra.mrb[0].mxu0 %v198
    %v275 = vpop.f32.mrb[0].mxu0
    %v276 = vadd.f32 %v130, %v275
    %v277 = vpop.f32.mrb[0].mxu0
    %v278 = vpop.f32.mrb[0].mxu0
    %v279 = vadd.f32 %v130, %v278
    %v280 = vpop.f32.mrb[0].mxu0
    %281 = vmatprep.mubr.bf16.mxu0 0
    %282 = vmatmul.mubr.bf16.gmra.mrb[0].mxu0 %v201
    %v283 = vpop.f32.mrb[0].mxu0
    %v284 = vadd.f32 %v130, %v283
    %v285 = vpop.f32.mrb[0].mxu0
    %v286 = vpop.f32.mrb[0].mxu0
    %v287 = vadd.f32 %v130, %v286
    %v288 = vpop.f32.mrb[0].mxu0
    %289 = vmatprep.mubr.bf16.mxu0 0
    %290 = vmatmul.mubr.bf16.gmra.mrb[0].mxu0 %v204
    %v291 = vpop.f32.mrb[0].mxu0
    %v292 = vadd.f32 %v130, %v291
    %v293 = vpop.f32.mrb[0].mxu0
    %v294 = vpop.f32.mrb[0].mxu0
    %v295 = vadd.f32 %v130, %v294
    %v296 = vpop.f32.mrb[0].mxu0
    %297 = vmatprep.mubr.bf16.mxu0 0
    %298 = vmatmul.mubr.bf16.gmra.mrb[0].mxu0 %v207
    %v299 = vpop.f32.mrb[0].mxu0
    %v300 = vadd.f32 %v130, %v299
    %v301 = vpop.f32.mrb[0].mxu0
    %v302 = vpop.f32.mrb[0].mxu0
    %v303 = vadd.f32 %v130, %v302
    %v304 = vpop.f32.mrb[0].mxu0
    %305 = vdwg.mxu0
    %v306 = vld [vmem:[#allocation7] sm:$0xf]
    %v307 = vld [vmem:[#allocation7 + $0x4] sm:$0xf]
    %v308 = vld [vmem:[#allocation7 + $0x8] sm:$0xf]
    %v309 = vld [vmem:[#allocation7 + $0xc] sm:$0xf]
    %v310 = vld [vmem:[%s4] sm:$0x1]
    %v312 = vlaneseq
    %v313 = vshrl.u32 %v312, 7
    %v314 = vsub.s32 0, %v313
    %v315 = vrot.slane %v310, %v314
    %v321 = vunpack.c.l.b16 %v306
    %v322 = vunpack.c.l.b16 %v307
    %v323 = vunpack.c.l.b16 %v308
    %v324 = vunpack.c.l.b16 %v309
    %v325 = vpack.c.b16 %v322, %v321
    %v326 = vpack.c.b16 %v324, %v323
    %329 = vmatprep.subr.bf16.mxu0 0
    %330 = vmatpush1.bf16.msra.mxu0 %v325
    %331 = vmatprep.subr.bf16.mxu0 0
    %332 = vmatpush1.bf16.msra.mxu0 %v326
    %333 = vmatprep.subr.bf16.mxu0 0
    %334 = vmatpush1.bf16.msra.mxu0 0
    %335 = vmatprep.subr.bf16.mxu0 0
    %336 = vmatpush1.bf16.msra.mxu0 0
    %337 = vmatprep.subr.bf16.mxu0 0
    %338 = vmatpush1.bf16.msra.mxu0 0
    %339 = vmatprep.subr.bf16.mxu0 0
    %340 = vmatpush1.bf16.msra.mxu0 0
    %341 = vmatprep.subr.bf16.mxu0 0
    %342 = vmatpush1.bf16.msra.mxu0 0
    %343 = vmatprep.subr.bf16.mxu0 0
    %344 = vmatpush1.bf16.msra.mxu0 0
    %345 = vmatprep.subr.bf16.mxu0 0
    %346 = vmatpush1.bf16.msra.mxu0 0
    %347 = vmatprep.subr.bf16.mxu0 0
    %348 = vmatpush1.bf16.msra.mxu0 0
    %349 = vmatprep.subr.bf16.mxu0 0
    %350 = vmatpush1.bf16.msra.mxu0 0
    %351 = vmatprep.subr.bf16.mxu0 0
    %352 = vmatpush1.bf16.msra.mxu0 0
    %353 = vmatprep.subr.bf16.mxu0 0
    %354 = vmatpush1.bf16.msra.mxu0 0
    %355 = vmatprep.subr.bf16.mxu0 0
    %356 = vmatpush1.bf16.msra.mxu0 0
    %357 = vmatprep.subr.bf16.mxu0 0
    %358 = vmatpush1.bf16.msra.mxu0 0
    %359 = vmatprep.subr.bf16.mxu0 0
    %360 = vmatpush1.bf16.msra.mxu0 0
    %361 = vmatprep.mubr.bf16.mxu0 0
    %362 = vmatmul.mubr.bf16.gmra.mrb[0].mxu0 %v186
    %v363 = vpop.f32.mrb[0].mxu0
    %v364 = vadd.f32 %v315, %v363
    %v365 = vpop.f32.mrb[0].mxu0
    %v366 = vpop.f32.mrb[0].mxu0
    %v367 = vadd.f32 %v315, %v366
    %v368 = vpop.f32.mrb[0].mxu0
    %369 = vmatprep.mubr.bf16.mxu0 0
    %370 = vmatmul.mubr.bf16.gmra.mrb[0].mxu0 %v189
    %v371 = vpop.f32.mrb[0].mxu0
    %v372 = vadd.f32 %v315, %v371
    %v373 = vpop.f32.mrb[0].mxu0
    %v374 = vpop.f32.mrb[0].mxu0
    %v375 = vadd.f32 %v315, %v374
    %v376 = vpop.f32.mrb[0].mxu0
    %377 = vmatprep.mubr.bf16.mxu0 0
    %378 = vmatmul.mubr.bf16.gmra.mrb[0].mxu0 %v192
    %v379 = vpop.f32.mrb[0].mxu0
    %v380 = vadd.f32 %v315, %v379
    %v381 = vpop.f32.mrb[0].mxu0
    %v382 = vpop.f32.mrb[0].mxu0
    %v383 = vadd.f32 %v315, %v382
    %v384 = vpop.f32.mrb[0].mxu0
    %385 = vmatprep.mubr.bf16.mxu0 0
    %386 = vmatmul.mubr.bf16.gmra.mrb[0].mxu0 %v195
    %v387 = vpop.f32.mrb[0].mxu0
    %v388 = vadd.f32 %v315, %v387
    %v389 = vpop.f32.mrb[0].mxu0
    %v390 = vpop.f32.mrb[0].mxu0
    %v391 = vadd.f32 %v315, %v390
    %v392 = vpop.f32.mrb[0].mxu0
    %393 = vmatprep.mubr.bf16.mxu0 0
    %394 = vmatmul.mubr.bf16.gmra.mrb[0].mxu0 %v198
    %v395 = vpop.f32.mrb[0].mxu0
    %v396 = vadd.f32 %v315, %v395
    %v397 = vpop.f32.mrb[0].mxu0
    %v398 = vpop.f32.mrb[0].mxu0
    %v399 = vadd.f32 %v315, %v398
    %v400 = vpop.f32.mrb[0].mxu0
    %401 = vmatprep.mubr.bf16.mxu0 0
    %402 = vmatmul.mubr.bf16.gmra.mrb[0].mxu0 %v201
    %v403 = vpop.f32.mrb[0].mxu0
    %v404 = vadd.f32 %v315, %v403
    %v405 = vpop.f32.mrb[0].mxu0
    %v406 = vpop.f32.mrb[0].mxu0
    %v407 = vadd.f32 %v315, %v406
    %v408 = vpop.f32.mrb[0].mxu0
    %409 = vmatprep.mubr.bf16.mxu0 0
    %410 = vmatmul.mubr.bf16.gmra.mrb[0].mxu0 %v204
    %v411 = vpop.f32.mrb[0].mxu0
    %v412 = vadd.f32 %v315, %v411
    %v413 = vpop.f32.mrb[0].mxu0
    %v414 = vpop.f32.mrb[0].mxu0
    %v415 = vadd.f32 %v315, %v414
    %v416 = vpop.f32.mrb[0].mxu0
    %417 = vmatprep.mubr.bf16.mxu0 0
    %418 = vmatmul.mubr.bf16.gmra.mrb[0].mxu0 %v207
    %v419 = vpop.f32.mrb[0].mxu0
    %v420 = vadd.f32 %v315, %v419
    %v421 = vpop.f32.mrb[0].mxu0
    %v422 = vpop.f32.mrb[0].mxu0
    %v423 = vadd.f32 %v315, %v422
    %v424 = vpop.f32.mrb[0].mxu0
    %425 = vdwg.mxu0
    %v426 = vpack.c.bf16 %v247, %v244
    %v427 = vpack.c.bf16 %v255, %v252
    %v428 = vpack.c.bf16 %v263, %v260
    %v429 = vpack.c.bf16 %v271, %v268
    %v430 = vpack.c.bf16 %v279, %v276
    %v431 = vpack.c.bf16 %v287, %v284
    %v432 = vpack.c.bf16 %v295, %v292
    %v433 = vpack.c.bf16 %v303, %v300
    %v434 = vpack.c.bf16 %v367, %v364
    %v435 = vpack.c.bf16 %v375, %v372
    %v436 = vpack.c.bf16 %v383, %v380
    %v437 = vpack.c.bf16 %v391, %v388
    %v438 = vpack.c.bf16 %v399, %v396
    %v439 = vpack.c.bf16 %v407, %v404
    %v440 = vpack.c.bf16 %v415, %v412
    %v441 = vpack.c.bf16 %v423, %v420
    %v442 = vld [vmem:[%s5] sm:$0x1]
    %v444 = vpack.i.b16 %v442, %v442
    %v446 = vlaneseq
    %v447 = vshrl.u32 %v446, 7
    %v448 = vsub.s32 0, %v447
    %v449 = vrot.slane %v444, %v448
    %v450 = vmul.bf16 %v426, %v449
    %v451 = vmul.bf16 %v427, %v449
    %v452 = vmul.bf16 %v428, %v449
    %v453 = vmul.bf16 %v429, %v449
    %v454 = vmul.bf16 %v430, %v449
    %v455 = vmul.bf16 %v431, %v449
    %v456 = vmul.bf16 %v432, %v449
    %v457 = vmul.bf16 %v433, %v449
    %v459 = vsel %vm184, %v450, 0
    %v462 = vsel %vm184, %v451, 0
    %v465 = vsel %vm184, %v452, 0
    %v468 = vsel %vm184, %v453, 0
    %v471 = vsel %vm184, %v454, 0
    %v474 = vsel %vm184, %v455, 0
    %v477 = vsel %vm184, %v456, 0
    %v480 = vsel %vm184, %v457, 0
    %v483 = vsel %vm184, %v434, 0
    %v486 = vsel %vm184, %v435, 0
    %v489 = vsel %vm184, %v436, 0
    %v492 = vsel %vm184, %v437, 0
    %v495 = vsel %vm184, %v438, 0
    %v498 = vsel %vm184, %v439, 0
    %v501 = vsel %vm184, %v440, 0
    %v504 = vsel %vm184, %v441, 0
    %506 = vmatprep.subr.bf16.mxu0 0
    %507 = vmatpush1.bf16.xpose.msra.mxu0 %v483
    %508 = vmatprep.subr.bf16.mxu0 0
    %509 = vmatpush1.bf16.xpose.msra.mxu0 %v486
    %510 = vmatprep.subr.bf16.mxu0 0
    %511 = vmatpush1.bf16.xpose.msra.mxu0 %v489
    %512 = vmatprep.subr.bf16.mxu0 0
    %513 = vmatpush1.bf16.xpose.msra.mxu0 %v492
    %514 = vmatprep.subr.bf16.mxu0 0
    %515 = vmatpush1.bf16.xpose.msra.mxu0 %v495
    %516 = vmatprep.subr.bf16.mxu0 0
    %517 = vmatpush1.bf16.xpose.msra.mxu0 %v498
    %518 = vmatprep.subr.bf16.mxu0 0
    %519 = vmatpush1.bf16.xpose.msra.mxu0 %v501
    %520 = vmatprep.subr.bf16.mxu0 0
    %521 = vmatpush1.bf16.xpose.msra.mxu0 %v504
    %522 = vmatprep.subr.bf16.mxu0 0
    %523 = vmatpush1.bf16.xpose.msra.mxu0 0
    %524 = vmatprep.subr.bf16.mxu0 0
    %525 = vmatpush1.bf16.xpose.msra.mxu0 0
    %526 = vmatprep.subr.bf16.mxu0 0
    %527 = vmatpush1.bf16.xpose.msra.mxu0 0
    %528 = vmatprep.subr.bf16.mxu0 0
    %529 = vmatpush1.bf16.xpose.msra.mxu0 0
    %530 = vmatprep.subr.bf16.mxu0 0
    %531 = vmatpush1.bf16.xpose.msra.mxu0 0
    %532 = vmatprep.subr.bf16.mxu0 0
    %533 = vmatpush1.bf16.xpose.msra.mxu0 0
    %534 = vmatprep.subr.bf16.mxu0 0
    %535 = vmatpush1.bf16.xpose.msra.mxu0 0
    %536 = vmatprep.subr.bf16.mxu0 0
    %537 = vmatpush1.bf16.xpose.msra.mxu0 0
    %538 = vmatprep.mubr.bf16.mxu0 0
    %539 = vmatmul.mubr.bf16.gmra.mrb[0].mxu0 %v459
    %v540 = vpop.f32.mrb[0].mxu0
    %v541 = vadd.f32 0.0, %v540
    %v542 = vpop.f32.mrb[0].mxu0
    %v543 = vpop.f32.mrb[0].mxu0
    %v544 = vadd.f32 0.0, %v543
    %v545 = vpop.f32.mrb[0].mxu0
    %546 = vmatprep.mubr.bf16.mxu0 0
    %547 = vmatmul.mubr.bf16.gmra.mrb[0].mxu0 %v462
    %v548 = vpop.f32.mrb[0].mxu0
    %v549 = vadd.f32 0.0, %v548
    %v550 = vpop.f32.mrb[0].mxu0
    %v551 = vpop.f32.mrb[0].mxu0
    %v552 = vadd.f32 0.0, %v551
    %v553 = vpop.f32.mrb[0].mxu0
    %554 = vmatprep.mubr.bf16.mxu0 0
    %555 = vmatmul.mubr.bf16.gmra.mrb[0].mxu0 %v465
    %v556 = vpop.f32.mrb[0].mxu0
    %v557 = vadd.f32 0.0, %v556
    %v558 = vpop.f32.mrb[0].mxu0
    %v559 = vpop.f32.mrb[0].mxu0
    %v560 = vadd.f32 0.0, %v559
    %v561 = vpop.f32.mrb[0].mxu0
    %562 = vmatprep.mubr.bf16.mxu0 0
    %563 = vmatmul.mubr.bf16.gmra.mrb[0].mxu0 %v468
    %v564 = vpop.f32.mrb[0].mxu0
    %v565 = vadd.f32 0.0, %v564
    %v566 = vpop.f32.mrb[0].mxu0
    %v567 = vpop.f32.mrb[0].mxu0
    %v568 = vadd.f32 0.0, %v567
    %v569 = vpop.f32.mrb[0].mxu0
    %570 = vmatprep.mubr.bf16.mxu0 0
    %571 = vmatmul.mubr.bf16.gmra.mrb[0].mxu0 %v471
    %v572 = vpop.f32.mrb[0].mxu0
    %v573 = vadd.f32 0.0, %v572
    %v574 = vpop.f32.mrb[0].mxu0
    %v575 = vpop.f32.mrb[0].mxu0
    %v576 = vadd.f32 0.0, %v575
    %v577 = vpop.f32.mrb[0].mxu0
    %578 = vmatprep.mubr.bf16.mxu0 0
    %579 = vmatmul.mubr.bf16.gmra.mrb[0].mxu0 %v474
    %v580 = vpop.f32.mrb[0].mxu0
    %v581 = vadd.f32 0.0, %v580
    %v582 = vpop.f32.mrb[0].mxu0
    %v583 = vpop.f32.mrb[0].mxu0
    %v584 = vadd.f32 0.0, %v583
    %v585 = vpop.f32.mrb[0].mxu0
    %586 = vmatprep.mubr.bf16.mxu0 0
    %587 = vmatmul.mubr.bf16.gmra.mrb[0].mxu0 %v477
    %v588 = vpop.f32.mrb[0].mxu0
    %v589 = vadd.f32 0.0, %v588
    %v590 = vpop.f32.mrb[0].mxu0
    %v591 = vpop.f32.mrb[0].mxu0
    %v592 = vadd.f32 0.0, %v591
    %v593 = vpop.f32.mrb[0].mxu0
    %594 = vmatprep.mubr.bf16.mxu0 0
    %595 = vmatmul.mubr.bf16.gmra.mrb[0].mxu0 %v480
    %v596 = vpop.f32.mrb[0].mxu0
    %v597 = vadd.f32 0.0, %v596
    %v598 = vpop.f32.mrb[0].mxu0
    %v599 = vpop.f32.mrb[0].mxu0
    %v600 = vadd.f32 0.0, %v599
    %v601 = vpop.f32.mrb[0].mxu0
    %602 = vdwg.mxu0
    %v603 = vld [vmem:[#allocation10] sm:$0xff]
    %v604 = vld [vmem:[#allocation10 + $0x8] sm:$0xff]
    %v605 = vld [vmem:[#allocation10 + $0x10] sm:$0xff]
    %v606 = vld [vmem:[#allocation10 + $0x18] sm:$0xff]
    %v607 = vld [vmem:[#allocation10 + $0x20] sm:$0xff]
    %v608 = vld [vmem:[#allocation10 + $0x28] sm:$0xff]
    %v609 = vld [vmem:[#allocation10 + $0x30] sm:$0xff]
    %v610 = vld [vmem:[#allocation10 + $0x38] sm:$0xff]
    %v611 = vld [vmem:[#allocation10 + $0x40] sm:$0xff]
    %v612 = vld [vmem:[#allocation10 + $0x48] sm:$0xff]
    %v613 = vld [vmem:[#allocation10 + $0x50] sm:$0xff]
    %v614 = vld [vmem:[#allocation10 + $0x58] sm:$0xff]
    %v615 = vld [vmem:[#allocation10 + $0x60] sm:$0xff]
    %v616 = vld [vmem:[#allocation10 + $0x68] sm:$0xff]
    %v617 = vld [vmem:[#allocation10 + $0x70] sm:$0xff]
    %v618 = vld [vmem:[#allocation10 + $0x78] sm:$0xff]
    %v619 = vadd.f32 %v541, %v603
    %v620 = vadd.f32 %v544, %v604
    %v621 = vadd.f32 %v549, %v605
    %v622 = vadd.f32 %v552, %v606
    %v623 = vadd.f32 %v557, %v607
    %v624 = vadd.f32 %v560, %v608
    %v625 = vadd.f32 %v565, %v609
    %v626 = vadd.f32 %v568, %v610
    %v627 = vadd.f32 %v573, %v611
    %v628 = vadd.f32 %v576, %v612
    %v629 = vadd.f32 %v581, %v613
    %v630 = vadd.f32 %v584, %v614
    %v631 = vadd.f32 %v589, %v615
    %v632 = vadd.f32 %v592, %v616
    %v633 = vadd.f32 %v597, %v617
    %v634 = vadd.f32 %v600, %v618
    %635 = vmax.xlane.f32.xlu0 %v619
    %v636 = vpop.xlane.xlu0 %635
    %637 = vmax.xlane.f32.xlu0 %v620
    %v638 = vpop.xlane.xlu0 %637
    %639 = vmax.xlane.f32.xlu0 %v621
    %v640 = vpop.xlane.xlu0 %639
    %641 = vmax.xlane.f32.xlu0 %v622
    %v642 = vpop.xlane.xlu0 %641
    %643 = vmax.xlane.f32.xlu0 %v623
    %v644 = vpop.xlane.xlu0 %643
    %645 = vmax.xlane.f32.xlu0 %v624
    %v646 = vpop.xlane.xlu0 %645
    %647 = vmax.xlane.f32.xlu0 %v625
    %v648 = vpop.xlane.xlu0 %647
    %649 = vmax.xlane.f32.xlu0 %v626
    %v650 = vpop.xlane.xlu0 %649
    %651 = vmax.xlane.f32.xlu0 %v627
    %v652 = vpop.xlane.xlu0 %651
    %653 = vmax.xlane.f32.xlu0 %v628
    %v654 = vpop.xlane.xlu0 %653
    %655 = vmax.xlane.f32.xlu0 %v629
    %v656 = vpop.xlane.xlu0 %655
    %657 = vmax.xlane.f32.xlu0 %v630
    %v658 = vpop.xlane.xlu0 %657
    %659 = vmax.xlane.f32.xlu0 %v631
    %v660 = vpop.xlane.xlu0 %659
    %661 = vmax.xlane.f32.xlu0 %v632
    %v662 = vpop.xlane.xlu0 %661
    %663 = vmax.xlane.f32.xlu0 %v633
    %v664 = vpop.xlane.xlu0 %663
    %665 = vmax.xlane.f32.xlu0 %v634
    %v666 = vpop.xlane.xlu0 %665
    %v667 = vsub.f32 %v619, %v636
    %v668 = vsub.f32 %v620, %v638
    %v669 = vsub.f32 %v621, %v640
    %v670 = vsub.f32 %v622, %v642
    %v671 = vsub.f32 %v623, %v644
    %v672 = vsub.f32 %v624, %v646
    %v673 = vsub.f32 %v625, %v648
    %v674 = vsub.f32 %v626, %v650
    %v675 = vsub.f32 %v627, %v652
    %v676 = vsub.f32 %v628, %v654
    %v677 = vsub.f32 %v629, %v656
    %v678 = vsub.f32 %v630, %v658
    %v679 = vsub.f32 %v631, %v660
    %v680 = vsub.f32 %v632, %v662
    %v681 = vsub.f32 %v633, %v664
    %v682 = vsub.f32 %v634, %v666
    %v683 = vmul.f32 %v667, 1.442695
    %v684 = vpow.pop %v683
    %v685 = vmul.f32 %v668, 1.442695
    %v686 = vpow.pop %v685
    %v687 = vmul.f32 %v669, 1.442695
    %v688 = vpow.pop %v687
    %v689 = vmul.f32 %v670, 1.442695
    %v690 = vpow.pop %v689
    %v691 = vmul.f32 %v671, 1.442695
    %v692 = vpow.pop %v691
    %v693 = vmul.f32 %v672, 1.442695
    %v694 = vpow.pop %v693
    %v695 = vmul.f32 %v673, 1.442695
    %v696 = vpow.pop %v695
    %v697 = vmul.f32 %v674, 1.442695
    %v698 = vpow.pop %v697
    %v699 = vmul.f32 %v675, 1.442695
    %v700 = vpow.pop %v699
    %v701 = vmul.f32 %v676, 1.442695
    %v702 = vpow.pop %v701
    %v703 = vmul.f32 %v677, 1.442695
    %v704 = vpow.pop %v703
    %v705 = vmul.f32 %v678, 1.442695
    %v706 = vpow.pop %v705
    %v707 = vmul.f32 %v679, 1.442695
    %v708 = vpow.pop %v707
    %v709 = vmul.f32 %v680, 1.442695
    %v710 = vpow.pop %v709
    %v711 = vmul.f32 %v681, 1.442695
    %v712 = vpow.pop %v711
    %v713 = vmul.f32 %v682, 1.442695
    %v714 = vpow.pop %v713
    %715 = vadd.xlane.f32.xlu0 %v684
    %v716 = vpop.xlane.xlu0 %715
    %717 = vadd.xlane.f32.xlu0 %v686
    %v718 = vpop.xlane.xlu0 %717
    %719 = vadd.xlane.f32.xlu0 %v688
    %v720 = vpop.xlane.xlu0 %719
    %721 = vadd.xlane.f32.xlu0 %v690
    %v722 = vpop.xlane.xlu0 %721
    %723 = vadd.xlane.f32.xlu0 %v692
    %v724 = vpop.xlane.xlu0 %723
    %725 = vadd.xlane.f32.xlu0 %v694
    %v726 = vpop.xlane.xlu0 %725
    %727 = vadd.xlane.f32.xlu0 %v696
    %v728 = vpop.xlane.xlu0 %727
    %729 = vadd.xlane.f32.xlu0 %v698
    %v730 = vpop.xlane.xlu0 %729
    %731 = vadd.xlane.f32.xlu0 %v700
    %v732 = vpop.xlane.xlu0 %731
    %733 = vadd.xlane.f32.xlu0 %v702
    %v734 = vpop.xlane.xlu0 %733
    %735 = vadd.xlane.f32.xlu0 %v704
    %v736 = vpop.xlane.xlu0 %735
    %737 = vadd.xlane.f32.xlu0 %v706
    %v738 = vpop.xlane.xlu0 %737
    %739 = vadd.xlane.f32.xlu0 %v708
    %v740 = vpop.xlane.xlu0 %739
    %741 = vadd.xlane.f32.xlu0 %v710
    %v742 = vpop.xlane.xlu0 %741
    %743 = vadd.xlane.f32.xlu0 %v712
    %v744 = vpop.xlane.xlu0 %743
    %745 = vadd.xlane.f32.xlu0 %v714
    %v746 = vpop.xlane.xlu0 %745
    %v747 = vrcp.pop %v716
    %v748 = vrcp.pop %v718
    %v749 = vrcp.pop %v720
    %v750 = vrcp.pop %v722
    %v751 = vrcp.pop %v724
    %v752 = vrcp.pop %v726
    %v753 = vrcp.pop %v728
    %v754 = vrcp.pop %v730
    %v755 = vrcp.pop %v732
    %v756 = vrcp.pop %v734
    %v757 = vrcp.pop %v736
    %v758 = vrcp.pop %v738
    %v759 = vrcp.pop %v740
    %v760 = vrcp.pop %v742
    %v761 = vrcp.pop %v744
    %v762 = vrcp.pop %v746
    %v763 = vmul.f32 %v684, %v747
    %v764 = vmul.f32 %v686, %v748
    %v765 = vmul.f32 %v688, %v749
    %v766 = vmul.f32 %v690, %v750
    %v767 = vmul.f32 %v692, %v751
    %v768 = vmul.f32 %v694, %v752
    %v769 = vmul.f32 %v696, %v753
    %v770 = vmul.f32 %v698, %v754
    %v771 = vmul.f32 %v700, %v755
    %v772 = vmul.f32 %v702, %v756
    %v773 = vmul.f32 %v704, %v757
    %v774 = vmul.f32 %v706, %v758
    %v775 = vmul.f32 %v708, %v759
    %v776 = vmul.f32 %v710, %v760
    %v777 = vmul.f32 %v712, %v761
    %v778 = vmul.f32 %v714, %v762
    %v779 = vld [vmem:[#allocation8] sm:$0xf]
    %v780 = vld [vmem:[#allocation8 + $0x4] sm:$0xf]
    %v781 = vld [vmem:[#allocation8 + $0x8] sm:$0xf]
    %v782 = vld [vmem:[#allocation8 + $0xc] sm:$0xf]
    %v783 = vld [vmem:[%s7] sm:$0x1]
    %v785 = vlaneseq
    %v786 = vshrl.u32 %v785, 7
    %v787 = vsub.s32 0, %v786
    %v788 = vrot.slane %v783, %v787
    %v794 = vunpack.c.l.b16 %v779
    %v795 = vunpack.c.l.b16 %v780
    %v796 = vunpack.c.l.b16 %v781
    %v797 = vunpack.c.l.b16 %v782
    %v798 = vpack.c.b16 %v795, %v794
    %v799 = vpack.c.b16 %v797, %v796
    %802 = vmatprep.subr.bf16.mxu0 0
    %803 = vmatpush1.bf16.msra.mxu0 %v798
    %804 = vmatprep.subr.bf16.mxu0 0
    %805 = vmatpush1.bf16.msra.mxu0 %v799
    %806 = vmatprep.subr.bf16.mxu0 0
    %807 = vmatpush1.bf16.msra.mxu0 0
    %808 = vmatprep.subr.bf16.mxu0 0
    %809 = vmatpush1.bf16.msra.mxu0 0
    %810 = vmatprep.subr.bf16.mxu0 0
    %811 = vmatpush1.bf16.msra.mxu0 0
    %812 = vmatprep.subr.bf16.mxu0 0
    %813 = vmatpush1.bf16.msra.mxu0 0
    %814 = vmatprep.subr.bf16.mxu0 0
    %815 = vmatpush1.bf16.msra.mxu0 0
    %816 = vmatprep.subr.bf16.mxu0 0
    %817 = vmatpush1.bf16.msra.mxu0 0
    %818 = vmatprep.subr.bf16.mxu0 0
    %819 = vmatpush1.bf16.msra.mxu0 0
    %820 = vmatprep.subr.bf16.mxu0 0
    %821 = vmatpush1.bf16.msra.mxu0 0
    %822 = vmatprep.subr.bf16.mxu0 0
    %823 = vmatpush1.bf16.msra.mxu0 0
    %824 = vmatprep.subr.bf16.mxu0 0
    %825 = vmatpush1.bf16.msra.mxu0 0
    %826 = vmatprep.subr.bf16.mxu0 0
    %827 = vmatpush1.bf16.msra.mxu0 0
    %828 = vmatprep.subr.bf16.mxu0 0
    %829 = vmatpush1.bf16.msra.mxu0 0
    %830 = vmatprep.subr.bf16.mxu0 0
    %831 = vmatpush1.bf16.msra.mxu0 0
    %832 = vmatprep.subr.bf16.mxu0 0
    %833 = vmatpush1.bf16.msra.mxu0 0
    %834 = vmatprep.mubr.bf16.mxu0 0
    %835 = vmatmul.mubr.bf16.gmra.mrb[0].mxu0 %v186
    %v836 = vpop.f32.mrb[0].mxu0
    %v837 = vadd.f32 %v788, %v836
    %v838 = vpop.f32.mrb[0].mxu0
    %v839 = vpop.f32.mrb[0].mxu0
    %v840 = vadd.f32 %v788, %v839
    %v841 = vpop.f32.mrb[0].mxu0
    %842 = vmatprep.mubr.bf16.mxu0 0
    %843 = vmatmul.mubr.bf16.gmra.mrb[0].mxu0 %v189
    %v844 = vpop.f32.mrb[0].mxu0
    %v845 = vadd.f32 %v788, %v844
    %v846 = vpop.f32.mrb[0].mxu0
    %v847 = vpop.f32.mrb[0].mxu0
    %v848 = vadd.f32 %v788, %v847
    %v849 = vpop.f32.mrb[0].mxu0
    %850 = vmatprep.mubr.bf16.mxu0 0
    %851 = vmatmul.mubr.bf16.gmra.mrb[0].mxu0 %v192
    %v852 = vpop.f32.mrb[0].mxu0
    %v853 = vadd.f32 %v788, %v852
    %v854 = vpop.f32.mrb[0].mxu0
    %v855 = vpop.f32.mrb[0].mxu0
    %v856 = vadd.f32 %v788, %v855
    %v857 = vpop.f32.mrb[0].mxu0
    %858 = vmatprep.mubr.bf16.mxu0 0
    %859 = vmatmul.mubr.bf16.gmra.mrb[0].mxu0 %v195
    %v860 = vpop.f32.mrb[0].mxu0
    %v861 = vadd.f32 %v788, %v860
    %v862 = vpop.f32.mrb[0].mxu0
    %v863 = vpop.f32.mrb[0].mxu0
    %v864 = vadd.f32 %v788, %v863
    %v865 = vpop.f32.mrb[0].mxu0
    %866 = vmatprep.mubr.bf16.mxu0 0
    %867 = vmatmul.mubr.bf16.gmra.mrb[0].mxu0 %v198
    %v868 = vpop.f32.mrb[0].mxu0
    %v869 = vadd.f32 %v788, %v868
    %v870 = vpop.f32.mrb[0].mxu0
    %v871 = vpop.f32.mrb[0].mxu0
    %v872 = vadd.f32 %v788, %v871
    %v873 = vpop.f32.mrb[0].mxu0
    %874 = vmatprep.mubr.bf16.mxu0 0
    %875 = vmatmul.mubr.bf16.gmra.mrb[0].mxu0 %v201
    %v876 = vpop.f32.mrb[0].mxu0
    %v877 = vadd.f32 %v788, %v876
    %v878 = vpop.f32.mrb[0].mxu0
    %v879 = vpop.f32.mrb[0].mxu0
    %v880 = vadd.f32 %v788, %v879
    %v881 = vpop.f32.mrb[0].mxu0
    %882 = vmatprep.mubr.bf16.mxu0 0
    %883 = vmatmul.mubr.bf16.gmra.mrb[0].mxu0 %v204
    %v884 = vpop.f32.mrb[0].mxu0
    %v885 = vadd.f32 %v788, %v884
    %v886 = vpop.f32.mrb[0].mxu0
    %v887 = vpop.f32.mrb[0].mxu0
    %v888 = vadd.f32 %v788, %v887
    %v889 = vpop.f32.mrb[0].mxu0
    %890 = vmatprep.mubr.bf16.mxu0 0
    %891 = vmatmul.mubr.bf16.gmra.mrb[0].mxu0 %v207
    %v892 = vpop.f32.mrb[0].mxu0
    %v893 = vadd.f32 %v788, %v892
    %v894 = vpop.f32.mrb[0].mxu0
    %v895 = vpop.f32.mrb[0].mxu0
    %v896 = vadd.f32 %v788, %v895
    %v897 = vpop.f32.mrb[0].mxu0
    %898 = vdwg.mxu0
    %v899 = vpack.c.bf16 %v840, %v837
    %v900 = vpack.c.bf16 %v848, %v845
    %v901 = vpack.c.bf16 %v856, %v853
    %v902 = vpack.c.bf16 %v864, %v861
    %v903 = vpack.c.bf16 %v872, %v869
    %v904 = vpack.c.bf16 %v880, %v877
    %v905 = vpack.c.bf16 %v888, %v885
    %v906 = vpack.c.bf16 %v896, %v893
    %v907 = vpack.c.bf16 %v764, %v763
    %v908 = vpack.c.bf16 %v766, %v765
    %v909 = vpack.c.bf16 %v768, %v767
    %v910 = vpack.c.bf16 %v770, %v769
    %v911 = vpack.c.bf16 %v772, %v771
    %v912 = vpack.c.bf16 %v774, %v773
    %v913 = vpack.c.bf16 %v776, %v775
    %v914 = vpack.c.bf16 %v778, %v777
    %s915 = scalar_lea.vmem %s5, 1
    %v916 = vld [vmem:[%s915] sm:$0x1]
    %v918 = vpack.i.b16 %v916, %v916
    %v920 = vlaneseq
    %v921 = vshrl.u32 %v920, 7
    %v922 = vsub.s32 0, %v921
    %v923 = vrot.slane %v918, %v922
    %v924 = vmul.bf16 %v426, %v923
    %v925 = vmul.bf16 %v427, %v923
    %v926 = vmul.bf16 %v428, %v923
    %v927 = vmul.bf16 %v429, %v923
    %v928 = vmul.bf16 %v430, %v923
    %v929 = vmul.bf16 %v431, %v923
    %v930 = vmul.bf16 %v432, %v923
    %v931 = vmul.bf16 %v433, %v923
    %v933 = vsel %vm184, %v924, 0
    %v936 = vsel %vm184, %v925, 0
    %v939 = vsel %vm184, %v926, 0
    %v942 = vsel %vm184, %v927, 0
    %v945 = vsel %vm184, %v928, 0
    %v948 = vsel %vm184, %v929, 0
    %v951 = vsel %vm184, %v930, 0
    %v954 = vsel %vm184, %v931, 0
    %956 = vmatprep.subr.bf16.mxu0 0
    %957 = vmatpush1.bf16.xpose.msra.mxu0 %v483
    %958 = vmatprep.subr.bf16.mxu0 0
    %959 = vmatpush1.bf16.xpose.msra.mxu0 %v486
    %960 = vmatprep.subr.bf16.mxu0 0
    %961 = vmatpush1.bf16.xpose.msra.mxu0 %v489
    %962 = vmatprep.subr.bf16.mxu0 0
    %963 = vmatpush1.bf16.xpose.msra.mxu0 %v492
    %964 = vmatprep.subr.bf16.mxu0 0
    %965 = vmatpush1.bf16.xpose.msra.mxu0 %v495
    %966 = vmatprep.subr.bf16.mxu0 0
    %967 = vmatpush1.bf16.xpose.msra.mxu0 %v498
    %968 = vmatprep.subr.bf16.mxu0 0
    %969 = vmatpush1.bf16.xpose.msra.mxu0 %v501
    %970 = vmatprep.subr.bf16.mxu0 0
    %971 = vmatpush1.bf16.xpose.msra.mxu0 %v504
    %972 = vmatprep.subr.bf16.mxu0 0
    %973 = vmatpush1.bf16.xpose.msra.mxu0 0
    %974 = vmatprep.subr.bf16.mxu0 0
    %975 = vmatpush1.bf16.xpose.msra.mxu0 0
    %976 = vmatprep.subr.bf16.mxu0 0
    %977 = vmatpush1.bf16.xpose.msra.mxu0 0
    %978 = vmatprep.subr.bf16.mxu0 0
    %979 = vmatpush1.bf16.xpose.msra.mxu0 0
    %980 = vmatprep.subr.bf16.mxu0 0
    %981 = vmatpush1.bf16.xpose.msra.mxu0 0
    %982 = vmatprep.subr.bf16.mxu0 0
    %983 = vmatpush1.bf16.xpose.msra.mxu0 0
    %984 = vmatprep.subr.bf16.mxu0 0
    %985 = vmatpush1.bf16.xpose.msra.mxu0 0
    %986 = vmatprep.subr.bf16.mxu0 0
    %987 = vmatpush1.bf16.xpose.msra.mxu0 0
    %988 = vmatprep.mubr.bf16.mxu0 0
    %989 = vmatmul.mubr.bf16.gmra.mrb[0].mxu0 %v933
    %v990 = vpop.f32.mrb[0].mxu0
    %v991 = vadd.f32 0.0, %v990
    %v992 = vpop.f32.mrb[0].mxu0
    %v993 = vpop.f32.mrb[0].mxu0
    %v994 = vadd.f32 0.0, %v993
    %v995 = vpop.f32.mrb[0].mxu0
    %996 = vmatprep.mubr.bf16.mxu0 0
    %997 = vmatmul.mubr.bf16.gmra.mrb[0].mxu0 %v936
    %v998 = vpop.f32.mrb[0].mxu0
    %v999 = vadd.f32 0.0, %v998
    %v1000 = vpop.f32.mrb[0].mxu0
    %v1001 = vpop.f32.mrb[0].mxu0
    %v1002 = vadd.f32 0.0, %v1001
    %v1003 = vpop.f32.mrb[0].mxu0
    %1004 = vmatprep.mubr.bf16.mxu0 0
    %1005 = vmatmul.mubr.bf16.gmra.mrb[0].mxu0 %v939
    %v1006 = vpop.f32.mrb[0].mxu0
    %v1007 = vadd.f32 0.0, %v1006
    %v1008 = vpop.f32.mrb[0].mxu0
    %v1009 = vpop.f32.mrb[0].mxu0
    %v1010 = vadd.f32 0.0, %v1009
    %v1011 = vpop.f32.mrb[0].mxu0
    %1012 = vmatprep.mubr.bf16.mxu0 0
    %1013 = vmatmul.mubr.bf16.gmra.mrb[0].mxu0 %v942
    %v1014 = vpop.f32.mrb[0].mxu0
    %v1015 = vadd.f32 0.0, %v1014
    %v1016 = vpop.f32.mrb[0].mxu0
    %v1017 = vpop.f32.mrb[0].mxu0
    %v1018 = vadd.f32 0.0, %v1017
    %v1019 = vpop.f32.mrb[0].mxu0
    %1020 = vmatprep.mubr.bf16.mxu0 0
    %1021 = vmatmul.mubr.bf16.gmra.mrb[0].mxu0 %v945
    %v1022 = vpop.f32.mrb[0].mxu0
    %v1023 = vadd.f32 0.0, %v1022
    %v1024 = vpop.f32.mrb[0].mxu0
    %v1025 = vpop.f32.mrb[0].mxu0
    %v1026 = vadd.f32 0.0, %v1025
    %v1027 = vpop.f32.mrb[0].mxu0
    %1028 = vmatprep.mubr.bf16.mxu0 0
    %1029 = vmatmul.mubr.bf16.gmra.mrb[0].mxu0 %v948
    %v1030 = vpop.f32.mrb[0].mxu0
    %v1031 = vadd.f32 0.0, %v1030
    %v1032 = vpop.f32.mrb[0].mxu0
    %v1033 = vpop.f32.mrb[0].mxu0
    %v1034 = vadd.f32 0.0, %v1033
    %v1035 = vpop.f32.mrb[0].mxu0
    %1036 = vmatprep.mubr.bf16.mxu0 0
    %1037 = vmatmul.mubr.bf16.gmra.mrb[0].mxu0 %v951
    %v1038 = vpop.f32.mrb[0].mxu0
    %v1039 = vadd.f32 0.0, %v1038
    %v1040 = vpop.f32.mrb[0].mxu0
    %v1041 = vpop.f32.mrb[0].mxu0
    %v1042 = vadd.f32 0.0, %v1041
    %v1043 = vpop.f32.mrb[0].mxu0
    %1044 = vmatprep.mubr.bf16.mxu0 0
    %1045 = vmatmul.mubr.bf16.gmra.mrb[0].mxu0 %v954
    %v1046 = vpop.f32.mrb[0].mxu0
    %v1047 = vadd.f32 0.0, %v1046
    %v1048 = vpop.f32.mrb[0].mxu0
    %v1049 = vpop.f32.mrb[0].mxu0
    %v1050 = vadd.f32 0.0, %v1049
    %v1051 = vpop.f32.mrb[0].mxu0
    %1052 = vdwg.mxu0
    %s1053 = scalar_lea.vmem [#allocation10], 128
    %v1054 = vld [vmem:[%s1053] sm:$0xff]
    %v1055 = vld [vmem:[%s1053 + $0x8] sm:$0xff]
    %v1056 = vld [vmem:[%s1053 + $0x10] sm:$0xff]
    %v1057 = vld [vmem:[%s1053 + $0x18] sm:$0xff]
    %v1058 = vld [vmem:[%s1053 + $0x20] sm:$0xff]
    %v1059 = vld [vmem:[%s1053 + $0x28] sm:$0xff]
    %v1060 = vld [vmem:[%s1053 + $0x30] sm:$0xff]
    %v1061 = vld [vmem:[%s1053 + $0x38] sm:$0xff]
    %v1062 = vld [vmem:[%s1053 + $0x40] sm:$0xff]
    %v1063 = vld [vmem:[%s1053 + $0x48] sm:$0xff]
    %v1064 = vld [vmem:[%s1053 + $0x50] sm:$0xff]
    %v1065 = vld [vmem:[%s1053 + $0x58] sm:$0xff]
    %v1066 = vld [vmem:[%s1053 + $0x60] sm:$0xff]
    %v1067 = vld [vmem:[%s1053 + $0x68] sm:$0xff]
    %v1068 = vld [vmem:[%s1053 + $0x70] sm:$0xff]
    %v1069 = vld [vmem:[%s1053 + $0x78] sm:$0xff]
    %v1070 = vadd.f32 %v991, %v1054
    %v1071 = vadd.f32 %v994, %v1055
    %v1072 = vadd.f32 %v999, %v1056
    %v1073 = vadd.f32 %v1002, %v1057
    %v1074 = vadd.f32 %v1007, %v1058
    %v1075 = vadd.f32 %v1010, %v1059
    %v1076 = vadd.f32 %v1015, %v1060
    %v1077 = vadd.f32 %v1018, %v1061
    %v1078 = vadd.f32 %v1023, %v1062
    %v1079 = vadd.f32 %v1026, %v1063
    %v1080 = vadd.f32 %v1031, %v1064
    %v1081 = vadd.f32 %v1034, %v1065
    %v1082 = vadd.f32 %v1039, %v1066
    %v1083 = vadd.f32 %v1042, %v1067
    %v1084 = vadd.f32 %v1047, %v1068
    %v1085 = vadd.f32 %v1050, %v1069
    %1086 = vmax.xlane.f32.xlu0 %v1070
    %v1087 = vpop.xlane.xlu0 %1086
    %1088 = vmax.xlane.f32.xlu0 %v1071
    %v1089 = vpop.xlane.xlu0 %1088
    %1090 = vmax.xlane.f32.xlu0 %v1072
    %v1091 = vpop.xlane.xlu0 %1090
    %1092 = vmax.xlane.f32.xlu0 %v1073
    %v1093 = vpop.xlane.xlu0 %1092
    %1094 = vmax.xlane.f32.xlu0 %v1074
    %v1095 = vpop.xlane.xlu0 %1094
    %1096 = vmax.xlane.f32.xlu0 %v1075
    %v1097 = vpop.xlane.xlu0 %1096
    %1098 = vmax.xlane.f32.xlu0 %v1076
    %v1099 = vpop.xlane.xlu0 %1098
    %1100 = vmax.xlane.f32.xlu0 %v1077
    %v1101 = vpop.xlane.xlu0 %1100
    %1102 = vmax.xlane.f32.xlu0 %v1078
    %v1103 = vpop.xlane.xlu0 %1102
    %1104 = vmax.xlane.f32.xlu0 %v1079
    %v1105 = vpop.xlane.xlu0 %1104
    %1106 = vmax.xlane.f32.xlu0 %v1080
    %v1107 = vpop.xlane.xlu0 %1106
    %1108 = vmax.xlane.f32.xlu0 %v1081
    %v1109 = vpop.xlane.xlu0 %1108
    %1110 = vmax.xlane.f32.xlu0 %v1082
    %v1111 = vpop.xlane.xlu0 %1110
    %1112 = vmax.xlane.f32.xlu0 %v1083
    %v1113 = vpop.xlane.xlu0 %1112
    %1114 = vmax.xlane.f32.xlu0 %v1084
    %v1115 = vpop.xlane.xlu0 %1114
    %1116 = vmax.xlane.f32.xlu0 %v1085
    %v1117 = vpop.xlane.xlu0 %1116
    %v1118 = vsub.f32 %v1070, %v1087
    %v1119 = vsub.f32 %v1071, %v1089
    %v1120 = vsub.f32 %v1072, %v1091
    %v1121 = vsub.f32 %v1073, %v1093
    %v1122 = vsub.f32 %v1074, %v1095
    %v1123 = vsub.f32 %v1075, %v1097
    %v1124 = vsub.f32 %v1076, %v1099
    %v1125 = vsub.f32 %v1077, %v1101
    %v1126 = vsub.f32 %v1078, %v1103
    %v1127 = vsub.f32 %v1079, %v1105
    %v1128 = vsub.f32 %v1080, %v1107
    %v1129 = vsub.f32 %v1081, %v1109
    %v1130 = vsub.f32 %v1082, %v1111
    %v1131 = vsub.f32 %v1083, %v1113
    %v1132 = vsub.f32 %v1084, %v1115
    %v1133 = vsub.f32 %v1085, %v1117
    %v1134 = vmul.f32 %v1118, 1.442695
    %v1135 = vpow.pop %v1134
    %v1136 = vmul.f32 %v1119, 1.442695
    %v1137 = vpow.pop %v1136
    %v1138 = vmul.f32 %v1120, 1.442695
    %v1139 = vpow.pop %v1138
    %v1140 = vmul.f32 %v1121, 1.442695
    %v1141 = vpow.pop %v1140
    %v1142 = vmul.f32 %v1122, 1.442695
    %v1143 = vpow.pop %v1142
    %v1144 = vmul.f32 %v1123, 1.442695
    %v1145 = vpow.pop %v1144
    %v1146 = vmul.f32 %v1124, 1.442695
    %v1147 = vpow.pop %v1146
    %v1148 = vmul.f32 %v1125, 1.442695
    %v1149 = vpow.pop %v1148
    %v1150 = vmul.f32 %v1126, 1.442695
    %v1151 = vpow.pop %v1150
    %v1152 = vmul.f32 %v1127, 1.442695
    %v1153 = vpow.pop %v1152
    %v1154 = vmul.f32 %v1128, 1.442695
    %v1155 = vpow.pop %v1154
    %v1156 = vmul.f32 %v1129, 1.442695
    %v1157 = vpow.pop %v1156
    %v1158 = vmul.f32 %v1130, 1.442695
    %v1159 = vpow.pop %v1158
    %v1160 = vmul.f32 %v1131, 1.442695
    %v1161 = vpow.pop %v1160
    %v1162 = vmul.f32 %v1132, 1.442695
    %v1163 = vpow.pop %v1162
    %v1164 = vmul.f32 %v1133, 1.442695
    %v1165 = vpow.pop %v1164
    %1166 = vadd.xlane.f32.xlu0 %v1135
    %v1167 = vpop.xlane.xlu0 %1166
    %1168 = vadd.xlane.f32.xlu0 %v1137
    %v1169 = vpop.xlane.xlu0 %1168
    %1170 = vadd.xlane.f32.xlu0 %v1139
    %v1171 = vpop.xlane.xlu0 %1170
    %1172 = vadd.xlane.f32.xlu0 %v1141
    %v1173 = vpop.xlane.xlu0 %1172
    %1174 = vadd.xlane.f32.xlu0 %v1143
    %v1175 = vpop.xlane.xlu0 %1174
    %1176 = vadd.xlane.f32.xlu0 %v1145
    %v1177 = vpop.xlane.xlu0 %1176
    %1178 = vadd.xlane.f32.xlu0 %v1147
    %v1179 = vpop.xlane.xlu0 %1178
    %1180 = vadd.xlane.f32.xlu0 %v1149
    %v1181 = vpop.xlane.xlu0 %1180
    %1182 = vadd.xlane.f32.xlu0 %v1151
    %v1183 = vpop.xlane.xlu0 %1182
    %1184 = vadd.xlane.f32.xlu0 %v1153
    %v1185 = vpop.xlane.xlu0 %1184
    %1186 = vadd.xlane.f32.xlu0 %v1155
    %v1187 = vpop.xlane.xlu0 %1186
    %1188 = vadd.xlane.f32.xlu0 %v1157
    %v1189 = vpop.xlane.xlu0 %1188
    %1190 = vadd.xlane.f32.xlu0 %v1159
    %v1191 = vpop.xlane.xlu0 %1190
    %1192 = vadd.xlane.f32.xlu0 %v1161
    %v1193 = vpop.xlane.xlu0 %1192
    %1194 = vadd.xlane.f32.xlu0 %v1163
    %v1195 = vpop.xlane.xlu0 %1194
    %1196 = vadd.xlane.f32.xlu0 %v1165
    %v1197 = vpop.xlane.xlu0 %1196
    %v1198 = vrcp.pop %v1167
    %v1199 = vrcp.pop %v1169
    %v1200 = vrcp.pop %v1171
    %v1201 = vrcp.pop %v1173
    %v1202 = vrcp.pop %v1175
    %v1203 = vrcp.pop %v1177
    %v1204 = vrcp.pop %v1179
    %v1205 = vrcp.pop %v1181
    %v1206 = vrcp.pop %v1183
    %v1207 = vrcp.pop %v1185
    %v1208 = vrcp.pop %v1187
    %v1209 = vrcp.pop %v1189
    %v1210 = vrcp.pop %v1191
    %v1211 = vrcp.pop %v1193
    %v1212 = vrcp.pop %v1195
    %v1213 = vrcp.pop %v1197
    %v1214 = vmul.f32 %v1135, %v1198
    %v1215 = vmul.f32 %v1137, %v1199
    %v1216 = vmul.f32 %v1139, %v1200
    %v1217 = vmul.f32 %v1141, %v1201
    %v1218 = vmul.f32 %v1143, %v1202
    %v1219 = vmul.f32 %v1145, %v1203
    %v1220 = vmul.f32 %v1147, %v1204
    %v1221 = vmul.f32 %v1149, %v1205
    %v1222 = vmul.f32 %v1151, %v1206
    %v1223 = vmul.f32 %v1153, %v1207
    %v1224 = vmul.f32 %v1155, %v1208
    %v1225 = vmul.f32 %v1157, %v1209
    %v1226 = vmul.f32 %v1159, %v1210
    %v1227 = vmul.f32 %v1161, %v1211
    %v1228 = vmul.f32 %v1163, %v1212
    %v1229 = vmul.f32 %v1165, %v1213
    %s1230 = scalar_lea.vmem [#allocation8], 16
    %v1231 = vld [vmem:[%s1230] sm:$0xf]
    %v1232 = vld [vmem:[%s1230 + $0x4] sm:$0xf]
    %v1233 = vld [vmem:[%s1230 + $0x8] sm:$0xf]
    %v1234 = vld [vmem:[%s1230 + $0xc] sm:$0xf]
    %s1235 = scalar_lea.vmem %s7, 1
    %v1236 = vld [vmem:[%s1235] sm:$0x1]
    %v1238 = vlaneseq
    %v1239 = vshrl.u32 %v1238, 7
    %v1240 = vsub.s32 0, %v1239
    %v1241 = vrot.slane %v1236, %v1240
    %v1247 = vunpack.c.l.b16 %v1231
    %v1248 = vunpack.c.l.b16 %v1232
    %v1249 = vunpack.c.l.b16 %v1233
    %v1250 = vunpack.c.l.b16 %v1234
    %v1251 = vpack.c.b16 %v1248, %v1247
    %v1252 = vpack.c.b16 %v1250, %v1249
    %1255 = vmatprep.subr.bf16.mxu0 0
    %1256 = vmatpush1.bf16.msra.mxu0 %v1251
    %1257 = vmatprep.subr.bf16.mxu0 0
    %1258 = vmatpush1.bf16.msra.mxu0 %v1252
    %1259 = vmatprep.subr.bf16.mxu0 0
    %1260 = vmatpush1.bf16.msra.mxu0 0
    %1261 = vmatprep.subr.bf16.mxu0 0
    %1262 = vmatpush1.bf16.msra.mxu0 0
    %1263 = vmatprep.subr.bf16.mxu0 0
    %1264 = vmatpush1.bf16.msra.mxu0 0
    %1265 = vmatprep.subr.bf16.mxu0 0
    %1266 = vmatpush1.bf16.msra.mxu0 0
    %1267 = vmatprep.subr.bf16.mxu0 0
    %1268 = vmatpush1.bf16.msra.mxu0 0
    %1269 = vmatprep.subr.bf16.mxu0 0
    %1270 = vmatpush1.bf16.msra.mxu0 0
    %1271 = vmatprep.subr.bf16.mxu0 0
    %1272 = vmatpush1.bf16.msra.mxu0 0
    %1273 = vmatprep.subr.bf16.mxu0 0
    %1274 = vmatpush1.bf16.msra.mxu0 0
    %1275 = vmatprep.subr.bf16.mxu0 0
    %1276 = vmatpush1.bf16.msra.mxu0 0
    %1277 = vmatprep.subr.bf16.mxu0 0
    %1278 = vmatpush1.bf16.msra.mxu0 0
    %1279 = vmatprep.subr.bf16.mxu0 0
    %1280 = vmatpush1.bf16.msra.mxu0 0
    %1281 = vmatprep.subr.bf16.mxu0 0
    %1282 = vmatpush1.bf16.msra.mxu0 0
    %1283 = vmatprep.subr.bf16.mxu0 0
    %1284 = vmatpush1.bf16.msra.mxu0 0
    %1285 = vmatprep.subr.bf16.mxu0 0
    %1286 = vmatpush1.bf16.msra.mxu0 0
    %1287 = vmatprep.mubr.bf16.mxu0 0
    %1288 = vmatmul.mubr.bf16.gmra.mrb[0].mxu0 %v186
    %v1289 = vpop.f32.mrb[0].mxu0
    %v1290 = vadd.f32 %v1241, %v1289
    %v1291 = vpop.f32.mrb[0].mxu0
    %v1292 = vpop.f32.mrb[0].mxu0
    %v1293 = vadd.f32 %v1241, %v1292
    %v1294 = vpop.f32.mrb[0].mxu0
    %1295 = vmatprep.mubr.bf16.mxu0 0
    %1296 = vmatmul.mubr.bf16.gmra.mrb[0].mxu0 %v189
    %v1297 = vpop.f32.mrb[0].mxu0
    %v1298 = vadd.f32 %v1241, %v1297
    %v1299 = vpop.f32.mrb[0].mxu0
    %v1300 = vpop.f32.mrb[0].mxu0
    %v1301 = vadd.f32 %v1241, %v1300
    %v1302 = vpop.f32.mrb[0].mxu0
    %1303 = vmatprep.mubr.bf16.mxu0 0
    %1304 = vmatmul.mubr.bf16.gmra.mrb[0].mxu0 %v192
    %v1305 = vpop.f32.mrb[0].mxu0
    %v1306 = vadd.f32 %v1241, %v1305
    %v1307 = vpop.f32.mrb[0].mxu0
    %v1308 = vpop.f32.mrb[0].mxu0
    %v1309 = vadd.f32 %v1241, %v1308
    %v1310 = vpop.f32.mrb[0].mxu0
    %1311 = vmatprep.mubr.bf16.mxu0 0
    %1312 = vmatmul.mubr.bf16.gmra.mrb[0].mxu0 %v195
    %v1313 = vpop.f32.mrb[0].mxu0
    %v1314 = vadd.f32 %v1241, %v1313
    %v1315 = vpop.f32.mrb[0].mxu0
    %v1316 = vpop.f32.mrb[0].mxu0
    %v1317 = vadd.f32 %v1241, %v1316
    %v1318 = vpop.f32.mrb[0].mxu0
    %1319 = vmatprep.mubr.bf16.mxu0 0
    %1320 = vmatmul.mubr.bf16.gmra.mrb[0].mxu0 %v198
    %v1321 = vpop.f32.mrb[0].mxu0
    %v1322 = vadd.f32 %v1241, %v1321
    %v1323 = vpop.f32.mrb[0].mxu0
    %v1324 = vpop.f32.mrb[0].mxu0
    %v1325 = vadd.f32 %v1241, %v1324
    %v1326 = vpop.f32.mrb[0].mxu0
    %1327 = vmatprep.mubr.bf16.mxu0 0
    %1328 = vmatmul.mubr.bf16.gmra.mrb[0].mxu0 %v201
    %v1329 = vpop.f32.mrb[0].mxu0
    %v1330 = vadd.f32 %v1241, %v1329
    %v1331 = vpop.f32.mrb[0].mxu0
    %v1332 = vpop.f32.mrb[0].mxu0
    %v1333 = vadd.f32 %v1241, %v1332
    %v1334 = vpop.f32.mrb[0].mxu0
    %1335 = vmatprep.mubr.bf16.mxu0 0
    %1336 = vmatmul.mubr.bf16.gmra.mrb[0].mxu0 %v204
    %v1337 = vpop.f32.mrb[0].mxu0
    %v1338 = vadd.f32 %v1241, %v1337
    %v1339 = vpop.f32.mrb[0].mxu0
    %v1340 = vpop.f32.mrb[0].mxu0
    %v1341 = vadd.f32 %v1241, %v1340
    %v1342 = vpop.f32.mrb[0].mxu0
    %1343 = vmatprep.mubr.bf16.mxu0 0
    %1344 = vmatmul.mubr.bf16.gmra.mrb[0].mxu0 %v207
    %v1345 = vpop.f32.mrb[0].mxu0
    %v1346 = vadd.f32 %v1241, %v1345
    %v1347 = vpop.f32.mrb[0].mxu0
    %v1348 = vpop.f32.mrb[0].mxu0
    %v1349 = vadd.f32 %v1241, %v1348
    %v1350 = vpop.f32.mrb[0].mxu0
    %1351 = vdwg.mxu0
    %v1352 = vpack.c.bf16 %v1293, %v1290
    %v1353 = vpack.c.bf16 %v1301, %v1298
    %v1354 = vpack.c.bf16 %v1309, %v1306
    %v1355 = vpack.c.bf16 %v1317, %v1314
    %v1356 = vpack.c.bf16 %v1325, %v1322
    %v1357 = vpack.c.bf16 %v1333, %v1330
    %v1358 = vpack.c.bf16 %v1341, %v1338
    %v1359 = vpack.c.bf16 %v1349, %v1346
    %v1360 = vpack.c.bf16 %v1215, %v1214
    %v1361 = vpack.c.bf16 %v1217, %v1216
    %v1362 = vpack.c.bf16 %v1219, %v1218
    %v1363 = vpack.c.bf16 %v1221, %v1220
    %v1364 = vpack.c.bf16 %v1223, %v1222
    %v1365 = vpack.c.bf16 %v1225, %v1224
    %v1366 = vpack.c.bf16 %v1227, %v1226
    %v1367 = vpack.c.bf16 %v1229, %v1228
    %1368 = vmatprep.subr.bf16.mxu0 0
    %1369 = vmatpush1.bf16.msra.mxu0 %v1352
    %1370 = vmatprep.subr.bf16.mxu0 0
    %1371 = vmatpush1.bf16.msra.mxu0 %v1353
    %1372 = vmatprep.subr.bf16.mxu0 0
    %1373 = vmatpush1.bf16.msra.mxu0 %v1354
    %1374 = vmatprep.subr.bf16.mxu0 0
    %1375 = vmatpush1.bf16.msra.mxu0 %v1355
    %1376 = vmatprep.subr.bf16.mxu0 0
    %1377 = vmatpush1.bf16.msra.mxu0 %v1356
    %1378 = vmatprep.subr.bf16.mxu0 0
    %1379 = vmatpush1.bf16.msra.mxu0 %v1357
    %1380 = vmatprep.subr.bf16.mxu0 0
    %1381 = vmatpush1.bf16.msra.mxu0 %v1358
    %1382 = vmatprep.subr.bf16.mxu0 0
    %1383 = vmatpush1.bf16.msra.mxu0 %v1359
    %1384 = vmatprep.subr.bf16.mxu0 0
    %1385 = vmatpush1.bf16.msra.mxu0 0
    %1386 = vmatprep.subr.bf16.mxu0 0
    %1387 = vmatpush1.bf16.msra.mxu0 0
    %1388 = vmatprep.subr.bf16.mxu0 0
    %1389 = vmatpush1.bf16.msra.mxu0 0
    %1390 = vmatprep.subr.bf16.mxu0 0
    %1391 = vmatpush1.bf16.msra.mxu0 0
    %1392 = vmatprep.subr.bf16.mxu0 0
    %1393 = vmatpush1.bf16.msra.mxu0 0
    %1394 = vmatprep.subr.bf16.mxu0 0
    %1395 = vmatpush1.bf16.msra.mxu0 0
    %1396 = vmatprep.subr.bf16.mxu0 0
    %1397 = vmatpush1.bf16.msra.mxu0 0
    %1398 = vmatprep.subr.bf16.mxu0 0
    %1399 = vmatpush1.bf16.msra.mxu0 0
    %1400 = vmatprep.mubr.bf16.mxu0 0
    %1401 = vmatmul.mubr.bf16.gmra.mrb[0].mxu0 %v1360
    %v1402 = vpop.f32.mrb[0].mxu0
    %v1403 = vadd.f32 0.0, %v1402
    %v1404 = vpop.f32.mrb[0].mxu0
    %v1405 = vpop.f32.mrb[0].mxu0
    %v1406 = vadd.f32 0.0, %v1405
    %v1407 = vpop.f32.mrb[0].mxu0
    %1408 = vmatprep.mubr.bf16.mxu0 0
    %1409 = vmatmul.mubr.bf16.gmra.mrb[0].mxu0 %v1361
    %v1410 = vpop.f32.mrb[0].mxu0
    %v1411 = vadd.f32 0.0, %v1410
    %v1412 = vpop.f32.mrb[0].mxu0
    %v1413 = vpop.f32.mrb[0].mxu0
    %v1414 = vadd.f32 0.0, %v1413
    %v1415 = vpop.f32.mrb[0].mxu0
    %1416 = vmatprep.mubr.bf16.mxu0 0
    %1417 = vmatmul.mubr.bf16.gmra.mrb[0].mxu0 %v1362
    %v1418 = vpop.f32.mrb[0].mxu0
    %v1419 = vadd.f32 0.0, %v1418
    %v1420 = vpop.f32.mrb[0].mxu0
    %v1421 = vpop.f32.mrb[0].mxu0
    %v1422 = vadd.f32 0.0, %v1421
    %v1423 = vpop.f32.mrb[0].mxu0
    %1424 = vmatprep.mubr.bf16.mxu0 0
    %1425 = vmatmul.mubr.bf16.gmra.mrb[0].mxu0 %v1363
    %v1426 = vpop.f32.mrb[0].mxu0
    %v1427 = vadd.f32 0.0, %v1426
    %v1428 = vpop.f32.mrb[0].mxu0
    %v1429 = vpop.f32.mrb[0].mxu0
    %v1430 = vadd.f32 0.0, %v1429
    %v1431 = vpop.f32.mrb[0].mxu0
    %1432 = vmatprep.mubr.bf16.mxu0 0
    %1433 = vmatmul.mubr.bf16.gmra.mrb[0].mxu0 %v1364
    %v1434 = vpop.f32.mrb[0].mxu0
    %v1435 = vadd.f32 0.0, %v1434
    %v1436 = vpop.f32.mrb[0].mxu0
    %v1437 = vpop.f32.mrb[0].mxu0
    %v1438 = vadd.f32 0.0, %v1437
    %v1439 = vpop.f32.mrb[0].mxu0
    %1440 = vmatprep.mubr.bf16.mxu0 0
    %1441 = vmatmul.mubr.bf16.gmra.mrb[0].mxu0 %v1365
    %v1442 = vpop.f32.mrb[0].mxu0
    %v1443 = vadd.f32 0.0, %v1442
    %v1444 = vpop.f32.mrb[0].mxu0
    %v1445 = vpop.f32.mrb[0].mxu0
    %v1446 = vadd.f32 0.0, %v1445
    %v1447 = vpop.f32.mrb[0].mxu0
    %1448 = vmatprep.mubr.bf16.mxu0 0
    %1449 = vmatmul.mubr.bf16.gmra.mrb[0].mxu0 %v1366
    %v1450 = vpop.f32.mrb[0].mxu0
    %v1451 = vadd.f32 0.0, %v1450
    %v1452 = vpop.f32.mrb[0].mxu0
    %v1453 = vpop.f32.mrb[0].mxu0
    %v1454 = vadd.f32 0.0, %v1453
    %v1455 = vpop.f32.mrb[0].mxu0
    %1456 = vmatprep.mubr.bf16.mxu0 0
    %1457 = vmatmul.mubr.bf16.gmra.mrb[0].mxu0 %v1367
    %v1458 = vpop.f32.mrb[0].mxu0
    %v1459 = vadd.f32 0.0, %v1458
    %v1460 = vpop.f32.mrb[0].mxu0
    %v1461 = vpop.f32.mrb[0].mxu0
    %v1462 = vadd.f32 0.0, %v1461
    %v1463 = vpop.f32.mrb[0].mxu0
    %1464 = vdwg.mxu0
    %1465 = vmatprep.subr.bf16.mxu0 0
    %1466 = vmatpush1.bf16.msra.mxu0 %v899
    %1467 = vmatprep.subr.bf16.mxu0 0
    %1468 = vmatpush1.bf16.msra.mxu0 %v900
    %1469 = vmatprep.subr.bf16.mxu0 0
    %1470 = vmatpush1.bf16.msra.mxu0 %v901
    %1471 = vmatprep.subr.bf16.mxu0 0
    %1472 = vmatpush1.bf16.msra.mxu0 %v902
    %1473 = vmatprep.subr.bf16.mxu0 0
    %1474 = vmatpush1.bf16.msra.mxu0 %v903
    %1475 = vmatprep.subr.bf16.mxu0 0
    %1476 = vmatpush1.bf16.msra.mxu0 %v904
    %1477 = vmatprep.subr.bf16.mxu0 0
    %1478 = vmatpush1.bf16.msra.mxu0 %v905
    %1479 = vmatprep.subr.bf16.mxu0 0
    %1480 = vmatpush1.bf16.msra.mxu0 %v906
    %1481 = vmatprep.subr.bf16.mxu0 0
    %1482 = vmatpush1.bf16.msra.mxu0 0
    %1483 = vmatprep.subr.bf16.mxu0 0
    %1484 = vmatpush1.bf16.msra.mxu0 0
    %1485 = vmatprep.subr.bf16.mxu0 0
    %1486 = vmatpush1.bf16.msra.mxu0 0
    %1487 = vmatprep.subr.bf16.mxu0 0
    %1488 = vmatpush1.bf16.msra.mxu0 0
    %1489 = vmatprep.subr.bf16.mxu0 0
    %1490 = vmatpush1.bf16.msra.mxu0 0
    %1491 = vmatprep.subr.bf16.mxu0 0
    %1492 = vmatpush1.bf16.msra.mxu0 0
    %1493 = vmatprep.subr.bf16.mxu0 0
    %1494 = vmatpush1.bf16.msra.mxu0 0
    %1495 = vmatprep.subr.bf16.mxu0 0
    %1496 = vmatpush1.bf16.msra.mxu0 0
    %1497 = vmatprep.mubr.bf16.mxu0 0
    %1498 = vmatmul.mubr.bf16.gmra.mrb[0].mxu0 %v907
    %v1499 = vpop.f32.mrb[0].mxu0
    %v1500 = vadd.f32 %v1403, %v1499
    %v1501 = vpop.f32.mrb[0].mxu0
    %v1502 = vpop.f32.mrb[0].mxu0
    %v1503 = vadd.f32 %v1406, %v1502
    %v1504 = vpop.f32.mrb[0].mxu0
    %1505 = vmatprep.mubr.bf16.mxu0 0
    %1506 = vmatmul.mubr.bf16.gmra.mrb[0].mxu0 %v908
    %v1507 = vpop.f32.mrb[0].mxu0
    %v1508 = vadd.f32 %v1411, %v1507
    %v1509 = vpop.f32.mrb[0].mxu0
    %v1510 = vpop.f32.mrb[0].mxu0
    %v1511 = vadd.f32 %v1414, %v1510
    %v1512 = vpop.f32.mrb[0].mxu0
    %1513 = vmatprep.mubr.bf16.mxu0 0
    %1514 = vmatmul.mubr.bf16.gmra.mrb[0].mxu0 %v909
    %v1515 = vpop.f32.mrb[0].mxu0
    %v1516 = vadd.f32 %v1419, %v1515
    %v1517 = vpop.f32.mrb[0].mxu0
    %v1518 = vpop.f32.mrb[0].mxu0
    %v1519 = vadd.f32 %v1422, %v1518
    %v1520 = vpop.f32.mrb[0].mxu0
    %1521 = vmatprep.mubr.bf16.mxu0 0
    %1522 = vmatmul.mubr.bf16.gmra.mrb[0].mxu0 %v910
    %v1523 = vpop.f32.mrb[0].mxu0
    %v1524 = vadd.f32 %v1427, %v1523
    %v1525 = vpop.f32.mrb[0].mxu0
    %v1526 = vpop.f32.mrb[0].mxu0
    %v1527 = vadd.f32 %v1430, %v1526
    %v1528 = vpop.f32.mrb[0].mxu0
    %1529 = vmatprep.mubr.bf16.mxu0 0
    %1530 = vmatmul.mubr.bf16.gmra.mrb[0].mxu0 %v911
    %v1531 = vpop.f32.mrb[0].mxu0
    %v1532 = vadd.f32 %v1435, %v1531
    %v1533 = vpop.f32.mrb[0].mxu0
    %v1534 = vpop.f32.mrb[0].mxu0
    %v1535 = vadd.f32 %v1438, %v1534
    %v1536 = vpop.f32.mrb[0].mxu0
    %1537 = vmatprep.mubr.bf16.mxu0 0
    %1538 = vmatmul.mubr.bf16.gmra.mrb[0].mxu0 %v912
    %v1539 = vpop.f32.mrb[0].mxu0
    %v1540 = vadd.f32 %v1443, %v1539
    %v1541 = vpop.f32.mrb[0].mxu0
    %v1542 = vpop.f32.mrb[0].mxu0
    %v1543 = vadd.f32 %v1446, %v1542
    %v1544 = vpop.f32.mrb[0].mxu0
    %1545 = vmatprep.mubr.bf16.mxu0 0
    %1546 = vmatmul.mubr.bf16.gmra.mrb[0].mxu0 %v913
    %v1547 = vpop.f32.mrb[0].mxu0
    %v1548 = vadd.f32 %v1451, %v1547
    %v1549 = vpop.f32.mrb[0].mxu0
    %v1550 = vpop.f32.mrb[0].mxu0
    %v1551 = vadd.f32 %v1454, %v1550
    %v1552 = vpop.f32.mrb[0].mxu0
    %1553 = vmatprep.mubr.bf16.mxu0 0
    %1554 = vmatmul.mubr.bf16.gmra.mrb[0].mxu0 %v914
    %v1555 = vpop.f32.mrb[0].mxu0
    %v1556 = vadd.f32 %v1459, %v1555
    %v1557 = vpop.f32.mrb[0].mxu0
    %v1558 = vpop.f32.mrb[0].mxu0
    %v1559 = vadd.f32 %v1462, %v1558
    %v1560 = vpop.f32.mrb[0].mxu0
    %1561 = vdwg.mxu0
    %s1562 = scalar_lea.vmem %s5, 2
    %v1563 = vld [vmem:[%s1562] sm:$0x1]
    %v1565 = vpack.i.b16 %v1563, %v1563
    %v1567 = vlaneseq
    %v1568 = vshrl.u32 %v1567, 7
    %v1569 = vsub.s32 0, %v1568
    %v1570 = vrot.slane %v1565, %v1569
    %v1571 = vmul.bf16 %v426, %v1570
    %v1572 = vmul.bf16 %v427, %v1570
    %v1573 = vmul.bf16 %v428, %v1570
    %v1574 = vmul.bf16 %v429, %v1570
    %v1575 = vmul.bf16 %v430, %v1570
    %v1576 = vmul.bf16 %v431, %v1570
    %v1577 = vmul.bf16 %v432, %v1570
    %v1578 = vmul.bf16 %v433, %v1570
    %v1580 = vsel %vm184, %v1571, 0
    %v1583 = vsel %vm184, %v1572, 0
    %v1586 = vsel %vm184, %v1573, 0
    %v1589 = vsel %vm184, %v1574, 0
    %v1592 = vsel %vm184, %v1575, 0
    %v1595 = vsel %vm184, %v1576, 0
    %v1598 = vsel %vm184, %v1577, 0
    %v1601 = vsel %vm184, %v1578, 0
    %1603 = vmatprep.subr.bf16.mxu0 0
    %1604 = vmatpush1.bf16.xpose.msra.mxu0 %v483
    %1605 = vmatprep.subr.bf16.mxu0 0
    %1606 = vmatpush1.bf16.xpose.msra.mxu0 %v486
    %1607 = vmatprep.subr.bf16.mxu0 0
    %1608 = vmatpush1.bf16.xpose.msra.mxu0 %v489
    %1609 = vmatprep.subr.bf16.mxu0 0
    %1610 = vmatpush1.bf16.xpose.msra.mxu0 %v492
    %1611 = vmatprep.subr.bf16.mxu0 0
    %1612 = vmatpush1.bf16.xpose.msra.mxu0 %v495
    %1613 = vmatprep.subr.bf16.mxu0 0
    %1614 = vmatpush1.bf16.xpose.msra.mxu0 %v498
    %1615 = vmatprep.subr.bf16.mxu0 0
    %1616 = vmatpush1.bf16.xpose.msra.mxu0 %v501
    %1617 = vmatprep.subr.bf16.mxu0 0
    %1618 = vmatpush1.bf16.xpose.msra.mxu0 %v504
    %1619 = vmatprep.subr.bf16.mxu0 0
    %1620 = vmatpush1.bf16.xpose.msra.mxu0 0
    %1621 = vmatprep.subr.bf16.mxu0 0
    %1622 = vmatpush1.bf16.xpose.msra.mxu0 0
    %1623 = vmatprep.subr.bf16.mxu0 0
    %1624 = vmatpush1.bf16.xpose.msra.mxu0 0
    %1625 = vmatprep.subr.bf16.mxu0 0
    %1626 = vmatpush1.bf16.xpose.msra.mxu0 0
    %1627 = vmatprep.subr.bf16.mxu0 0
    %1628 = vmatpush1.bf16.xpose.msra.mxu0 0
    %1629 = vmatprep.subr.bf16.mxu0 0
    %1630 = vmatpush1.bf16.xpose.msra.mxu0 0
    %1631 = vmatprep.subr.bf16.mxu0 0
    %1632 = vmatpush1.bf16.xpose.msra.mxu0 0
    %1633 = vmatprep.subr.bf16.mxu0 0
    %1634 = vmatpush1.bf16.xpose.msra.mxu0 0
    %1635 = vmatprep.mubr.bf16.mxu0 0
    %1636 = vmatmul.mubr.bf16.gmra.mrb[0].mxu0 %v1580
    %v1637 = vpop.f32.mrb[0].mxu0
    %v1638 = vadd.f32 0.0, %v1637
    %v1639 = vpop.f32.mrb[0].mxu0
    %v1640 = vpop.f32.mrb[0].mxu0
    %v1641 = vadd.f32 0.0, %v1640
    %v1642 = vpop.f32.mrb[0].mxu0
    %1643 = vmatprep.mubr.bf16.mxu0 0
    %1644 = vmatmul.mubr.bf16.gmra.mrb[0].mxu0 %v1583
    %v1645 = vpop.f32.mrb[0].mxu0
    %v1646 = vadd.f32 0.0, %v1645
    %v1647 = vpop.f32.mrb[0].mxu0
    %v1648 = vpop.f32.mrb[0].mxu0
    %v1649 = vadd.f32 0.0, %v1648
    %v1650 = vpop.f32.mrb[0].mxu0
    %1651 = vmatprep.mubr.bf16.mxu0 0
    %1652 = vmatmul.mubr.bf16.gmra.mrb[0].mxu0 %v1586
    %v1653 = vpop.f32.mrb[0].mxu0
    %v1654 = vadd.f32 0.0, %v1653
    %v1655 = vpop.f32.mrb[0].mxu0
    %v1656 = vpop.f32.mrb[0].mxu0
    %v1657 = vadd.f32 0.0, %v1656
    %v1658 = vpop.f32.mrb[0].mxu0
    %1659 = vmatprep.mubr.bf16.mxu0 0
    %1660 = vmatmul.mubr.bf16.gmra.mrb[0].mxu0 %v1589
    %v1661 = vpop.f32.mrb[0].mxu0
    %v1662 = vadd.f32 0.0, %v1661
    %v1663 = vpop.f32.mrb[0].mxu0
    %v1664 = vpop.f32.mrb[0].mxu0
    %v1665 = vadd.f32 0.0, %v1664
    %v1666 = vpop.f32.mrb[0].mxu0
    %1667 = vmatprep.mubr.bf16.mxu0 0
    %1668 = vmatmul.mubr.bf16.gmra.mrb[0].mxu0 %v1592
    %v1669 = vpop.f32.mrb[0].mxu0
    %v1670 = vadd.f32 0.0, %v1669
    %v1671 = vpop.f32.mrb[0].mxu0
    %v1672 = vpop.f32.mrb[0].mxu0
    %v1673 = vadd.f32 0.0, %v1672
    %v1674 = vpop.f32.mrb[0].mxu0
    %1675 = vmatprep.mubr.bf16.mxu0 0
    %1676 = vmatmul.mubr.bf16.gmra.mrb[0].mxu0 %v1595
    %v1677 = vpop.f32.mrb[0].mxu0
    %v1678 = vadd.f32 0.0, %v1677
    %v1679 = vpop.f32.mrb[0].mxu0
    %v1680 = vpop.f32.mrb[0].mxu0
    %v1681 = vadd.f32 0.0, %v1680
    %v1682 = vpop.f32.mrb[0].mxu0
    %1683 = vmatprep.mubr.bf16.mxu0 0
    %1684 = vmatmul.mubr.bf16.gmra.mrb[0].mxu0 %v1598
    %v1685 = vpop.f32.mrb[0].mxu0
    %v1686 = vadd.f32 0.0, %v1685
    %v1687 = vpop.f32.mrb[0].mxu0
    %v1688 = vpop.f32.mrb[0].mxu0
    %v1689 = vadd.f32 0.0, %v1688
    %v1690 = vpop.f32.mrb[0].mxu0
    %1691 = vmatprep.mubr.bf16.mxu0 0
    %1692 = vmatmul.mubr.bf16.gmra.mrb[0].mxu0 %v1601
    %v1693 = vpop.f32.mrb[0].mxu0
    %v1694 = vadd.f32 0.0, %v1693
    %v1695 = vpop.f32.mrb[0].mxu0
    %v1696 = vpop.f32.mrb[0].mxu0
    %v1697 = vadd.f32 0.0, %v1696
    %v1698 = vpop.f32.mrb[0].mxu0
    %1699 = vdwg.mxu0
    %s1700 = scalar_lea.vmem [#allocation10], 256
    %v1701 = vld [vmem:[%s1700] sm:$0xff]
    %v1702 = vld [vmem:[%s1700 + $0x8] sm:$0xff]
    %v1703 = vld [vmem:[%s1700 + $0x10] sm:$0xff]
    %v1704 = vld [vmem:[%s1700 + $0x18] sm:$0xff]
    %v1705 = vld [vmem:[%s1700 + $0x20] sm:$0xff]
    %v1706 = vld [vmem:[%s1700 + $0x28] sm:$0xff]
    %v1707 = vld [vmem:[%s1700 + $0x30] sm:$0xff]
    %v1708 = vld [vmem:[%s1700 + $0x38] sm:$0xff]
    %v1709 = vld [vmem:[%s1700 + $0x40] sm:$0xff]
    %v1710 = vld [vmem:[%s1700 + $0x48] sm:$0xff]
    %v1711 = vld [vmem:[%s1700 + $0x50] sm:$0xff]
    %v1712 = vld [vmem:[%s1700 + $0x58] sm:$0xff]
    %v1713 = vld [vmem:[%s1700 + $0x60] sm:$0xff]
    %v1714 = vld [vmem:[%s1700 + $0x68] sm:$0xff]
    %v1715 = vld [vmem:[%s1700 + $0x70] sm:$0xff]
    %v1716 = vld [vmem:[%s1700 + $0x78] sm:$0xff]
    %v1717 = vadd.f32 %v1638, %v1701
    %v1718 = vadd.f32 %v1641, %v1702
    %v1719 = vadd.f32 %v1646, %v1703
    %v1720 = vadd.f32 %v1649, %v1704
    %v1721 = vadd.f32 %v1654, %v1705
    %v1722 = vadd.f32 %v1657, %v1706
    %v1723 = vadd.f32 %v1662, %v1707
    %v1724 = vadd.f32 %v1665, %v1708
    %v1725 = vadd.f32 %v1670, %v1709
    %v1726 = vadd.f32 %v1673, %v1710
    %v1727 = vadd.f32 %v1678, %v1711
    %v1728 = vadd.f32 %v1681, %v1712
    %v1729 = vadd.f32 %v1686, %v1713
    %v1730 = vadd.f32 %v1689, %v1714
    %v1731 = vadd.f32 %v1694, %v1715
    %v1732 = vadd.f32 %v1697, %v1716
    %1733 = vmax.xlane.f32.xlu0 %v1717
    %v1734 = vpop.xlane.xlu0 %1733
    %1735 = vmax.xlane.f32.xlu0 %v1718
    %v1736 = vpop.xlane.xlu0 %1735
    %1737 = vmax.xlane.f32.xlu0 %v1719
    %v1738 = vpop.xlane.xlu0 %1737
    %1739 = vmax.xlane.f32.xlu0 %v1720
    %v1740 = vpop.xlane.xlu0 %1739
    %1741 = vmax.xlane.f32.xlu0 %v1721
    %v1742 = vpop.xlane.xlu0 %1741
    %1743 = vmax.xlane.f32.xlu0 %v1722
    %v1744 = vpop.xlane.xlu0 %1743
    %1745 = vmax.xlane.f32.xlu0 %v1723
    %v1746 = vpop.xlane.xlu0 %1745
    %1747 = vmax.xlane.f32.xlu0 %v1724
    %v1748 = vpop.xlane.xlu0 %1747
    %1749 = vmax.xlane.f32.xlu0 %v1725
    %v1750 = vpop.xlane.xlu0 %1749
    %1751 = vmax.xlane.f32.xlu0 %v1726
    %v1752 = vpop.xlane.xlu0 %1751
    %1753 = vmax.xlane.f32.xlu0 %v1727
    %v1754 = vpop.xlane.xlu0 %1753
    %1755 = vmax.xlane.f32.xlu0 %v1728
    %v1756 = vpop.xlane.xlu0 %1755
    %1757 = vmax.xlane.f32.xlu0 %v1729
    %v1758 = vpop.xlane.xlu0 %1757
    %1759 = vmax.xlane.f32.xlu0 %v1730
    %v1760 = vpop.xlane.xlu0 %1759
    %1761 = vmax.xlane.f32.xlu0 %v1731
    %v1762 = vpop.xlane.xlu0 %1761
    %1763 = vmax.xlane.f32.xlu0 %v1732
    %v1764 = vpop.xlane.xlu0 %1763
    %v1765 = vsub.f32 %v1717, %v1734
    %v1766 = vsub.f32 %v1718, %v1736
    %v1767 = vsub.f32 %v1719, %v1738
    %v1768 = vsub.f32 %v1720, %v1740
    %v1769 = vsub.f32 %v1721, %v1742
    %v1770 = vsub.f32 %v1722, %v1744
    %v1771 = vsub.f32 %v1723, %v1746
    %v1772 = vsub.f32 %v1724, %v1748
    %v1773 = vsub.f32 %v1725, %v1750
    %v1774 = vsub.f32 %v1726, %v1752
    %v1775 = vsub.f32 %v1727, %v1754
    %v1776 = vsub.f32 %v1728, %v1756
    %v1777 = vsub.f32 %v1729, %v1758
    %v1778 = vsub.f32 %v1730, %v1760
    %v1779 = vsub.f32 %v1731, %v1762
    %v1780 = vsub.f32 %v1732, %v1764
    %v1781 = vmul.f32 %v1765, 1.442695
    %v1782 = vpow.pop %v1781
    %v1783 = vmul.f32 %v1766, 1.442695
    %v1784 = vpow.pop %v1783
    %v1785 = vmul.f32 %v1767, 1.442695
    %v1786 = vpow.pop %v1785
    %v1787 = vmul.f32 %v1768, 1.442695
    %v1788 = vpow.pop %v1787
    %v1789 = vmul.f32 %v1769, 1.442695
    %v1790 = vpow.pop %v1789
    %v1791 = vmul.f32 %v1770, 1.442695
    %v1792 = vpow.pop %v1791
    %v1793 = vmul.f32 %v1771, 1.442695
    %v1794 = vpow.pop %v1793
    %v1795 = vmul.f32 %v1772, 1.442695
    %v1796 = vpow.pop %v1795
    %v1797 = vmul.f32 %v1773, 1.442695
    %v1798 = vpow.pop %v1797
    %v1799 = vmul.f32 %v1774, 1.442695
    %v1800 = vpow.pop %v1799
    %v1801 = vmul.f32 %v1775, 1.442695
    %v1802 = vpow.pop %v1801
    %v1803 = vmul.f32 %v1776, 1.442695
    %v1804 = vpow.pop %v1803
    %v1805 = vmul.f32 %v1777, 1.442695
    %v1806 = vpow.pop %v1805
    %v1807 = vmul.f32 %v1778, 1.442695
    %v1808 = vpow.pop %v1807
    %v1809 = vmul.f32 %v1779, 1.442695
    %v1810 = vpow.pop %v1809
    %v1811 = vmul.f32 %v1780, 1.442695
    %v1812 = vpow.pop %v1811
    %1813 = vadd.xlane.f32.xlu0 %v1782
    %v1814 = vpop.xlane.xlu0 %1813
    %1815 = vadd.xlane.f32.xlu0 %v1784
    %v1816 = vpop.xlane.xlu0 %1815
    %1817 = vadd.xlane.f32.xlu0 %v1786
    %v1818 = vpop.xlane.xlu0 %1817
    %1819 = vadd.xlane.f32.xlu0 %v1788
    %v1820 = vpop.xlane.xlu0 %1819
    %1821 = vadd.xlane.f32.xlu0 %v1790
    %v1822 = vpop.xlane.xlu0 %1821
    %1823 = vadd.xlane.f32.xlu0 %v1792
    %v1824 = vpop.xlane.xlu0 %1823
    %1825 = vadd.xlane.f32.xlu0 %v1794
    %v1826 = vpop.xlane.xlu0 %1825
    %1827 = vadd.xlane.f32.xlu0 %v1796
    %v1828 = vpop.xlane.xlu0 %1827
    %1829 = vadd.xlane.f32.xlu0 %v1798
    %v1830 = vpop.xlane.xlu0 %1829
    %1831 = vadd.xlane.f32.xlu0 %v1800
    %v1832 = vpop.xlane.xlu0 %1831
    %1833 = vadd.xlane.f32.xlu0 %v1802
    %v1834 = vpop.xlane.xlu0 %1833
    %1835 = vadd.xlane.f32.xlu0 %v1804
    %v1836 = vpop.xlane.xlu0 %1835
    %1837 = vadd.xlane.f32.xlu0 %v1806
    %v1838 = vpop.xlane.xlu0 %1837
    %1839 = vadd.xlane.f32.xlu0 %v1808
    %v1840 = vpop.xlane.xlu0 %1839
    %1841 = vadd.xlane.f32.xlu0 %v1810
    %v1842 = vpop.xlane.xlu0 %1841
    %1843 = vadd.xlane.f32.xlu0 %v1812
    %v1844 = vpop.xlane.xlu0 %1843
    %v1845 = vrcp.pop %v1814
    %v1846 = vrcp.pop %v1816
    %v1847 = vrcp.pop %v1818
    %v1848 = vrcp.pop %v1820
    %v1849 = vrcp.pop %v1822
    %v1850 = vrcp.pop %v1824
    %v1851 = vrcp.pop %v1826
    %v1852 = vrcp.pop %v1828
    %v1853 = vrcp.pop %v1830
    %v1854 = vrcp.pop %v1832
    %v1855 = vrcp.pop %v1834
    %v1856 = vrcp.pop %v1836
    %v1857 = vrcp.pop %v1838
    %v1858 = vrcp.pop %v1840
    %v1859 = vrcp.pop %v1842
    %v1860 = vrcp.pop %v1844
    %v1861 = vmul.f32 %v1782, %v1845
    %v1862 = vmul.f32 %v1784, %v1846
    %v1863 = vmul.f32 %v1786, %v1847
    %v1864 = vmul.f32 %v1788, %v1848
    %v1865 = vmul.f32 %v1790, %v1849
    %v1866 = vmul.f32 %v1792, %v1850
    %v1867 = vmul.f32 %v1794, %v1851
    %v1868 = vmul.f32 %v1796, %v1852
    %v1869 = vmul.f32 %v1798, %v1853
    %v1870 = vmul.f32 %v1800, %v1854
    %v1871 = vmul.f32 %v1802, %v1855
    %v1872 = vmul.f32 %v1804, %v1856
    %v1873 = vmul.f32 %v1806, %v1857
    %v1874 = vmul.f32 %v1808, %v1858
    %v1875 = vmul.f32 %v1810, %v1859
    %v1876 = vmul.f32 %v1812, %v1860
    %s1877 = scalar_lea.vmem [#allocation8], 32
    %v1878 = vld [vmem:[%s1877] sm:$0xf]
    %v1879 = vld [vmem:[%s1877 + $0x4] sm:$0xf]
    %v1880 = vld [vmem:[%s1877 + $0x8] sm:$0xf]
    %v1881 = vld [vmem:[%s1877 + $0xc] sm:$0xf]
    %s1882 = scalar_lea.vmem %s7, 2
    %v1883 = vld [vmem:[%s1882] sm:$0x1]
    %v1885 = vlaneseq
    %v1886 = vshrl.u32 %v1885, 7
    %v1887 = vsub.s32 0, %v1886
    %v1888 = vrot.slane %v1883, %v1887
    %v1894 = vunpack.c.l.b16 %v1878
    %v1895 = vunpack.c.l.b16 %v1879
    %v1896 = vunpack.c.l.b16 %v1880
    %v1897 = vunpack.c.l.b16 %v1881
    %v1898 = vpack.c.b16 %v1895, %v1894
    %v1899 = vpack.c.b16 %v1897, %v1896
    %1902 = vmatprep.subr.bf16.mxu0 0
    %1903 = vmatpush1.bf16.msra.mxu0 %v1898
    %1904 = vmatprep.subr.bf16.mxu0 0
    %1905 = vmatpush1.bf16.msra.mxu0 %v1899
    %1906 = vmatprep.subr.bf16.mxu0 0
    %1907 = vmatpush1.bf16.msra.mxu0 0
    %1908 = vmatprep.subr.bf16.mxu0 0
    %1909 = vmatpush1.bf16.msra.mxu0 0
    %1910 = vmatprep.subr.bf16.mxu0 0
    %1911 = vmatpush1.bf16.msra.mxu0 0
    %1912 = vmatprep.subr.bf16.mxu0 0
    %1913 = vmatpush1.bf16.msra.mxu0 0
    %1914 = vmatprep.subr.bf16.mxu0 0
    %1915 = vmatpush1.bf16.msra.mxu0 0
    %1916 = vmatprep.subr.bf16.mxu0 0
    %1917 = vmatpush1.bf16.msra.mxu0 0
    %1918 = vmatprep.subr.bf16.mxu0 0
    %1919 = vmatpush1.bf16.msra.mxu0 0
    %1920 = vmatprep.subr.bf16.mxu0 0
    %1921 = vmatpush1.bf16.msra.mxu0 0
    %1922 = vmatprep.subr.bf16.mxu0 0
    %1923 = vmatpush1.bf16.msra.mxu0 0
    %1924 = vmatprep.subr.bf16.mxu0 0
    %1925 = vmatpush1.bf16.msra.mxu0 0
    %1926 = vmatprep.subr.bf16.mxu0 0
    %1927 = vmatpush1.bf16.msra.mxu0 0
    %1928 = vmatprep.subr.bf16.mxu0 0
    %1929 = vmatpush1.bf16.msra.mxu0 0
    %1930 = vmatprep.subr.bf16.mxu0 0
    %1931 = vmatpush1.bf16.msra.mxu0 0
    %1932 = vmatprep.subr.bf16.mxu0 0
    %1933 = vmatpush1.bf16.msra.mxu0 0
    %1934 = vmatprep.mubr.bf16.mxu0 0
    %1935 = vmatmul.mubr.bf16.gmra.mrb[0].mxu0 %v186
    %v1936 = vpop.f32.mrb[0].mxu0
    %v1937 = vadd.f32 %v1888, %v1936
    %v1938 = vpop.f32.mrb[0].mxu0
    %v1939 = vpop.f32.mrb[0].mxu0
    %v1940 = vadd.f32 %v1888, %v1939
    %v1941 = vpop.f32.mrb[0].mxu0
    %1942 = vmatprep.mubr.bf16.mxu0 0
    %1943 = vmatmul.mubr.bf16.gmra.mrb[0].mxu0 %v189
    %v1944 = vpop.f32.mrb[0].mxu0
    %v1945 = vadd.f32 %v1888, %v1944
    %v1946 = vpop.f32.mrb[0].mxu0
    %v1947 = vpop.f32.mrb[0].mxu0
    %v1948 = vadd.f32 %v1888, %v1947
    %v1949 = vpop.f32.mrb[0].mxu0
    %1950 = vmatprep.mubr.bf16.mxu0 0
    %1951 = vmatmul.mubr.bf16.gmra.mrb[0].mxu0 %v192
    %v1952 = vpop.f32.mrb[0].mxu0
    %v1953 = vadd.f32 %v1888, %v1952
    %v1954 = vpop.f32.mrb[0].mxu0
    %v1955 = vpop.f32.mrb[0].mxu0
    %v1956 = vadd.f32 %v1888, %v1955
    %v1957 = vpop.f32.mrb[0].mxu0
    %1958 = vmatprep.mubr.bf16.mxu0 0
    %1959 = vmatmul.mubr.bf16.gmra.mrb[0].mxu0 %v195
    %v1960 = vpop.f32.mrb[0].mxu0
    %v1961 = vadd.f32 %v1888, %v1960
    %v1962 = vpop.f32.mrb[0].mxu0
    %v1963 = vpop.f32.mrb[0].mxu0
    %v1964 = vadd.f32 %v1888, %v1963
    %v1965 = vpop.f32.mrb[0].mxu0
    %1966 = vmatprep.mubr.bf16.mxu0 0
    %1967 = vmatmul.mubr.bf16.gmra.mrb[0].mxu0 %v198
    %v1968 = vpop.f32.mrb[0].mxu0
    %v1969 = vadd.f32 %v1888, %v1968
    %v1970 = vpop.f32.mrb[0].mxu0
    %v1971 = vpop.f32.mrb[0].mxu0
    %v1972 = vadd.f32 %v1888, %v1971
    %v1973 = vpop.f32.mrb[0].mxu0
    %1974 = vmatprep.mubr.bf16.mxu0 0
    %1975 = vmatmul.mubr.bf16.gmra.mrb[0].mxu0 %v201
    %v1976 = vpop.f32.mrb[0].mxu0
    %v1977 = vadd.f32 %v1888, %v1976
    %v1978 = vpop.f32.mrb[0].mxu0
    %v1979 = vpop.f32.mrb[0].mxu0
    %v1980 = vadd.f32 %v1888, %v1979
    %v1981 = vpop.f32.mrb[0].mxu0
    %1982 = vmatprep.mubr.bf16.mxu0 0
    %1983 = vmatmul.mubr.bf16.gmra.mrb[0].mxu0 %v204
    %v1984 = vpop.f32.mrb[0].mxu0
    %v1985 = vadd.f32 %v1888, %v1984
    %v1986 = vpop.f32.mrb[0].mxu0
    %v1987 = vpop.f32.mrb[0].mxu0
    %v1988 = vadd.f32 %v1888, %v1987
    %v1989 = vpop.f32.mrb[0].mxu0
    %1990 = vmatprep.mubr.bf16.mxu0 0
    %1991 = vmatmul.mubr.bf16.gmra.mrb[0].mxu0 %v207
    %v1992 = vpop.f32.mrb[0].mxu0
    %v1993 = vadd.f32 %v1888, %v1992
    %v1994 = vpop.f32.mrb[0].mxu0
    %v1995 = vpop.f32.mrb[0].mxu0
    %v1996 = vadd.f32 %v1888, %v1995
    %v1997 = vpop.f32.mrb[0].mxu0
    %1998 = vdwg.mxu0
    %v1999 = vpack.c.bf16 %v1940, %v1937
    %v2000 = vpack.c.bf16 %v1948, %v1945
    %v2001 = vpack.c.bf16 %v1956, %v1953
    %v2002 = vpack.c.bf16 %v1964, %v1961
    %v2003 = vpack.c.bf16 %v1972, %v1969
    %v2004 = vpack.c.bf16 %v1980, %v1977
    %v2005 = vpack.c.bf16 %v1988, %v1985
    %v2006 = vpack.c.bf16 %v1996, %v1993
    %v2007 = vpack.c.bf16 %v1862, %v1861
    %v2008 = vpack.c.bf16 %v1864, %v1863
    %v2009 = vpack.c.bf16 %v1866, %v1865
    %v2010 = vpack.c.bf16 %v1868, %v1867
    %v2011 = vpack.c.bf16 %v1870, %v1869
    %v2012 = vpack.c.bf16 %v1872, %v1871
    %v2013 = vpack.c.bf16 %v1874, %v1873
    %v2014 = vpack.c.bf16 %v1876, %v1875
    %2015 = vmatprep.subr.bf16.mxu0 0
    %2016 = vmatpush1.bf16.msra.mxu0 %v1999
    %2017 = vmatprep.subr.bf16.mxu0 0
    %2018 = vmatpush1.bf16.msra.mxu0 %v2000
    %2019 = vmatprep.subr.bf16.mxu0 0
    %2020 = vmatpush1.bf16.msra.mxu0 %v2001
    %2021 = vmatprep.subr.bf16.mxu0 0
    %2022 = vmatpush1.bf16.msra.mxu0 %v2002
    %2023 = vmatprep.subr.bf16.mxu0 0
    %2024 = vmatpush1.bf16.msra.mxu0 %v2003
    %2025 = vmatprep.subr.bf16.mxu0 0
    %2026 = vmatpush1.bf16.msra.mxu0 %v2004
    %2027 = vmatprep.subr.bf16.mxu0 0
    %2028 = vmatpush1.bf16.msra.mxu0 %v2005
    %2029 = vmatprep.subr.bf16.mxu0 0
    %2030 = vmatpush1.bf16.msra.mxu0 %v2006
    %2031 = vmatprep.subr.bf16.mxu0 0
    %2032 = vmatpush1.bf16.msra.mxu0 0
    %2033 = vmatprep.subr.bf16.mxu0 0
    %2034 = vmatpush1.bf16.msra.mxu0 0
    %2035 = vmatprep.subr.bf16.mxu0 0
    %2036 = vmatpush1.bf16.msra.mxu0 0
    %2037 = vmatprep.subr.bf16.mxu0 0
    %2038 = vmatpush1.bf16.msra.mxu0 0
    %2039 = vmatprep.subr.bf16.mxu0 0
    %2040 = vmatpush1.bf16.msra.mxu0 0
    %2041 = vmatprep.subr.bf16.mxu0 0
    %2042 = vmatpush1.bf16.msra.mxu0 0
    %2043 = vmatprep.subr.bf16.mxu0 0
    %2044 = vmatpush1.bf16.msra.mxu0 0
    %2045 = vmatprep.subr.bf16.mxu0 0
    %2046 = vmatpush1.bf16.msra.mxu0 0
    %2047 = vmatprep.mubr.bf16.mxu0 0
    %2048 = vmatmul.mubr.bf16.gmra.mrb[0].mxu0 %v2007
    %v2049 = vpop.f32.mrb[0].mxu0
    %v2050 = vadd.f32 0.0, %v2049
    %v2051 = vpop.f32.mrb[0].mxu0
    %v2052 = vpop.f32.mrb[0].mxu0
    %v2053 = vadd.f32 0.0, %v2052
    %v2054 = vpop.f32.mrb[0].mxu0
    %2055 = vmatprep.mubr.bf16.mxu0 0
    %2056 = vmatmul.mubr.bf16.gmra.mrb[0].mxu0 %v2008
    %v2057 = vpop.f32.mrb[0].mxu0
    %v2058 = vadd.f32 0.0, %v2057
    %v2059 = vpop.f32.mrb[0].mxu0
    %v2060 = vpop.f32.mrb[0].mxu0
    %v2061 = vadd.f32 0.0, %v2060
    %v2062 = vpop.f32.mrb[0].mxu0
    %2063 = vmatprep.mubr.bf16.mxu0 0
    %2064 = vmatmul.mubr.bf16.gmra.mrb[0].mxu0 %v2009
    %v2065 = vpop.f32.mrb[0].mxu0
    %v2066 = vadd.f32 0.0, %v2065
    %v2067 = vpop.f32.mrb[0].mxu0
    %v2068 = vpop.f32.mrb[0].mxu0
    %v2069 = vadd.f32 0.0, %v2068
    %v2070 = vpop.f32.mrb[0].mxu0
    %2071 = vmatprep.mubr.bf16.mxu0 0
    %2072 = vmatmul.mubr.bf16.gmra.mrb[0].mxu0 %v2010
    %v2073 = vpop.f32.mrb[0].mxu0
    %v2074 = vadd.f32 0.0, %v2073
    %v2075 = vpop.f32.mrb[0].mxu0
    %v2076 = vpop.f32.mrb[0].mxu0
    %v2077 = vadd.f32 0.0, %v2076
    %v2078 = vpop.f32.mrb[0].mxu0
    %2079 = vmatprep.mubr.bf16.mxu0 0
    %2080 = vmatmul.mubr.bf16.gmra.mrb[0].mxu0 %v2011
    %v2081 = vpop.f32.mrb[0].mxu0
    %v2082 = vadd.f32 0.0, %v2081
    %v2083 = vpop.f32.mrb[0].mxu0
    %v2084 = vpop.f32.mrb[0].mxu0
    %v2085 = vadd.f32 0.0, %v2084
    %v2086 = vpop.f32.mrb[0].mxu0
    %2087 = vmatprep.mubr.bf16.mxu0 0
    %2088 = vmatmul.mubr.bf16.gmra.mrb[0].mxu0 %v2012
    %v2089 = vpop.f32.mrb[0].mxu0
    %v2090 = vadd.f32 0.0, %v2089
    %v2091 = vpop.f32.mrb[0].mxu0
    %v2092 = vpop.f32.mrb[0].mxu0
    %v2093 = vadd.f32 0.0, %v2092
    %v2094 = vpop.f32.mrb[0].mxu0
    %2095 = vmatprep.mubr.bf16.mxu0 0
    %2096 = vmatmul.mubr.bf16.gmra.mrb[0].mxu0 %v2013
    %v2097 = vpop.f32.mrb[0].mxu0
    %v2098 = vadd.f32 0.0, %v2097
    %v2099 = vpop.f32.mrb[0].mxu0
    %v2100 = vpop.f32.mrb[0].mxu0
    %v2101 = vadd.f32 0.0, %v2100
    %v2102 = vpop.f32.mrb[0].mxu0
    %2103 = vmatprep.mubr.bf16.mxu0 0
    %2104 = vmatmul.mubr.bf16.gmra.mrb[0].mxu0 %v2014
    %v2105 = vpop.f32.mrb[0].mxu0
    %v2106 = vadd.f32 0.0, %v2105
    %v2107 = vpop.f32.mrb[0].mxu0
    %v2108 = vpop.f32.mrb[0].mxu0
    %v2109 = vadd.f32 0.0, %v2108
    %v2110 = vpop.f32.mrb[0].mxu0
    %2111 = vdwg.mxu0
    %v2112 = vadd.f32 %v1500, %v2050
    %v2113 = vadd.f32 %v1503, %v2053
    %v2114 = vadd.f32 %v1508, %v2058
    %v2115 = vadd.f32 %v1511, %v2061
    %v2116 = vadd.f32 %v1516, %v2066
    %v2117 = vadd.f32 %v1519, %v2069
    %v2118 = vadd.f32 %v1524, %v2074
    %v2119 = vadd.f32 %v1527, %v2077
    %v2120 = vadd.f32 %v1532, %v2082
    %v2121 = vadd.f32 %v1535, %v2085
    %v2122 = vadd.f32 %v1540, %v2090
    %v2123 = vadd.f32 %v1543, %v2093
    %v2124 = vadd.f32 %v1548, %v2098
    %v2125 = vadd.f32 %v1551, %v2101
    %v2126 = vadd.f32 %v1556, %v2106
    %v2127 = vadd.f32 %v1559, %v2109
    %s2128 = scalar_lea.vmem %s5, 3
    %v2129 = vld [vmem:[%s2128] sm:$0x1]
    %v2131 = vpack.i.b16 %v2129, %v2129
    %v2133 = vlaneseq
    %v2134 = vshrl.u32 %v2133, 7
    %v2135 = vsub.s32 0, %v2134
    %v2136 = vrot.slane %v2131, %v2135
    %v2137 = vmul.bf16 %v426, %v2136
    %v2138 = vmul.bf16 %v427, %v2136
    %v2139 = vmul.bf16 %v428, %v2136
    %v2140 = vmul.bf16 %v429, %v2136
    %v2141 = vmul.bf16 %v430, %v2136
    %v2142 = vmul.bf16 %v431, %v2136
    %v2143 = vmul.bf16 %v432, %v2136
    %v2144 = vmul.bf16 %v433, %v2136
    %v2146 = vsel %vm184, %v2137, 0
    %v2149 = vsel %vm184, %v2138, 0
    %v2152 = vsel %vm184, %v2139, 0
    %v2155 = vsel %vm184, %v2140, 0
    %v2158 = vsel %vm184, %v2141, 0
    %v2161 = vsel %vm184, %v2142, 0
    %v2164 = vsel %vm184, %v2143, 0
    %v2167 = vsel %vm184, %v2144, 0
    %2169 = vmatprep.subr.bf16.mxu0 0
    %2170 = vmatpush1.bf16.xpose.msra.mxu0 %v483
    %2171 = vmatprep.subr.bf16.mxu0 0
    %2172 = vmatpush1.bf16.xpose.msra.mxu0 %v486
    %2173 = vmatprep.subr.bf16.mxu0 0
    %2174 = vmatpush1.bf16.xpose.msra.mxu0 %v489
    %2175 = vmatprep.subr.bf16.mxu0 0
    %2176 = vmatpush1.bf16.xpose.msra.mxu0 %v492
    %2177 = vmatprep.subr.bf16.mxu0 0
    %2178 = vmatpush1.bf16.xpose.msra.mxu0 %v495
    %2179 = vmatprep.subr.bf16.mxu0 0
    %2180 = vmatpush1.bf16.xpose.msra.mxu0 %v498
    %2181 = vmatprep.subr.bf16.mxu0 0
    %2182 = vmatpush1.bf16.xpose.msra.mxu0 %v501
    %2183 = vmatprep.subr.bf16.mxu0 0
    %2184 = vmatpush1.bf16.xpose.msra.mxu0 %v504
    %2185 = vmatprep.subr.bf16.mxu0 0
    %2186 = vmatpush1.bf16.xpose.msra.mxu0 0
    %2187 = vmatprep.subr.bf16.mxu0 0
    %2188 = vmatpush1.bf16.xpose.msra.mxu0 0
    %2189 = vmatprep.subr.bf16.mxu0 0
    %2190 = vmatpush1.bf16.xpose.msra.mxu0 0
    %2191 = vmatprep.subr.bf16.mxu0 0
    %2192 = vmatpush1.bf16.xpose.msra.mxu0 0
    %2193 = vmatprep.subr.bf16.mxu0 0
    %2194 = vmatpush1.bf16.xpose.msra.mxu0 0
    %2195 = vmatprep.subr.bf16.mxu0 0
    %2196 = vmatpush1.bf16.xpose.msra.mxu0 0
    %2197 = vmatprep.subr.bf16.mxu0 0
    %2198 = vmatpush1.bf16.xpose.msra.mxu0 0
    %2199 = vmatprep.subr.bf16.mxu0 0
    %2200 = vmatpush1.bf16.xpose.msra.mxu0 0
    %2201 = vmatprep.mubr.bf16.mxu0 0
    %2202 = vmatmul.mubr.bf16.gmra.mrb[0].mxu0 %v2146
    %v2203 = vpop.f32.mrb[0].mxu0
    %v2204 = vadd.f32 0.0, %v2203
    %v2205 = vpop.f32.mrb[0].mxu0
    %v2206 = vpop.f32.mrb[0].mxu0
    %v2207 = vadd.f32 0.0, %v2206
    %v2208 = vpop.f32.mrb[0].mxu0
    %2209 = vmatprep.mubr.bf16.mxu0 0
    %2210 = vmatmul.mubr.bf16.gmra.mrb[0].mxu0 %v2149
    %v2211 = vpop.f32.mrb[0].mxu0
    %v2212 = vadd.f32 0.0, %v2211
    %v2213 = vpop.f32.mrb[0].mxu0
    %v2214 = vpop.f32.mrb[0].mxu0
    %v2215 = vadd.f32 0.0, %v2214
    %v2216 = vpop.f32.mrb[0].mxu0
    %2217 = vmatprep.mubr.bf16.mxu0 0
    %2218 = vmatmul.mubr.bf16.gmra.mrb[0].mxu0 %v2152
    %v2219 = vpop.f32.mrb[0].mxu0
    %v2220 = vadd.f32 0.0, %v2219
    %v2221 = vpop.f32.mrb[0].mxu0
    %v2222 = vpop.f32.mrb[0].mxu0
    %v2223 = vadd.f32 0.0, %v2222
    %v2224 = vpop.f32.mrb[0].mxu0
    %2225 = vmatprep.mubr.bf16.mxu0 0
    %2226 = vmatmul.mubr.bf16.gmra.mrb[0].mxu0 %v2155
    %v2227 = vpop.f32.mrb[0].mxu0
    %v2228 = vadd.f32 0.0, %v2227
    %v2229 = vpop.f32.mrb[0].mxu0
    %v2230 = vpop.f32.mrb[0].mxu0
    %v2231 = vadd.f32 0.0, %v2230
    %v2232 = vpop.f32.mrb[0].mxu0
    %2233 = vmatprep.mubr.bf16.mxu0 0
    %2234 = vmatmul.mubr.bf16.gmra.mrb[0].mxu0 %v2158
    %v2235 = vpop.f32.mrb[0].mxu0
    %v2236 = vadd.f32 0.0, %v2235
    %v2237 = vpop.f32.mrb[0].mxu0
    %v2238 = vpop.f32.mrb[0].mxu0
    %v2239 = vadd.f32 0.0, %v2238
    %v2240 = vpop.f32.mrb[0].mxu0
    %2241 = vmatprep.mubr.bf16.mxu0 0
    %2242 = vmatmul.mubr.bf16.gmra.mrb[0].mxu0 %v2161
    %v2243 = vpop.f32.mrb[0].mxu0
    %v2244 = vadd.f32 0.0, %v2243
    %v2245 = vpop.f32.mrb[0].mxu0
    %v2246 = vpop.f32.mrb[0].mxu0
    %v2247 = vadd.f32 0.0, %v2246
    %v2248 = vpop.f32.mrb[0].mxu0
    %2249 = vmatprep.mubr.bf16.mxu0 0
    %2250 = vmatmul.mubr.bf16.gmra.mrb[0].mxu0 %v2164
    %v2251 = vpop.f32.mrb[0].mxu0
    %v2252 = vadd.f32 0.0, %v2251
    %v2253 = vpop.f32.mrb[0].mxu0
    %v2254 = vpop.f32.mrb[0].mxu0
    %v2255 = vadd.f32 0.0, %v2254
    %v2256 = vpop.f32.mrb[0].mxu0
    %2257 = vmatprep.mubr.bf16.mxu0 0
    %2258 = vmatmul.mubr.bf16.gmra.mrb[0].mxu0 %v2167
    %v2259 = vpop.f32.mrb[0].mxu0
    %v2260 = vadd.f32 0.0, %v2259
    %v2261 = vpop.f32.mrb[0].mxu0
    %v2262 = vpop.f32.mrb[0].mxu0
    %v2263 = vadd.f32 0.0, %v2262
    %v2264 = vpop.f32.mrb[0].mxu0
    %2265 = vdwg.mxu0
    %s2266 = scalar_lea.vmem [#allocation10], 384
    %v2267 = vld [vmem:[%s2266] sm:$0xff]
    %v2268 = vld [vmem:[%s2266 + $0x8] sm:$0xff]
    %v2269 = vld [vmem:[%s2266 + $0x10] sm:$0xff]
    %v2270 = vld [vmem:[%s2266 + $0x18] sm:$0xff]
    %v2271 = vld [vmem:[%s2266 + $0x20] sm:$0xff]
    %v2272 = vld [vmem:[%s2266 + $0x28] sm:$0xff]
    %v2273 = vld [vmem:[%s2266 + $0x30] sm:$0xff]
    %v2274 = vld [vmem:[%s2266 + $0x38] sm:$0xff]
    %v2275 = vld [vmem:[%s2266 + $0x40] sm:$0xff]
    %v2276 = vld [vmem:[%s2266 + $0x48] sm:$0xff]
    %v2277 = vld [vmem:[%s2266 + $0x50] sm:$0xff]
    %v2278 = vld [vmem:[%s2266 + $0x58] sm:$0xff]
    %v2279 = vld [vmem:[%s2266 + $0x60] sm:$0xff]
    %v2280 = vld [vmem:[%s2266 + $0x68] sm:$0xff]
    %v2281 = vld [vmem:[%s2266 + $0x70] sm:$0xff]
    %v2282 = vld [vmem:[%s2266 + $0x78] sm:$0xff]
    %v2283 = vadd.f32 %v2204, %v2267
    %v2284 = vadd.f32 %v2207, %v2268
    %v2285 = vadd.f32 %v2212, %v2269
    %v2286 = vadd.f32 %v2215, %v2270
    %v2287 = vadd.f32 %v2220, %v2271
    %v2288 = vadd.f32 %v2223, %v2272
    %v2289 = vadd.f32 %v2228, %v2273
    %v2290 = vadd.f32 %v2231, %v2274
    %v2291 = vadd.f32 %v2236, %v2275
    %v2292 = vadd.f32 %v2239, %v2276
    %v2293 = vadd.f32 %v2244, %v2277
    %v2294 = vadd.f32 %v2247, %v2278
    %v2295 = vadd.f32 %v2252, %v2279
    %v2296 = vadd.f32 %v2255, %v2280
    %v2297 = vadd.f32 %v2260, %v2281
    %v2298 = vadd.f32 %v2263, %v2282
    %2299 = vmax.xlane.f32.xlu0 %v2283
    %v2300 = vpop.xlane.xlu0 %2299
    %2301 = vmax.xlane.f32.xlu0 %v2284
    %v2302 = vpop.xlane.xlu0 %2301
    %2303 = vmax.xlane.f32.xlu0 %v2285
    %v2304 = vpop.xlane.xlu0 %2303
    %2305 = vmax.xlane.f32.xlu0 %v2286
    %v2306 = vpop.xlane.xlu0 %2305
    %2307 = vmax.xlane.f32.xlu0 %v2287
    %v2308 = vpop.xlane.xlu0 %2307
    %2309 = vmax.xlane.f32.xlu0 %v2288
    %v2310 = vpop.xlane.xlu0 %2309
    %2311 = vmax.xlane.f32.xlu0 %v2289
    %v2312 = vpop.xlane.xlu0 %2311
    %2313 = vmax.xlane.f32.xlu0 %v2290
    %v2314 = vpop.xlane.xlu0 %2313
    %2315 = vmax.xlane.f32.xlu0 %v2291
    %v2316 = vpop.xlane.xlu0 %2315
    %2317 = vmax.xlane.f32.xlu0 %v2292
    %v2318 = vpop.xlane.xlu0 %2317
    %2319 = vmax.xlane.f32.xlu0 %v2293
    %v2320 = vpop.xlane.xlu0 %2319
    %2321 = vmax.xlane.f32.xlu0 %v2294
    %v2322 = vpop.xlane.xlu0 %2321
    %2323 = vmax.xlane.f32.xlu0 %v2295
    %v2324 = vpop.xlane.xlu0 %2323
    %2325 = vmax.xlane.f32.xlu0 %v2296
    %v2326 = vpop.xlane.xlu0 %2325
    %2327 = vmax.xlane.f32.xlu0 %v2297
    %v2328 = vpop.xlane.xlu0 %2327
    %2329 = vmax.xlane.f32.xlu0 %v2298
    %v2330 = vpop.xlane.xlu0 %2329
    %v2331 = vsub.f32 %v2283, %v2300
    %v2332 = vsub.f32 %v2284, %v2302
    %v2333 = vsub.f32 %v2285, %v2304
    %v2334 = vsub.f32 %v2286, %v2306
    %v2335 = vsub.f32 %v2287, %v2308
    %v2336 = vsub.f32 %v2288, %v2310
    %v2337 = vsub.f32 %v2289, %v2312
    %v2338 = vsub.f32 %v2290, %v2314
    %v2339 = vsub.f32 %v2291, %v2316
    %v2340 = vsub.f32 %v2292, %v2318
    %v2341 = vsub.f32 %v2293, %v2320
    %v2342 = vsub.f32 %v2294, %v2322
    %v2343 = vsub.f32 %v2295, %v2324
    %v2344 = vsub.f32 %v2296, %v2326
    %v2345 = vsub.f32 %v2297, %v2328
    %v2346 = vsub.f32 %v2298, %v2330
    %v2347 = vmul.f32 %v2331, 1.442695
    %v2348 = vpow.pop %v2347
    %v2349 = vmul.f32 %v2332, 1.442695
    %v2350 = vpow.pop %v2349
    %v2351 = vmul.f32 %v2333, 1.442695
    %v2352 = vpow.pop %v2351
    %v2353 = vmul.f32 %v2334, 1.442695
    %v2354 = vpow.pop %v2353
    %v2355 = vmul.f32 %v2335, 1.442695
    %v2356 = vpow.pop %v2355
    %v2357 = vmul.f32 %v2336, 1.442695
    %v2358 = vpow.pop %v2357
    %v2359 = vmul.f32 %v2337, 1.442695
    %v2360 = vpow.pop %v2359
    %v2361 = vmul.f32 %v2338, 1.442695
    %v2362 = vpow.pop %v2361
    %v2363 = vmul.f32 %v2339, 1.442695
    %v2364 = vpow.pop %v2363
    %v2365 = vmul.f32 %v2340, 1.442695
    %v2366 = vpow.pop %v2365
    %v2367 = vmul.f32 %v2341, 1.442695
    %v2368 = vpow.pop %v2367
    %v2369 = vmul.f32 %v2342, 1.442695
    %v2370 = vpow.pop %v2369
    %v2371 = vmul.f32 %v2343, 1.442695
    %v2372 = vpow.pop %v2371
    %v2373 = vmul.f32 %v2344, 1.442695
    %v2374 = vpow.pop %v2373
    %v2375 = vmul.f32 %v2345, 1.442695
    %v2376 = vpow.pop %v2375
    %v2377 = vmul.f32 %v2346, 1.442695
    %v2378 = vpow.pop %v2377
    %2379 = vadd.xlane.f32.xlu0 %v2348
    %v2380 = vpop.xlane.xlu0 %2379
    %2381 = vadd.xlane.f32.xlu0 %v2350
    %v2382 = vpop.xlane.xlu0 %2381
    %2383 = vadd.xlane.f32.xlu0 %v2352
    %v2384 = vpop.xlane.xlu0 %2383
    %2385 = vadd.xlane.f32.xlu0 %v2354
    %v2386 = vpop.xlane.xlu0 %2385
    %2387 = vadd.xlane.f32.xlu0 %v2356
    %v2388 = vpop.xlane.xlu0 %2387
    %2389 = vadd.xlane.f32.xlu0 %v2358
    %v2390 = vpop.xlane.xlu0 %2389
    %2391 = vadd.xlane.f32.xlu0 %v2360
    %v2392 = vpop.xlane.xlu0 %2391
    %2393 = vadd.xlane.f32.xlu0 %v2362
    %v2394 = vpop.xlane.xlu0 %2393
    %2395 = vadd.xlane.f32.xlu0 %v2364
    %v2396 = vpop.xlane.xlu0 %2395
    %2397 = vadd.xlane.f32.xlu0 %v2366
    %v2398 = vpop.xlane.xlu0 %2397
    %2399 = vadd.xlane.f32.xlu0 %v2368
    %v2400 = vpop.xlane.xlu0 %2399
    %2401 = vadd.xlane.f32.xlu0 %v2370
    %v2402 = vpop.xlane.xlu0 %2401
    %2403 = vadd.xlane.f32.xlu0 %v2372
    %v2404 = vpop.xlane.xlu0 %2403
    %2405 = vadd.xlane.f32.xlu0 %v2374
    %v2406 = vpop.xlane.xlu0 %2405
    %2407 = vadd.xlane.f32.xlu0 %v2376
    %v2408 = vpop.xlane.xlu0 %2407
    %2409 = vadd.xlane.f32.xlu0 %v2378
    %v2410 = vpop.xlane.xlu0 %2409
    %v2411 = vrcp.pop %v2380
    %v2412 = vrcp.pop %v2382
    %v2413 = vrcp.pop %v2384
    %v2414 = vrcp.pop %v2386
    %v2415 = vrcp.pop %v2388
    %v2416 = vrcp.pop %v2390
    %v2417 = vrcp.pop %v2392
    %v2418 = vrcp.pop %v2394
    %v2419 = vrcp.pop %v2396
    %v2420 = vrcp.pop %v2398
    %v2421 = vrcp.pop %v2400
    %v2422 = vrcp.pop %v2402
    %v2423 = vrcp.pop %v2404
    %v2424 = vrcp.pop %v2406
    %v2425 = vrcp.pop %v2408
    %v2426 = vrcp.pop %v2410
    %v2427 = vmul.f32 %v2348, %v2411
    %v2428 = vmul.f32 %v2350, %v2412
    %v2429 = vmul.f32 %v2352, %v2413
    %v2430 = vmul.f32 %v2354, %v2414
    %v2431 = vmul.f32 %v2356, %v2415
    %v2432 = vmul.f32 %v2358, %v2416
    %v2433 = vmul.f32 %v2360, %v2417
    %v2434 = vmul.f32 %v2362, %v2418
    %v2435 = vmul.f32 %v2364, %v2419
    %v2436 = vmul.f32 %v2366, %v2420
    %v2437 = vmul.f32 %v2368, %v2421
    %v2438 = vmul.f32 %v2370, %v2422
    %v2439 = vmul.f32 %v2372, %v2423
    %v2440 = vmul.f32 %v2374, %v2424
    %v2441 = vmul.f32 %v2376, %v2425
    %v2442 = vmul.f32 %v2378, %v2426
    %s2443 = scalar_lea.vmem [#allocation8], 48
    %v2444 = vld [vmem:[%s2443] sm:$0xf]
    %v2445 = vld [vmem:[%s2443 + $0x4] sm:$0xf]
    %v2446 = vld [vmem:[%s2443 + $0x8] sm:$0xf]
    %v2447 = vld [vmem:[%s2443 + $0xc] sm:$0xf]
    %s2448 = scalar_lea.vmem %s7, 3
    %v2449 = vld [vmem:[%s2448] sm:$0x1]
    %v2451 = vlaneseq
    %v2452 = vshrl.u32 %v2451, 7
    %v2453 = vsub.s32 0, %v2452
    %v2454 = vrot.slane %v2449, %v2453
    %v2460 = vunpack.c.l.b16 %v2444
    %v2461 = vunpack.c.l.b16 %v2445
    %v2462 = vunpack.c.l.b16 %v2446
    %v2463 = vunpack.c.l.b16 %v2447
    %v2464 = vpack.c.b16 %v2461, %v2460
    %v2465 = vpack.c.b16 %v2463, %v2462
    %2468 = vmatprep.subr.bf16.mxu0 0
    %2469 = vmatpush1.bf16.msra.mxu0 %v2464
    %2470 = vmatprep.subr.bf16.mxu0 0
    %2471 = vmatpush1.bf16.msra.mxu0 %v2465
    %2472 = vmatprep.subr.bf16.mxu0 0
    %2473 = vmatpush1.bf16.msra.mxu0 0
    %2474 = vmatprep.subr.bf16.mxu0 0
    %2475 = vmatpush1.bf16.msra.mxu0 0
    %2476 = vmatprep.subr.bf16.mxu0 0
    %2477 = vmatpush1.bf16.msra.mxu0 0
    %2478 = vmatprep.subr.bf16.mxu0 0
    %2479 = vmatpush1.bf16.msra.mxu0 0
    %2480 = vmatprep.subr.bf16.mxu0 0
    %2481 = vmatpush1.bf16.msra.mxu0 0
    %2482 = vmatprep.subr.bf16.mxu0 0
    %2483 = vmatpush1.bf16.msra.mxu0 0
    %2484 = vmatprep.subr.bf16.mxu0 0
    %2485 = vmatpush1.bf16.msra.mxu0 0
    %2486 = vmatprep.subr.bf16.mxu0 0
    %2487 = vmatpush1.bf16.msra.mxu0 0
    %2488 = vmatprep.subr.bf16.mxu0 0
    %2489 = vmatpush1.bf16.msra.mxu0 0
    %2490 = vmatprep.subr.bf16.mxu0 0
    %2491 = vmatpush1.bf16.msra.mxu0 0
    %2492 = vmatprep.subr.bf16.mxu0 0
    %2493 = vmatpush1.bf16.msra.mxu0 0
    %2494 = vmatprep.subr.bf16.mxu0 0
    %2495 = vmatpush1.bf16.msra.mxu0 0
    %2496 = vmatprep.subr.bf16.mxu0 0
    %2497 = vmatpush1.bf16.msra.mxu0 0
    %2498 = vmatprep.subr.bf16.mxu0 0
    %2499 = vmatpush1.bf16.msra.mxu0 0
    %2500 = vmatprep.mubr.bf16.mxu0 0
    %2501 = vmatmul.mubr.bf16.gmra.mrb[0].mxu0 %v186
    %v2502 = vpop.f32.mrb[0].mxu0
    %v2503 = vadd.f32 %v2454, %v2502
    %v2504 = vpop.f32.mrb[0].mxu0
    %v2505 = vpop.f32.mrb[0].mxu0
    %v2506 = vadd.f32 %v2454, %v2505
    %v2507 = vpop.f32.mrb[0].mxu0
    %2508 = vmatprep.mubr.bf16.mxu0 0
    %2509 = vmatmul.mubr.bf16.gmra.mrb[0].mxu0 %v189
    %v2510 = vpop.f32.mrb[0].mxu0
    %v2511 = vadd.f32 %v2454, %v2510
    %v2512 = vpop.f32.mrb[0].mxu0
    %v2513 = vpop.f32.mrb[0].mxu0
    %v2514 = vadd.f32 %v2454, %v2513
    %v2515 = vpop.f32.mrb[0].mxu0
    %2516 = vmatprep.mubr.bf16.mxu0 0
    %2517 = vmatmul.mubr.bf16.gmra.mrb[0].mxu0 %v192
    %v2518 = vpop.f32.mrb[0].mxu0
    %v2519 = vadd.f32 %v2454, %v2518
    %v2520 = vpop.f32.mrb[0].mxu0
    %v2521 = vpop.f32.mrb[0].mxu0
    %v2522 = vadd.f32 %v2454, %v2521
    %v2523 = vpop.f32.mrb[0].mxu0
    %2524 = vmatprep.mubr.bf16.mxu0 0
    %2525 = vmatmul.mubr.bf16.gmra.mrb[0].mxu0 %v195
    %v2526 = vpop.f32.mrb[0].mxu0
    %v2527 = vadd.f32 %v2454, %v2526
    %v2528 = vpop.f32.mrb[0].mxu0
    %v2529 = vpop.f32.mrb[0].mxu0
    %v2530 = vadd.f32 %v2454, %v2529
    %v2531 = vpop.f32.mrb[0].mxu0
    %2532 = vmatprep.mubr.bf16.mxu0 0
    %2533 = vmatmul.mubr.bf16.gmra.mrb[0].mxu0 %v198
    %v2534 = vpop.f32.mrb[0].mxu0
    %v2535 = vadd.f32 %v2454, %v2534
    %v2536 = vpop.f32.mrb[0].mxu0
    %v2537 = vpop.f32.mrb[0].mxu0
    %v2538 = vadd.f32 %v2454, %v2537
    %v2539 = vpop.f32.mrb[0].mxu0
    %2540 = vmatprep.mubr.bf16.mxu0 0
    %2541 = vmatmul.mubr.bf16.gmra.mrb[0].mxu0 %v201
    %v2542 = vpop.f32.mrb[0].mxu0
    %v2543 = vadd.f32 %v2454, %v2542
    %v2544 = vpop.f32.mrb[0].mxu0
    %v2545 = vpop.f32.mrb[0].mxu0
    %v2546 = vadd.f32 %v2454, %v2545
    %v2547 = vpop.f32.mrb[0].mxu0
    %2548 = vmatprep.mubr.bf16.mxu0 0
    %2549 = vmatmul.mubr.bf16.gmra.mrb[0].mxu0 %v204
    %v2550 = vpop.f32.mrb[0].mxu0
    %v2551 = vadd.f32 %v2454, %v2550
    %v2552 = vpop.f32.mrb[0].mxu0
    %v2553 = vpop.f32.mrb[0].mxu0
    %v2554 = vadd.f32 %v2454, %v2553
    %v2555 = vpop.f32.mrb[0].mxu0
    %2556 = vmatprep.mubr.bf16.mxu0 0
    %2557 = vmatmul.mubr.bf16.gmra.mrb[0].mxu0 %v207
    %v2558 = vpop.f32.mrb[0].mxu0
    %v2559 = vadd.f32 %v2454, %v2558
    %v2560 = vpop.f32.mrb[0].mxu0
    %v2561 = vpop.f32.mrb[0].mxu0
    %v2562 = vadd.f32 %v2454, %v2561
    %v2563 = vpop.f32.mrb[0].mxu0
    %2564 = vdwg.mxu0
    %v2565 = vpack.c.bf16 %v2506, %v2503
    %v2566 = vpack.c.bf16 %v2514, %v2511
    %v2567 = vpack.c.bf16 %v2522, %v2519
    %v2568 = vpack.c.bf16 %v2530, %v2527
    %v2569 = vpack.c.bf16 %v2538, %v2535
    %v2570 = vpack.c.bf16 %v2546, %v2543
    %v2571 = vpack.c.bf16 %v2554, %v2551
    %v2572 = vpack.c.bf16 %v2562, %v2559
    %v2573 = vpack.c.bf16 %v2428, %v2427
    %v2574 = vpack.c.bf16 %v2430, %v2429
    %v2575 = vpack.c.bf16 %v2432, %v2431
    %v2576 = vpack.c.bf16 %v2434, %v2433
    %v2577 = vpack.c.bf16 %v2436, %v2435
    %v2578 = vpack.c.bf16 %v2438, %v2437
    %v2579 = vpack.c.bf16 %v2440, %v2439
    %v2580 = vpack.c.bf16 %v2442, %v2441
    %2581 = vmatprep.subr.bf16.mxu0 0
    %2582 = vmatpush1.bf16.msra.mxu0 %v2565
    %2583 = vmatprep.subr.bf16.mxu0 0
    %2584 = vmatpush1.bf16.msra.mxu0 %v2566
    %2585 = vmatprep.subr.bf16.mxu0 0
    %2586 = vmatpush1.bf16.msra.mxu0 %v2567
    %2587 = vmatprep.subr.bf16.mxu0 0
    %2588 = vmatpush1.bf16.msra.mxu0 %v2568
    %2589 = vmatprep.subr.bf16.mxu0 0
    %2590 = vmatpush1.bf16.msra.mxu0 %v2569
    %2591 = vmatprep.subr.bf16.mxu0 0
    %2592 = vmatpush1.bf16.msra.mxu0 %v2570
    %2593 = vmatprep.subr.bf16.mxu0 0
    %2594 = vmatpush1.bf16.msra.mxu0 %v2571
    %2595 = vmatprep.subr.bf16.mxu0 0
    %2596 = vmatpush1.bf16.msra.mxu0 %v2572
    %2597 = vmatprep.subr.bf16.mxu0 0
    %2598 = vmatpush1.bf16.msra.mxu0 0
    %2599 = vmatprep.subr.bf16.mxu0 0
    %2600 = vmatpush1.bf16.msra.mxu0 0
    %2601 = vmatprep.subr.bf16.mxu0 0
    %2602 = vmatpush1.bf16.msra.mxu0 0
    %2603 = vmatprep.subr.bf16.mxu0 0
    %2604 = vmatpush1.bf16.msra.mxu0 0
    %2605 = vmatprep.subr.bf16.mxu0 0
    %2606 = vmatpush1.bf16.msra.mxu0 0
    %2607 = vmatprep.subr.bf16.mxu0 0
    %2608 = vmatpush1.bf16.msra.mxu0 0
    %2609 = vmatprep.subr.bf16.mxu0 0
    %2610 = vmatpush1.bf16.msra.mxu0 0
    %2611 = vmatprep.subr.bf16.mxu0 0
    %2612 = vmatpush1.bf16.msra.mxu0 0
    %2613 = vmatprep.mubr.bf16.mxu0 0
    %2614 = vmatmul.mubr.bf16.gmra.mrb[0].mxu0 %v2573
    %v2615 = vpop.f32.mrb[0].mxu0
    %v2616 = vadd.f32 0.0, %v2615
    %v2617 = vpop.f32.mrb[0].mxu0
    %v2618 = vpop.f32.mrb[0].mxu0
    %v2619 = vadd.f32 0.0, %v2618
    %v2620 = vpop.f32.mrb[0].mxu0
    %2621 = vmatprep.mubr.bf16.mxu0 0
    %2622 = vmatmul.mubr.bf16.gmra.mrb[0].mxu0 %v2574
    %v2623 = vpop.f32.mrb[0].mxu0
    %v2624 = vadd.f32 0.0, %v2623
    %v2625 = vpop.f32.mrb[0].mxu0
    %v2626 = vpop.f32.mrb[0].mxu0
    %v2627 = vadd.f32 0.0, %v2626
    %v2628 = vpop.f32.mrb[0].mxu0
    %2629 = vmatprep.mubr.bf16.mxu0 0
    %2630 = vmatmul.mubr.bf16.gmra.mrb[0].mxu0 %v2575
    %v2631 = vpop.f32.mrb[0].mxu0
    %v2632 = vadd.f32 0.0, %v2631
    %v2633 = vpop.f32.mrb[0].mxu0
    %v2634 = vpop.f32.mrb[0].mxu0
    %v2635 = vadd.f32 0.0, %v2634
    %v2636 = vpop.f32.mrb[0].mxu0
    %2637 = vmatprep.mubr.bf16.mxu0 0
    %2638 = vmatmul.mubr.bf16.gmra.mrb[0].mxu0 %v2576
    %v2639 = vpop.f32.mrb[0].mxu0
    %v2640 = vadd.f32 0.0, %v2639
    %v2641 = vpop.f32.mrb[0].mxu0
    %v2642 = vpop.f32.mrb[0].mxu0
    %v2643 = vadd.f32 0.0, %v2642
    %v2644 = vpop.f32.mrb[0].mxu0
    %2645 = vmatprep.mubr.bf16.mxu0 0
    %2646 = vmatmul.mubr.bf16.gmra.mrb[0].mxu0 %v2577
    %v2647 = vpop.f32.mrb[0].mxu0
    %v2648 = vadd.f32 0.0, %v2647
    %v2649 = vpop.f32.mrb[0].mxu0
    %v2650 = vpop.f32.mrb[0].mxu0
    %v2651 = vadd.f32 0.0, %v2650
    %v2652 = vpop.f32.mrb[0].mxu0
    %2653 = vmatprep.mubr.bf16.mxu0 0
    %2654 = vmatmul.mubr.bf16.gmra.mrb[0].mxu0 %v2578
    %v2655 = vpop.f32.mrb[0].mxu0
    %v2656 = vadd.f32 0.0, %v2655
    %v2657 = vpop.f32.mrb[0].mxu0
    %v2658 = vpop.f32.mrb[0].mxu0
    %v2659 = vadd.f32 0.0, %v2658
    %v2660 = vpop.f32.mrb[0].mxu0
    %2661 = vmatprep.mubr.bf16.mxu0 0
    %2662 = vmatmul.mubr.bf16.gmra.mrb[0].mxu0 %v2579
    %v2663 = vpop.f32.mrb[0].mxu0
    %v2664 = vadd.f32 0.0, %v2663
    %v2665 = vpop.f32.mrb[0].mxu0
    %v2666 = vpop.f32.mrb[0].mxu0
    %v2667 = vadd.f32 0.0, %v2666
    %v2668 = vpop.f32.mrb[0].mxu0
    %2669 = vmatprep.mubr.bf16.mxu0 0
    %2670 = vmatmul.mubr.bf16.gmra.mrb[0].mxu0 %v2580
    %v2671 = vpop.f32.mrb[0].mxu0
    %v2672 = vadd.f32 0.0, %v2671
    %v2673 = vpop.f32.mrb[0].mxu0
    %v2674 = vpop.f32.mrb[0].mxu0
    %v2675 = vadd.f32 0.0, %v2674
    %v2676 = vpop.f32.mrb[0].mxu0
    %2677 = vdwg.mxu0
    %v2678 = vadd.f32 %v2112, %v2616
    %v2679 = vadd.f32 %v2113, %v2619
    %v2680 = vadd.f32 %v2114, %v2624
    %v2681 = vadd.f32 %v2115, %v2627
    %v2682 = vadd.f32 %v2116, %v2632
    %v2683 = vadd.f32 %v2117, %v2635
    %v2684 = vadd.f32 %v2118, %v2640
    %v2685 = vadd.f32 %v2119, %v2643
    %v2686 = vadd.f32 %v2120, %v2648
    %v2687 = vadd.f32 %v2121, %v2651
    %v2688 = vadd.f32 %v2122, %v2656
    %v2689 = vadd.f32 %v2123, %v2659
    %v2690 = vadd.f32 %v2124, %v2664
    %v2691 = vadd.f32 %v2125, %v2667
    %v2692 = vadd.f32 %v2126, %v2672
    %v2693 = vadd.f32 %v2127, %v2675
    %v2694 = vld [vmem:[%s9] sm:$0x1]
    %v2696 = vlaneseq
    %v2697 = vshrl.u32 %v2696, 7
    %v2698 = vsub.s32 0, %v2697
    %v2699 = vrot.slane %v2694, %v2698
    %v2701 = vadd.f32 %v2678, %v2699
    %v2702 = vadd.f32 %v2679, %v2699
    %v2703 = vadd.f32 %v2680, %v2699
    %v2704 = vadd.f32 %v2681, %v2699
    %v2705 = vadd.f32 %v2682, %v2699
    %v2706 = vadd.f32 %v2683, %v2699
    %v2707 = vadd.f32 %v2684, %v2699
    %v2708 = vadd.f32 %v2685, %v2699
    %v2709 = vadd.f32 %v2686, %v2699
    %v2710 = vadd.f32 %v2687, %v2699
    %v2711 = vadd.f32 %v2688, %v2699
    %v2712 = vadd.f32 %v2689, %v2699
    %v2713 = vadd.f32 %v2690, %v2699
    %v2714 = vadd.f32 %v2691, %v2699
    %v2715 = vadd.f32 %v2692, %v2699
    %v2716 = vadd.f32 %v2693, %v2699
    %2717 = vst.msk [vmem:[#allocation11] sm:$0xff] %vm184, %v2701
    %2718 = vst.msk [vmem:[#allocation11 + $0x8] sm:$0xff] %vm184, %v2702
    %2719 = vst.msk [vmem:[#allocation11 + $0x10] sm:$0xff] %vm184, %v2703
    %2720 = vst.msk [vmem:[#allocation11 + $0x18] sm:$0xff] %vm184, %v2704
    %2721 = vst.msk [vmem:[#allocation11 + $0x20] sm:$0xff] %vm184, %v2705
    %2722 = vst.msk [vmem:[#allocation11 + $0x28] sm:$0xff] %vm184, %v2706
    %2723 = vst.msk [vmem:[#allocation11 + $0x30] sm:$0xff] %vm184, %v2707
    %2724 = vst.msk [vmem:[#allocation11 + $0x38] sm:$0xff] %vm184, %v2708
    %2725 = vst.msk [vmem:[#allocation11 + $0x40] sm:$0xff] %vm184, %v2709
    %2726 = vst.msk [vmem:[#allocation11 + $0x48] sm:$0xff] %vm184, %v2710
    %2727 = vst.msk [vmem:[#allocation11 + $0x50] sm:$0xff] %vm184, %v2711
    %2728 = vst.msk [vmem:[#allocation11 + $0x58] sm:$0xff] %vm184, %v2712
    %2729 = vst.msk [vmem:[#allocation11 + $0x60] sm:$0xff] %vm184, %v2713
    %2730 = vst.msk [vmem:[#allocation11 + $0x68] sm:$0xff] %vm184, %v2714
    %2731 = vst.msk [vmem:[#allocation11 + $0x70] sm:$0xff] %vm184, %v2715
    %2732 = vst.msk [vmem:[#allocation11 + $0x78] sm:$0xff] %vm184, %v2716
    // Predicated region
    $region62: #{tpu_custom_call.1} parent=1 // pred_check
      _
    $region63: #{tpu_custom_call.1} parent=1 // pred_check_branch
      %2734 = sbr.rel (0) target = $region65
    $region64: #{tpu_custom_call.1} parent=1 // pred_region
      %s2736 = ssub.s32 2048, 2048
      %2737 = vsyncadd [#allocation4], %s2736
      %s2738 = sshll.u32 [#allocation11], 4
      %s2739 = int_to_ptr.vmem [resolvable:$true] %s2738
      %2744 = dma.vmem_to_hbm [thread:$0]  %s2739, 2048, %s10, [#allocation4], 128, 128, 8
    $region65: #{tpu_custom_call.1} parent=1 // pred_fallthru
      _
    // Predicated region
    $region66: #{tpu_custom_call.1} parent=1 // pred_check
      _
    $region67: #{tpu_custom_call.1} parent=1 // pred_check_branch
      %2746 = sbr.rel (0) target = $region69
    $region68: #{tpu_custom_call.1} parent=1 // pred_region
      %2747 = dma.done [#allocation4], 2048
    $region69: #{tpu_custom_call.1} parent=1 // pred_fallthru
      _
    %2748 = vsyncpa [#allocation3], 1
    %2749 = vsyncpa [#allocation6], 1
    %2750 = vsyncpa [#allocation9], 1
    %2751 = vsyncpa [#allocation4], 1

</llo_original>
